<compile_context>
chip_gen: v5e
topology: v5e:2x2
jax: 0.10.0
libtpu: 0.0.40
codegen_flags: <defaults>
</compile_context>

<pallas_src>
import math
import functools

import jax
import jax.numpy as jnp
from jax import lax
from jax.experimental import pallas as pl
from jax.experimental.pallas import tpu as pltpu


_PARAM_ORDER = ("wq", "wk", "wv", "bq", "bk", "bv", "wo", "bo",
                "g1", "be1", "w1", "b1", "w2", "b2", "g2", "be2")


# ---------------------------------------------------------------------------
# Pallas kernel: one encoder block, one batch element, one query-row tile.
# ---------------------------------------------------------------------------
def _encoder_block_kernel(
    x_full_ref, x_q_ref,
    wq_ref, wk_ref, wv_ref,
    bq_ref, bk_ref, bv_ref,
    wo_ref, bo_ref,
    g1_ref, be1_ref,
    w1_ref, b1_ref, w2_ref, b2_ref,
    g2_ref, be2_ref,
    o_ref,
    k_cache, v_cache, ctx_sc,
    *, nhead, eps, n_ff, approx_recip,
):
    f32 = jnp.float32
    bf16 = jnp.bfloat16

    _, S, D = x_full_ref.shape
    TQ = x_q_ref.shape[1]
    Dh = D // nhead
    scale = 1.0 / math.sqrt(Dh)

    # --- K/V projection for the whole sequence: ONCE per batch element.
    #     The q grid axis is "arbitrary", so the scratch caches persist across
    #     query tiles of this batch element. ---
    @pl.when(pl.program_id(1) == 0)
    def _build_kv_cache():
        x_all_bf = x_full_ref[0].astype(bf16)                       # (S, D)

        def _one_head(h, carry):
            # Per-head weights: leading-dim dynamic index only (no lane slice).
            k_cache[h] = (jnp.dot(x_all_bf, wk_ref[h],
                                  preferred_element_type=f32)
                          + bk_ref[h]).astype(bf16)                  # (S, Dh)
            v_cache[h] = (jnp.dot(x_all_bf, wv_ref[h],
                                  preferred_element_type=f32)
                          + bv_ref[h]).astype(bf16)
            return carry

        lax.fori_loop(0, nhead, _one_head, 0)

    # --- per-tile attention against the cached K/V ---
    xq_f32 = x_q_ref[0]                                              # (TQ, D)
    xq_bf = xq_f32.astype(bf16)

    # TODO(synk): with many heads a fori_loop over h (with an (nhead, TQ, Dh)
    # ctx scratch) would bound live ranges further; kept as a static loop to
    # preserve the single full-K Wo matmul below.
    for h in range(nhead):
        q_h = jnp.dot(xq_bf, wq_ref[h], preferred_element_type=f32) + bq_ref[h]
        q_h = (q_h * scale).astype(bf16)                             # (TQ, Dh)
        # q @ k^T without materializing a transposed copy.
        s = lax.dot_general(q_h, k_cache[h], (((1,), (1,)), ((), ())),
                            preferred_element_type=f32)              # (TQ, S)
        s = s - jnp.max(s, axis=-1, keepdims=True)
        prob = jnp.exp(s)
        denom = jnp.sum(prob, axis=-1, keepdims=True)
        if approx_recip:
            prob = prob * pl.reciprocal(denom, approx=True)          # EUP slot
        else:
            prob = prob / denom
        ctx = jnp.dot(prob.astype(bf16), v_cache[h],
                      preferred_element_type=f32)                    # (TQ, Dh)
        ctx_sc[:, h * Dh:(h + 1) * Dh] = ctx.astype(bf16)

    # Single full-K output projection (one (TQ,D)@(D,D) MXU pass rather than
    # nhead K=Dh matmuls).
    attn = jnp.dot(ctx_sc[...], wo_ref[...], preferred_element_type=f32)
    attn = attn + bo_ref[...]

    # --- residual + PowerNorm 1 (dropout = identity in eval) ---
    x1 = xq_f32 + attn
    x1n = x1 * lax.rsqrt(jnp.mean(x1 * x1, axis=-1, keepdims=True) + eps)
    x1n = x1n * g1_ref[...] + be1_ref[...]

    # --- feed-forward: fori_loop over dim_feedforward chunks ---
    x1n_bf = x1n.astype(bf16)

    def _ffn_chunk(j, acc):
        hid = jnp.dot(x1n_bf, w1_ref[j], preferred_element_type=f32)
        hid = jnp.maximum(hid + b1_ref[j], 0.0).astype(bf16)
        return acc + jnp.dot(hid, w2_ref[j], preferred_element_type=f32)

    ff = lax.fori_loop(0, n_ff, _ffn_chunk, jnp.zeros((TQ, D), f32))
    ff = ff + b2_ref[...]

    # --- residual + PowerNorm 2 ---
    x2 = x1n + ff
    x2n = x2 * lax.rsqrt(jnp.mean(x2 * x2, axis=-1, keepdims=True) + eps)
    x2n = x2n * g2_ref[...] + be2_ref[...]

    o_ref[0] = x2n.astype(o_ref.dtype)


# ---------------------------------------------------------------------------
# Parameter preparation (wrapper-side layout plumbing, no in-kernel cost).
# ---------------------------------------------------------------------------
def _split_heads_w(w_t, nhead):
    """(D_in, D_out) -> (nhead, D_in, D_out // nhead)."""
    d_in, d_out = w_t.shape
    return w_t.reshape(d_in, nhead, d_out // nhead).transpose(1, 0, 2)


def _prepare_params(p, *, nhead, n_ff, block_ff, compute_dtype=jnp.bfloat16):
    f32 = jnp.float32
    cd = compute_dtype
    D = p["wq"].shape[1]
    Dh = D // nhead
    w1t = p["w1"].T.astype(cd)          # (D, dff), in->out
    w2t = p["w2"].T.astype(cd)          # (dff, D), in->out
    return {
        # Q/K/V weights pre-transposed to (in, out) and split per head so the
        # in-kernel head loops index only the leading (non-lane) dimension.
        "wq": _split_heads_w(p["wq"].T.astype(cd), nhead),
        "wk": _split_heads_w(p["wk"].T.astype(cd), nhead),
        "wv": _split_heads_w(p["wv"].T.astype(cd), nhead),
        "bq": p["bq"].astype(f32).reshape(nhead, 1, Dh),
        "bk": p["bk"].astype(f32).reshape(nhead, 1, Dh),
        "bv": p["bv"].astype(f32).reshape(nhead, 1, Dh),
        "wo": p["wo"].T.astype(cd),                                  # (D, D)
        "bo": p["bo"].astype(f32),
        # FFN weights pre-chunked along dim_feedforward (leading chunk axis).
        "w1": w1t.reshape(D, n_ff, block_ff).transpose(1, 0, 2),     # (n_ff, D, bf)
        "b1": p["b1"].astype(f32).reshape(n_ff, 1, block_ff),
        "w2": w2t.reshape(n_ff, block_ff, D),                        # (n_ff, bf, D)
        "b2": p["b2"].astype(f32),
        "g1": p["g1"].astype(f32), "be1": p["be1"].astype(f32),
        "g2": p["g2"].astype(f32), "be2": p["be2"].astype(f32),
    }


def _device_kind():
    try:
        return jax.devices()[0].device_kind.lower()
    except Exception:
        return ""


# ---------------------------------------------------------------------------
# Wrapper: one encoder block via pallas_call.
# ---------------------------------------------------------------------------
def encoder_block(x, params, *, nhead, eps=1e-5, block_q=None, block_ff=None,
                  approx_recip=True):
    """Run one encoder block (eval mode). x: (B, S, D) float32."""
    B, S, D = x.shape
    assert D % nhead == 0
    Dh = D // nhead
    dff = params["w1"].shape[0]

    kind = _device_kind()
    is_v5e = ("v5 lite" in kind) or ("v5e" in kind) or ("v5lite" in kind)
    is_v6 = ("v6" in kind) or ("trillium" in kind)
    is_v7 = "v7" in kind

    if block_q is None:
        # v6e/v7x MXU is 256 wide -> prefer 256-row query tiles; v5e is 128.
        block_q = min(S, 128 if is_v5e else 256)
    assert S % block_q == 0, "S must be divisible by block_q"
    n_qt = S // block_q

    if block_ff is None:
        block_ff = min(dff, 512)
    assert dff % block_ff == 0, "dim_feedforward must be divisible by block_ff"
    n_ff = dff // block_ff

    prep = _prepare_params(params, nhead=nhead, n_ff=n_ff, block_ff=block_ff)
    args = [prep[k] for k in _PARAM_ORDER]

    kern = functools.partial(
        _encoder_block_kernel, nhead=nhead, eps=eps, n_ff=n_ff,
        approx_recip=approx_recip)

    # Per-generation VMEM budget: v7x has 64 MiB/TC, v5e/v6e have 128 MiB.
    if is_v7:
        vmem_limit = 48 * 1024 * 1024
    elif is_v5e or is_v6:
        vmem_limit = 100 * 1024 * 1024
    else:
        vmem_limit = 64 * 1024 * 1024

    # Advisory cost estimate (K/V projected once per batch element).
    flops = B * (8 * S * D * D + 4 * S * S * D + 4 * S * D * dff)
    transcendentals = B * (nhead * S * S + 4 * S)
    bytes_accessed = 3 * B * S * D * x.dtype.itemsize + sum(
        int(a.size) * a.dtype.itemsize for a in args)

    def _call(single_buffer_weights):
        def weight_spec(arr):
            nd = arr.ndim
            if single_buffer_weights:
                # Block index never changes -> single-buffer to halve weight VMEM.
                return pl.BlockSpec(arr.shape, lambda b, q, _n=nd: (0,) * _n,
                                    pipeline_mode=pl.Buffered(1))
            return pl.BlockSpec(arr.shape, lambda b, q, _n=nd: (0,) * _n)

        return pl.pallas_call(
            kern,
            out_shape=jax.ShapeDtypeStruct((B, S, D), x.dtype),
            grid=(B, n_qt),
            in_specs=[
                # Full sequence: block index depends only on b -> DMA'd once
                # per batch element, consumed only in the q==0 K/V pass.
                pl.BlockSpec((1, S, D), lambda b, q: (b, 0, 0)),
                # Query / residual tile.
                pl.BlockSpec((1, block_q, D), lambda b, q: (b, q, 0)),
            ] + [weight_spec(a) for a in args],
            out_specs=pl.BlockSpec((1, block_q, D), lambda b, q: (b, q, 0)),
            scratch_shapes=[
                pltpu.VMEM((nhead, S, Dh), jnp.bfloat16),   # K cache (per head)
                pltpu.VMEM((nhead, S, Dh), jnp.bfloat16),   # V cache (per head)
                pltpu.VMEM((block_q, D), jnp.bfloat16),     # assembled ctx
            ],
            compiler_params=pltpu.CompilerParams(
                # q axis must be "arbitrary": the K/V scratch caches persist
                # across query tiles of one batch element.
                dimension_semantics=("parallel", "arbitrary"),
                vmem_limit_bytes=vmem_limit),
            cost_estimate=pl.CostEstimate(
                flops=flops, transcendentals=transcendentals,
                bytes_accessed=bytes_accessed),
        )(x, x, *args)

    try:
        return _call(single_buffer_weights=True)
    except Exception:
        # pl.Buffered(1) unsupported on this jax/libtpu build -> fall back to
        # default double buffering (correctness unchanged, more weight VMEM).
        return _call(single_buffer_weights=False)


def transformer_encoder(x, layer_params, *, nhead):
    # TODO(synk): optionally carry inter-layer activations in bf16 to halve
    # HBM traffic between layers if accuracy permits.
    for p in layer_params:
        x = encoder_block(x, p, nhead=nhead)
    return x


# ---------------------------------------------------------------------------
# Pure-JAX reference with the same bf16-matmul / f32-accumulation math.
# ---------------------------------------------------------------------------
def _ref_block(x, p, *, nhead, eps=1e-5):
    f32, bf16 = jnp.float32, jnp.bfloat16
    B, S, D = x.shape
    Dh = D // nhead
    scale = 1.0 / math.sqrt(Dh)

    xb = x.astype(bf16)
    q = jnp.dot(xb, p["wq"].T.astype(bf16), preferred_element_type=f32) + p["bq"]
    k = jnp.dot(xb, p["wk"].T.astype(bf16), preferred_element_type=f32) + p["bk"]
    v = jnp.dot(xb, p["wv"].T.astype(bf16), preferred_element_type=f32) + p["bv"]

    qh = (q * scale).astype(bf16).reshape(B, S, nhead, Dh).transpose(0, 2, 1, 3)
    kh = k.astype(bf16).reshape(B, S, nhead, Dh).transpose(0, 2, 1, 3)
    vh = v.astype(bf16).reshape(B, S, nhead, Dh).transpose(0, 2, 1, 3)

    s = jnp.einsum("bhqd,bhkd->bhqk", qh, kh, preferred_element_type=f32)
    pw = jax.nn.softmax(s, axis=-1)
    ctx = jnp.einsum("bhqk,bhkd->bhqd", pw.astype(bf16), vh,
                     preferred_element_type=f32)
    ctx = ctx.transpose(0, 2, 1, 3).reshape(B, S, D)
    attn = jnp.dot(ctx.astype(bf16), p["wo"].T.astype(bf16),
                   preferred_element_type=f32) + p["bo"]

    x1 = x + attn
    x1n = x1 * jax.lax.rsqrt(jnp.mean(x1 * x1, -1, keepdims=True) + eps)
    x1n = x1n * p["g1"] + p["be1"]

    hid = jnp.dot(x1n.astype(bf16), p["w1"].T.astype(bf16),
                  preferred_element_type=f32) + p["b1"]
    hid = jnp.maximum(hid, 0.0)
    ff = jnp.dot(hid.astype(bf16), p["w2"].T.astype(bf16),
                 preferred_element_type=f32) + p["b2"]

    x2 = x1n + ff
    x2n = x2 * jax.lax.rsqrt(jnp.mean(x2 * x2, -1, keepdims=True) + eps)
    return x2n * p["g2"] + p["be2"]


def _ref_encoder(x, layer_params, *, nhead):
    for p in layer_params:
        x = _ref_block(x, p, nhead=nhead)
    return x


# ---------------------------------------------------------------------------
# Deterministic parameter init (shapes follow the PyTorch module __init__).
# ---------------------------------------------------------------------------
def init_layer_params(key, d_model, dim_feedforward, scale=0.1):
    ks = jax.random.split(key, 8)
    f32 = jnp.float32
    return {
        "wq": jax.random.normal(ks[0], (d_model, d_model), f32) * scale,
        "wk": jax.random.normal(ks[1], (d_model, d_model), f32) * scale,
        "wv": jax.random.normal(ks[2], (d_model, d_model), f32) * scale,
        "bq": jax.random.normal(ks[3], (1, d_model), f32) * scale,
        "bk": jnp.zeros((1, d_model), f32),
        "bv": jnp.zeros((1, d_model), f32),
        "wo": jax.random.normal(ks[4], (d_model, d_model), f32) * scale,
        "bo": jnp.zeros((1, d_model), f32),
        "g1": jnp.ones((1, d_model), f32),
        "be1": jnp.zeros((1, d_model), f32),
        "w1": jax.random.normal(ks[5], (dim_feedforward, d_model), f32) * scale,
        "b1": jax.random.normal(ks[6], (1, dim_feedforward), f32) * scale,
        "w2": jax.random.normal(ks[7], (d_model, dim_feedforward), f32) * scale,
        "b2": jnp.zeros((1, d_model), f32),
        "g2": jnp.ones((1, d_model), f32),
        "be2": jnp.zeros((1, d_model), f32),
    }


if __name__ == "__main__":
    root = jax.random.PRNGKey(0)

    # --- Config 1: tiny smoke test (single q tile, single FFN chunk). ---
    num_layers = 2
    B, S, D = 2, 8, 32
    nhead = 4
    dim_feedforward = 64

    x_key, *layer_keys = jax.random.split(root, num_layers + 1)
    x = jax.random.normal(x_key, (B, S, D), jnp.float32)
    layer_params = [init_layer_params(k, D, dim_feedforward) for k in layer_keys]

    out = transformer_encoder(x, layer_params, nhead=nhead)
    out = jax.block_until_ready(out)
    ref = _ref_encoder(x, layer_params, nhead=nhead)
    assert out.shape == (B, S, D)
    err1 = float(jnp.max(jnp.abs(out - ref)))
    assert jnp.allclose(out, ref, atol=3e-2, rtol=3e-2), (
        f"config-1 mismatch vs JAX reference (max abs err {err1})")

    # --- Config 2: exercises K/V-cache reuse across query tiles (n_qt > 1),
    #     the chunked-FFN fori_loop (n_ff > 1), and sub-128 head dims. ---
    B2, S2, D2, nhead2, dff2 = 2, 256, 128, 4, 256
    k_x2, k_l2 = jax.random.split(jax.random.PRNGKey(0), 2)
    x2 = jax.random.normal(k_x2, (B2, S2, D2), jnp.float32)
    p2 = init_layer_params(k_l2, D2, dff2)
    out2 = encoder_block(x2, p2, nhead=nhead2, block_q=128, block_ff=128)
    out2 = jax.block_until_ready(out2)
    ref2 = _ref_block(x2, p2, nhead=nhead2)
    err2 = float(jnp.max(jnp.abs(out2 - ref2)))
    assert jnp.allclose(out2, ref2, atol=3e-2, rtol=3e-2), (
        f"config-2 mismatch vs JAX reference (max abs err {err2})")

    print("KERNEL_OK")
</pallas_src>

<mosaic_0001>
module attributes {stable_mosaic.version = 11 : i64} {
  func.func @_encoder_block_kernel(%arg0: i32, %arg1: i32, %arg2: memref<1x8x32xf32, #tpu.memory_space<vmem>>, %arg3: memref<1x8x32xf32, #tpu.memory_space<vmem>>, %arg4: memref<4x32x8xbf16, #tpu.memory_space<vmem>>, %arg5: memref<4x32x8xbf16, #tpu.memory_space<vmem>>, %arg6: memref<4x32x8xbf16, #tpu.memory_space<vmem>>, %arg7: memref<4x1x8xf32, #tpu.memory_space<vmem>>, %arg8: memref<4x1x8xf32, #tpu.memory_space<vmem>>, %arg9: memref<4x1x8xf32, #tpu.memory_space<vmem>>, %arg10: memref<32x32xbf16, #tpu.memory_space<vmem>>, %arg11: memref<1x32xf32, #tpu.memory_space<vmem>>, %arg12: memref<1x32xf32, #tpu.memory_space<vmem>>, %arg13: memref<1x32xf32, #tpu.memory_space<vmem>>, %arg14: memref<1x32x64xbf16, #tpu.memory_space<vmem>>, %arg15: memref<1x1x64xf32, #tpu.memory_space<vmem>>, %arg16: memref<1x64x32xbf16, #tpu.memory_space<vmem>>, %arg17: memref<1x32xf32, #tpu.memory_space<vmem>>, %arg18: memref<1x32xf32, #tpu.memory_space<vmem>>, %arg19: memref<1x32xf32, #tpu.memory_space<vmem>>, %arg20: memref<1x8x32xf32, #tpu.memory_space<vmem>>, %arg21: memref<4x8x8xbf16, #tpu.memory_space<vmem>>, %arg22: memref<4x8x8xbf16, #tpu.memory_space<vmem>>, %arg23: memref<8x32xbf16, #tpu.memory_space<vmem>>) attributes {dimension_semantics = [#tpu.dimension_semantics<parallel>, #tpu.dimension_semantics<arbitrary>], iteration_bounds = array<i64: 2, 1>, scalar_prefetch = 0 : i64, scratch_operands = 3 : i64, tpu.core_type = #tpu.core_type<tc>, window_params = [{transform_indices = @transform_0, window_bounds = array<i64: 1, 8, 32>}, {transform_indices = @transform_1, window_bounds = array<i64: 1, 8, 32>}, {pipeline_mode = #tpu.pipeline_mode<synchronous>, transform_indices = @transform_2, window_bounds = array<i64: 4, 32, 8>}, {pipeline_mode = #tpu.pipeline_mode<synchronous>, transform_indices = @transform_3, window_bounds = array<i64: 4, 32, 8>}, {pipeline_mode = #tpu.pipeline_mode<synchronous>, transform_indices = @transform_4, window_bounds = array<i64: 4, 32, 8>}, {pipeline_mode = #tpu.pipeline_mode<synchronous>, transform_indices = @transform_5, window_bounds = array<i64: 4, 1, 8>}, {pipeline_mode = #tpu.pipeline_mode<synchronous>, transform_indices = @transform_6, window_bounds = array<i64: 4, 1, 8>}, {pipeline_mode = #tpu.pipeline_mode<synchronous>, transform_indices = @transform_7, window_bounds = array<i64: 4, 1, 8>}, {pipeline_mode = #tpu.pipeline_mode<synchronous>, transform_indices = @transform_8, window_bounds = array<i64: 32, 32>}, {pipeline_mode = #tpu.pipeline_mode<synchronous>, transform_indices = @transform_9, window_bounds = array<i64: 1, 32>}, {pipeline_mode = #tpu.pipeline_mode<synchronous>, transform_indices = @transform_10, window_bounds = array<i64: 1, 32>}, {pipeline_mode = #tpu.pipeline_mode<synchronous>, transform_indices = @transform_11, window_bounds = array<i64: 1, 32>}, {pipeline_mode = #tpu.pipeline_mode<synchronous>, transform_indices = @transform_12, window_bounds = array<i64: 1, 32, 64>}, {pipeline_mode = #tpu.pipeline_mode<synchronous>, transform_indices = @transform_13, window_bounds = array<i64: 1, 1, 64>}, {pipeline_mode = #tpu.pipeline_mode<synchronous>, transform_indices = @transform_14, window_bounds = array<i64: 1, 64, 32>}, {pipeline_mode = #tpu.pipeline_mode<synchronous>, transform_indices = @transform_15, window_bounds = array<i64: 1, 32>}, {pipeline_mode = #tpu.pipeline_mode<synchronous>, transform_indices = @transform_16, window_bounds = array<i64: 1, 32>}, {pipeline_mode = #tpu.pipeline_mode<synchronous>, transform_indices = @transform_17, window_bounds = array<i64: 1, 32>}, {transform_indices = @transform_18, window_bounds = array<i64: 1, 8, 32>}]} {
    %c0_i32 = arith.constant 0 : i32
    %0 = arith.cmpi eq, %arg1, %c0_i32 : i32
    %1 = arith.extui %0 : i1 to i32
    %c0_i32_0 = arith.constant 0 : i32
    %2 = arith.cmpi ne, %1, %c0_i32_0 : i32
    scf.if %2 {
      %c0_113 = arith.constant 0 : index
      %c0_114 = arith.constant 0 : index
      %c0_115 = arith.constant 0 : index
      %187 = vector.load %arg2[%c0_113, %c0_114, %c0_115] : memref<1x8x32xf32, #tpu.memory_space<vmem>>, vector<1x8x32xf32>
      %188 = vector.shape_cast %187 : vector<1x8x32xf32> to vector<8x32xf32>
      %189 = arith.truncf %188 : vector<8x32xf32> to vector<8x32xbf16>
      %c0_i32_116 = arith.constant 0 : i32
      %c4_i32 = arith.constant 4 : i32
      %190 = arith.addi %c0_i32_116, %c4_i32 : i32
      %c1_i32_117 = arith.constant 1 : i32
      scf.for %arg24 = %c0_i32_116 to %190 step %c1_i32_117  : i32 {
        %191 = arith.index_cast %arg24 : i32 to index
        %c0_119 = arith.constant 0 : index
        %c0_120 = arith.constant 0 : index
        %192 = vector.load %arg5[%191, %c0_119, %c0_120] : memref<4x32x8xbf16, #tpu.memory_space<vmem>>, vector<1x32x8xbf16>
        %193 = vector.shape_cast %192 : vector<1x32x8xbf16> to vector<32x8xbf16>
        %cst_121 = arith.constant dense<0.000000e+00> : vector<8x8xf32>
        %194 = tpu.matmul %189, %193, %cst_121 {dimension_numbers = #tpu.dot_dimension_numbers<[1], [0], [0], [1], [0, 0, 1, 1], [], []>} : vector<8x32xbf16>, vector<32x8xbf16>, vector<8x8xf32> -> vector<8x8xf32>
        %195 = arith.index_cast %arg24 : i32 to index
        %c0_122 = arith.constant 0 : index
        %c0_123 = arith.constant 0 : index
        %196 = vector.load %arg8[%195, %c0_122, %c0_123] : memref<4x1x8xf32, #tpu.memory_space<vmem>>, vector<1x1x8xf32>
        %197 = vector.shape_cast %196 : vector<1x1x8xf32> to vector<1x8xf32>
        %198 = vector.broadcast %197 : vector<1x8xf32> to vector<8x8xf32>
        %199 = arith.addf %194, %198 : vector<8x8xf32>
        %200 = arith.truncf %199 : vector<8x8xf32> to vector<8x8xbf16>
        %201 = arith.index_cast %arg24 : i32 to index
        %c0_124 = arith.constant 0 : index
        %c0_125 = arith.constant 0 : index
        %202 = vector.load %arg21[%201, %c0_124, %c0_125] : memref<4x8x8xbf16, #tpu.memory_space<vmem>>, vector<1x8x8xbf16>
        %203 = vector.shape_cast %202 : vector<1x8x8xbf16> to vector<8x8xbf16>
        %204 = vector.shape_cast %200 : vector<8x8xbf16> to vector<1x8x8xbf16>
        tpu.vector_store %arg21[%201, %c0_124, %c0_125], %204 {strides = array<i32>} : memref<4x8x8xbf16, #tpu.memory_space<vmem>>, vector<1x8x8xbf16>,
        %205 = arith.index_cast %arg24 : i32 to index
        %c0_126 = arith.constant 0 : index
        %c0_127 = arith.constant 0 : index
        %206 = vector.load %arg6[%205, %c0_126, %c0_127] : memref<4x32x8xbf16, #tpu.memory_space<vmem>>, vector<1x32x8xbf16>
        %207 = vector.shape_cast %206 : vector<1x32x8xbf16> to vector<32x8xbf16>
        %cst_128 = arith.constant dense<0.000000e+00> : vector<8x8xf32>
        %208 = tpu.matmul %189, %207, %cst_128 {dimension_numbers = #tpu.dot_dimension_numbers<[1], [0], [0], [1], [0, 0, 1, 1], [], []>} : vector<8x32xbf16>, vector<32x8xbf16>, vector<8x8xf32> -> vector<8x8xf32>
        %209 = arith.index_cast %arg24 : i32 to index
        %c0_129 = arith.constant 0 : index
        %c0_130 = arith.constant 0 : index
        %210 = vector.load %arg9[%209, %c0_129, %c0_130] : memref<4x1x8xf32, #tpu.memory_space<vmem>>, vector<1x1x8xf32>
        %211 = vector.shape_cast %210 : vector<1x1x8xf32> to vector<1x8xf32>
        %212 = vector.broadcast %211 : vector<1x8xf32> to vector<8x8xf32>
        %213 = arith.addf %208, %212 : vector<8x8xf32>
        %214 = arith.truncf %213 : vector<8x8xf32> to vector<8x8xbf16>
        %215 = arith.index_cast %arg24 : i32 to index
        %c0_131 = arith.constant 0 : index
        %c0_132 = arith.constant 0 : index
        %216 = vector.load %arg22[%215, %c0_131, %c0_132] : memref<4x8x8xbf16, #tpu.memory_space<vmem>>, vector<1x8x8xbf16>
        %217 = vector.shape_cast %216 : vector<1x8x8xbf16> to vector<8x8xbf16>
        %218 = vector.shape_cast %214 : vector<8x8xbf16> to vector<1x8x8xbf16>
        tpu.vector_store %arg22[%215, %c0_131, %c0_132], %218 {strides = array<i32>} : memref<4x8x8xbf16, #tpu.memory_space<vmem>>, vector<1x8x8xbf16>,
      }
      %c4_i32_118 = arith.constant 4 : i32
    } else {
    }
    %c0 = arith.constant 0 : index
    %c0_1 = arith.constant 0 : index
    %c0_2 = arith.constant 0 : index
    %3 = vector.load %arg3[%c0, %c0_1, %c0_2] : memref<1x8x32xf32, #tpu.memory_space<vmem>>, vector<1x8x32xf32>
    %4 = vector.shape_cast %3 : vector<1x8x32xf32> to vector<8x32xf32>
    %5 = arith.truncf %4 : vector<8x32xf32> to vector<8x32xbf16>
    %c0_3 = arith.constant 0 : index
    %c0_4 = arith.constant 0 : index
    %c0_5 = arith.constant 0 : index
    %6 = vector.load %arg4[%c0_3, %c0_4, %c0_5] : memref<4x32x8xbf16, #tpu.memory_space<vmem>>, vector<1x32x8xbf16>
    %7 = vector.shape_cast %6 : vector<1x32x8xbf16> to vector<32x8xbf16>
    %cst = arith.constant dense<0.000000e+00> : vector<8x8xf32>
    %8 = tpu.matmul %5, %7, %cst {dimension_numbers = #tpu.dot_dimension_numbers<[1], [0], [0], [1], [0, 0, 1, 1], [], []>} : vector<8x32xbf16>, vector<32x8xbf16>, vector<8x8xf32> -> vector<8x8xf32>
    %c0_6 = arith.constant 0 : index
    %c0_7 = arith.constant 0 : index
    %c0_8 = arith.constant 0 : index
    %9 = vector.load %arg7[%c0_6, %c0_7, %c0_8] : memref<4x1x8xf32, #tpu.memory_space<vmem>>, vector<1x1x8xf32>
    %10 = vector.shape_cast %9 : vector<1x1x8xf32> to vector<1x8xf32>
    %11 = vector.broadcast %10 : vector<1x8xf32> to vector<8x8xf32>
    %12 = arith.addf %8, %11 : vector<8x8xf32>
    %cst_9 = arith.constant 0.353553385 : f32
    %13 = vector.broadcast %cst_9 : f32 to vector<8x8xf32>
    %14 = arith.mulf %12, %13 : vector<8x8xf32>
    %15 = arith.truncf %14 : vector<8x8xf32> to vector<8x8xbf16>
    %c0_10 = arith.constant 0 : index
    %c0_11 = arith.constant 0 : index
    %c0_12 = arith.constant 0 : index
    %16 = vector.load %arg21[%c0_10, %c0_11, %c0_12] : memref<4x8x8xbf16, #tpu.memory_space<vmem>>, vector<1x8x8xbf16>
    %17 = vector.shape_cast %16 : vector<1x8x8xbf16> to vector<8x8xbf16>
    %cst_13 = arith.constant dense<0.000000e+00> : vector<8x8xf32>
    %18 = tpu.matmul %15, %17, %cst_13 {dimension_numbers = #tpu.dot_dimension_numbers<[1], [1], [0], [0], [0, 0, 1, 0], [], []>} : vector<8x8xbf16>, vector<8x8xbf16>, vector<8x8xf32> -> vector<8x8xf32>
    %cst_14 = arith.constant dense<0xFF800000> : vector<8xf32>
    %19 = vector.multi_reduction <maximumf>, %18, %cst_14 [1] : vector<8x8xf32> to vector<8xf32>
    %20 = vector.shape_cast %19 : vector<8xf32> to vector<8x1xf32>
    %21 = vector.broadcast %20 : vector<8x1xf32> to vector<8x8xf32>
    %22 = arith.subf %18, %21 : vector<8x8xf32>
    %23 = math.exp %22 : vector<8x8xf32>
    %cst_15 = arith.constant dense<0.000000e+00> : vector<8xf32>
    %24 = vector.multi_reduction <add>, %23, %cst_15 [1] : vector<8x8xf32> to vector<8xf32>
    %25 = vector.shape_cast %24 : vector<8xf32> to vector<8x1xf32>
    %26 = tpu.reciprocal %25 {approx = true} : vector<8x1xf32> -> vector<8x1xf32>
    %27 = vector.broadcast %26 : vector<8x1xf32> to vector<8x8xf32>
    %28 = arith.mulf %23, %27 : vector<8x8xf32>
    %29 = arith.truncf %28 : vector<8x8xf32> to vector<8x8xbf16>
    %c0_16 = arith.constant 0 : index
    %c0_17 = arith.constant 0 : index
    %c0_18 = arith.constant 0 : index
    %30 = vector.load %arg22[%c0_16, %c0_17, %c0_18] : memref<4x8x8xbf16, #tpu.memory_space<vmem>>, vector<1x8x8xbf16>
    %31 = vector.shape_cast %30 : vector<1x8x8xbf16> to vector<8x8xbf16>
    %cst_19 = arith.constant dense<0.000000e+00> : vector<8x8xf32>
    %32 = tpu.matmul %29, %31, %cst_19 {dimension_numbers = #tpu.dot_dimension_numbers<[1], [0], [0], [1], [0, 0, 1, 1], [], []>} : vector<8x8xbf16>, vector<8x8xbf16>, vector<8x8xf32> -> vector<8x8xf32>
    %33 = arith.truncf %32 : vector<8x8xf32> to vector<8x8xbf16>
    %c0_20 = arith.constant 0 : index
    %c0_21 = arith.constant 0 : index
    %34 = vector.load %arg23[%c0_20, %c0_21] : memref<8x32xbf16, #tpu.memory_space<vmem>>, vector<8x8xbf16>
    tpu.vector_store %arg23[%c0_20, %c0_21], %33 {strides = array<i32>} : memref<8x32xbf16, #tpu.memory_space<vmem>>, vector<8x8xbf16>,
    %c1 = arith.constant 1 : index
    %c0_22 = arith.constant 0 : index
    %c0_23 = arith.constant 0 : index
    %35 = vector.load %arg4[%c1, %c0_22, %c0_23] : memref<4x32x8xbf16, #tpu.memory_space<vmem>>, vector<1x32x8xbf16>
    %36 = vector.shape_cast %35 : vector<1x32x8xbf16> to vector<32x8xbf16>
    %cst_24 = arith.constant dense<0.000000e+00> : vector<8x8xf32>
    %37 = tpu.matmul %5, %36, %cst_24 {dimension_numbers = #tpu.dot_dimension_numbers<[1], [0], [0], [1], [0, 0, 1, 1], [], []>} : vector<8x32xbf16>, vector<32x8xbf16>, vector<8x8xf32> -> vector<8x8xf32>
    %c1_25 = arith.constant 1 : index
    %c0_26 = arith.constant 0 : index
    %c0_27 = arith.constant 0 : index
    %38 = vector.load %arg7[%c1_25, %c0_26, %c0_27] : memref<4x1x8xf32, #tpu.memory_space<vmem>>, vector<1x1x8xf32>
    %39 = vector.shape_cast %38 : vector<1x1x8xf32> to vector<1x8xf32>
    %40 = vector.broadcast %39 : vector<1x8xf32> to vector<8x8xf32>
    %41 = arith.addf %37, %40 : vector<8x8xf32>
    %cst_28 = arith.constant 0.353553385 : f32
    %42 = vector.broadcast %cst_28 : f32 to vector<8x8xf32>
    %43 = arith.mulf %41, %42 : vector<8x8xf32>
    %44 = arith.truncf %43 : vector<8x8xf32> to vector<8x8xbf16>
    %c1_29 = arith.constant 1 : index
    %c0_30 = arith.constant 0 : index
    %c0_31 = arith.constant 0 : index
    %45 = vector.load %arg21[%c1_29, %c0_30, %c0_31] : memref<4x8x8xbf16, #tpu.memory_space<vmem>>, vector<1x8x8xbf16>
    %46 = vector.shape_cast %45 : vector<1x8x8xbf16> to vector<8x8xbf16>
    %cst_32 = arith.constant dense<0.000000e+00> : vector<8x8xf32>
    %47 = tpu.matmul %44, %46, %cst_32 {dimension_numbers = #tpu.dot_dimension_numbers<[1], [1], [0], [0], [0, 0, 1, 0], [], []>} : vector<8x8xbf16>, vector<8x8xbf16>, vector<8x8xf32> -> vector<8x8xf32>
    %cst_33 = arith.constant dense<0xFF800000> : vector<8xf32>
    %48 = vector.multi_reduction <maximumf>, %47, %cst_33 [1] : vector<8x8xf32> to vector<8xf32>
    %49 = vector.shape_cast %48 : vector<8xf32> to vector<8x1xf32>
    %50 = vector.broadcast %49 : vector<8x1xf32> to vector<8x8xf32>
    %51 = arith.subf %47, %50 : vector<8x8xf32>
    %52 = math.exp %51 : vector<8x8xf32>
    %cst_34 = arith.constant dense<0.000000e+00> : vector<8xf32>
    %53 = vector.multi_reduction <add>, %52, %cst_34 [1] : vector<8x8xf32> to vector<8xf32>
    %54 = vector.shape_cast %53 : vector<8xf32> to vector<8x1xf32>
    %55 = tpu.reciprocal %54 {approx = true} : vector<8x1xf32> -> vector<8x1xf32>
    %56 = vector.broadcast %55 : vector<8x1xf32> to vector<8x8xf32>
    %57 = arith.mulf %52, %56 : vector<8x8xf32>
    %58 = arith.truncf %57 : vector<8x8xf32> to vector<8x8xbf16>
    %c1_35 = arith.constant 1 : index
    %c0_36 = arith.constant 0 : index
    %c0_37 = arith.constant 0 : index
    %59 = vector.load %arg22[%c1_35, %c0_36, %c0_37] : memref<4x8x8xbf16, #tpu.memory_space<vmem>>, vector<1x8x8xbf16>
    %60 = vector.shape_cast %59 : vector<1x8x8xbf16> to vector<8x8xbf16>
    %cst_38 = arith.constant dense<0.000000e+00> : vector<8x8xf32>
    %61 = tpu.matmul %58, %60, %cst_38 {dimension_numbers = #tpu.dot_dimension_numbers<[1], [0], [0], [1], [0, 0, 1, 1], [], []>} : vector<8x8xbf16>, vector<8x8xbf16>, vector<8x8xf32> -> vector<8x8xf32>
    %62 = arith.truncf %61 : vector<8x8xf32> to vector<8x8xbf16>
    %c0_39 = arith.constant 0 : index
    %c8 = arith.constant 8 : index
    %63 = vector.load %arg23[%c0_39, %c8] : memref<8x32xbf16, #tpu.memory_space<vmem>>, vector<8x8xbf16>
    tpu.vector_store %arg23[%c0_39, %c8], %62 {strides = array<i32>} : memref<8x32xbf16, #tpu.memory_space<vmem>>, vector<8x8xbf16>,
    %c2 = arith.constant 2 : index
    %c0_40 = arith.constant 0 : index
    %c0_41 = arith.constant 0 : index
    %64 = vector.load %arg4[%c2, %c0_40, %c0_41] : memref<4x32x8xbf16, #tpu.memory_space<vmem>>, vector<1x32x8xbf16>
    %65 = vector.shape_cast %64 : vector<1x32x8xbf16> to vector<32x8xbf16>
    %cst_42 = arith.constant dense<0.000000e+00> : vector<8x8xf32>
    %66 = tpu.matmul %5, %65, %cst_42 {dimension_numbers = #tpu.dot_dimension_numbers<[1], [0], [0], [1], [0, 0, 1, 1], [], []>} : vector<8x32xbf16>, vector<32x8xbf16>, vector<8x8xf32> -> vector<8x8xf32>
    %c2_43 = arith.constant 2 : index
    %c0_44 = arith.constant 0 : index
    %c0_45 = arith.constant 0 : index
    %67 = vector.load %arg7[%c2_43, %c0_44, %c0_45] : memref<4x1x8xf32, #tpu.memory_space<vmem>>, vector<1x1x8xf32>
    %68 = vector.shape_cast %67 : vector<1x1x8xf32> to vector<1x8xf32>
    %69 = vector.broadcast %68 : vector<1x8xf32> to vector<8x8xf32>
    %70 = arith.addf %66, %69 : vector<8x8xf32>
    %cst_46 = arith.constant 0.353553385 : f32
    %71 = vector.broadcast %cst_46 : f32 to vector<8x8xf32>
    %72 = arith.mulf %70, %71 : vector<8x8xf32>
    %73 = arith.truncf %72 : vector<8x8xf32> to vector<8x8xbf16>
    %c2_47 = arith.constant 2 : index
    %c0_48 = arith.constant 0 : index
    %c0_49 = arith.constant 0 : index
    %74 = vector.load %arg21[%c2_47, %c0_48, %c0_49] : memref<4x8x8xbf16, #tpu.memory_space<vmem>>, vector<1x8x8xbf16>
    %75 = vector.shape_cast %74 : vector<1x8x8xbf16> to vector<8x8xbf16>
    %cst_50 = arith.constant dense<0.000000e+00> : vector<8x8xf32>
    %76 = tpu.matmul %73, %75, %cst_50 {dimension_numbers = #tpu.dot_dimension_numbers<[1], [1], [0], [0], [0, 0, 1, 0], [], []>} : vector<8x8xbf16>, vector<8x8xbf16>, vector<8x8xf32> -> vector<8x8xf32>
    %cst_51 = arith.constant dense<0xFF800000> : vector<8xf32>
    %77 = vector.multi_reduction <maximumf>, %76, %cst_51 [1] : vector<8x8xf32> to vector<8xf32>
    %78 = vector.shape_cast %77 : vector<8xf32> to vector<8x1xf32>
    %79 = vector.broadcast %78 : vector<8x1xf32> to vector<8x8xf32>
    %80 = arith.subf %76, %79 : vector<8x8xf32>
    %81 = math.exp %80 : vector<8x8xf32>
    %cst_52 = arith.constant dense<0.000000e+00> : vector<8xf32>
    %82 = vector.multi_reduction <add>, %81, %cst_52 [1] : vector<8x8xf32> to vector<8xf32>
    %83 = vector.shape_cast %82 : vector<8xf32> to vector<8x1xf32>
    %84 = tpu.reciprocal %83 {approx = true} : vector<8x1xf32> -> vector<8x1xf32>
    %85 = vector.broadcast %84 : vector<8x1xf32> to vector<8x8xf32>
    %86 = arith.mulf %81, %85 : vector<8x8xf32>
    %87 = arith.truncf %86 : vector<8x8xf32> to vector<8x8xbf16>
    %c2_53 = arith.constant 2 : index
    %c0_54 = arith.constant 0 : index
    %c0_55 = arith.constant 0 : index
    %88 = vector.load %arg22[%c2_53, %c0_54, %c0_55] : memref<4x8x8xbf16, #tpu.memory_space<vmem>>, vector<1x8x8xbf16>
    %89 = vector.shape_cast %88 : vector<1x8x8xbf16> to vector<8x8xbf16>
    %cst_56 = arith.constant dense<0.000000e+00> : vector<8x8xf32>
    %90 = tpu.matmul %87, %89, %cst_56 {dimension_numbers = #tpu.dot_dimension_numbers<[1], [0], [0], [1], [0, 0, 1, 1], [], []>} : vector<8x8xbf16>, vector<8x8xbf16>, vector<8x8xf32> -> vector<8x8xf32>
    %91 = arith.truncf %90 : vector<8x8xf32> to vector<8x8xbf16>
    %c0_57 = arith.constant 0 : index
    %c16 = arith.constant 16 : index
    %92 = vector.load %arg23[%c0_57, %c16] : memref<8x32xbf16, #tpu.memory_space<vmem>>, vector<8x8xbf16>
    tpu.vector_store %arg23[%c0_57, %c16], %91 {strides = array<i32>} : memref<8x32xbf16, #tpu.memory_space<vmem>>, vector<8x8xbf16>,
    %c3 = arith.constant 3 : index
    %c0_58 = arith.constant 0 : index
    %c0_59 = arith.constant 0 : index
    %93 = vector.load %arg4[%c3, %c0_58, %c0_59] : memref<4x32x8xbf16, #tpu.memory_space<vmem>>, vector<1x32x8xbf16>
    %94 = vector.shape_cast %93 : vector<1x32x8xbf16> to vector<32x8xbf16>
    %cst_60 = arith.constant dense<0.000000e+00> : vector<8x8xf32>
    %95 = tpu.matmul %5, %94, %cst_60 {dimension_numbers = #tpu.dot_dimension_numbers<[1], [0], [0], [1], [0, 0, 1, 1], [], []>} : vector<8x32xbf16>, vector<32x8xbf16>, vector<8x8xf32> -> vector<8x8xf32>
    %c3_61 = arith.constant 3 : index
    %c0_62 = arith.constant 0 : index
    %c0_63 = arith.constant 0 : index
    %96 = vector.load %arg7[%c3_61, %c0_62, %c0_63] : memref<4x1x8xf32, #tpu.memory_space<vmem>>, vector<1x1x8xf32>
    %97 = vector.shape_cast %96 : vector<1x1x8xf32> to vector<1x8xf32>
    %98 = vector.broadcast %97 : vector<1x8xf32> to vector<8x8xf32>
    %99 = arith.addf %95, %98 : vector<8x8xf32>
    %cst_64 = arith.constant 0.353553385 : f32
    %100 = vector.broadcast %cst_64 : f32 to vector<8x8xf32>
    %101 = arith.mulf %99, %100 : vector<8x8xf32>
    %102 = arith.truncf %101 : vector<8x8xf32> to vector<8x8xbf16>
    %c3_65 = arith.constant 3 : index
    %c0_66 = arith.constant 0 : index
    %c0_67 = arith.constant 0 : index
    %103 = vector.load %arg21[%c3_65, %c0_66, %c0_67] : memref<4x8x8xbf16, #tpu.memory_space<vmem>>, vector<1x8x8xbf16>
    %104 = vector.shape_cast %103 : vector<1x8x8xbf16> to vector<8x8xbf16>
    %cst_68 = arith.constant dense<0.000000e+00> : vector<8x8xf32>
    %105 = tpu.matmul %102, %104, %cst_68 {dimension_numbers = #tpu.dot_dimension_numbers<[1], [1], [0], [0], [0, 0, 1, 0], [], []>} : vector<8x8xbf16>, vector<8x8xbf16>, vector<8x8xf32> -> vector<8x8xf32>
    %cst_69 = arith.constant dense<0xFF800000> : vector<8xf32>
    %106 = vector.multi_reduction <maximumf>, %105, %cst_69 [1] : vector<8x8xf32> to vector<8xf32>
    %107 = vector.shape_cast %106 : vector<8xf32> to vector<8x1xf32>
    %108 = vector.broadcast %107 : vector<8x1xf32> to vector<8x8xf32>
    %109 = arith.subf %105, %108 : vector<8x8xf32>
    %110 = math.exp %109 : vector<8x8xf32>
    %cst_70 = arith.constant dense<0.000000e+00> : vector<8xf32>
    %111 = vector.multi_reduction <add>, %110, %cst_70 [1] : vector<8x8xf32> to vector<8xf32>
    %112 = vector.shape_cast %111 : vector<8xf32> to vector<8x1xf32>
    %113 = tpu.reciprocal %112 {approx = true} : vector<8x1xf32> -> vector<8x1xf32>
    %114 = vector.broadcast %113 : vector<8x1xf32> to vector<8x8xf32>
    %115 = arith.mulf %110, %114 : vector<8x8xf32>
    %116 = arith.truncf %115 : vector<8x8xf32> to vector<8x8xbf16>
    %c3_71 = arith.constant 3 : index
    %c0_72 = arith.constant 0 : index
    %c0_73 = arith.constant 0 : index
    %117 = vector.load %arg22[%c3_71, %c0_72, %c0_73] : memref<4x8x8xbf16, #tpu.memory_space<vmem>>, vector<1x8x8xbf16>
    %118 = vector.shape_cast %117 : vector<1x8x8xbf16> to vector<8x8xbf16>
    %cst_74 = arith.constant dense<0.000000e+00> : vector<8x8xf32>
    %119 = tpu.matmul %116, %118, %cst_74 {dimension_numbers = #tpu.dot_dimension_numbers<[1], [0], [0], [1], [0, 0, 1, 1], [], []>} : vector<8x8xbf16>, vector<8x8xbf16>, vector<8x8xf32> -> vector<8x8xf32>
    %120 = arith.truncf %119 : vector<8x8xf32> to vector<8x8xbf16>
    %c0_75 = arith.constant 0 : index
    %c24 = arith.constant 24 : index
    %121 = vector.load %arg23[%c0_75, %c24] : memref<8x32xbf16, #tpu.memory_space<vmem>>, vector<8x8xbf16>
    tpu.vector_store %arg23[%c0_75, %c24], %120 {strides = array<i32>} : memref<8x32xbf16, #tpu.memory_space<vmem>>, vector<8x8xbf16>,
    %c0_76 = arith.constant 0 : index
    %c0_77 = arith.constant 0 : index
    %122 = vector.load %arg23[%c0_76, %c0_77] : memref<8x32xbf16, #tpu.memory_space<vmem>>, vector<8x32xbf16>
    %c0_78 = arith.constant 0 : index
    %c0_79 = arith.constant 0 : index
    %123 = vector.load %arg10[%c0_78, %c0_79] : memref<32x32xbf16, #tpu.memory_space<vmem>>, vector<32x32xbf16>
    %cst_80 = arith.constant dense<0.000000e+00> : vector<8x32xf32>
    %124 = tpu.matmul %122, %123, %cst_80 {dimension_numbers = #tpu.dot_dimension_numbers<[1], [0], [0], [1], [0, 0, 1, 1], [], []>} : vector<8x32xbf16>, vector<32x32xbf16>, vector<8x32xf32> -> vector<8x32xf32>
    %c0_81 = arith.constant 0 : index
    %c0_82 = arith.constant 0 : index
    %125 = vector.load %arg11[%c0_81, %c0_82] : memref<1x32xf32, #tpu.memory_space<vmem>>, vector<1x32xf32>
    %126 = vector.broadcast %125 : vector<1x32xf32> to vector<8x32xf32>
    %127 = arith.addf %124, %126 : vector<8x32xf32>
    %128 = arith.addf %4, %127 : vector<8x32xf32>
    %129 = arith.mulf %128, %128 : vector<8x32xf32>
    %cst_83 = arith.constant dense<0.000000e+00> : vector<8xf32>
    %130 = vector.multi_reduction <add>, %129, %cst_83 [1] : vector<8x32xf32> to vector<8xf32>
    %131 = vector.shape_cast %130 : vector<8xf32> to vector<8x1xf32>
    %cst_84 = arith.constant 3.200000e+01 : f32
    %132 = vector.broadcast %cst_84 : f32 to vector<8x1xf32>
    %133 = arith.divf %131, %132 : vector<8x1xf32>
    %cst_85 = arith.constant 9.99999974E-6 : f32
    %134 = vector.broadcast %cst_85 : f32 to vector<8x1xf32>
    %135 = arith.addf %133, %134 : vector<8x1xf32>
    %136 = math.rsqrt %135 : vector<8x1xf32>
    %137 = vector.broadcast %136 : vector<8x1xf32> to vector<8x32xf32>
    %138 = arith.mulf %128, %137 : vector<8x32xf32>
    %c0_86 = arith.constant 0 : index
    %c0_87 = arith.constant 0 : index
    %139 = vector.load %arg12[%c0_86, %c0_87] : memref<1x32xf32, #tpu.memory_space<vmem>>, vector<1x32xf32>
    %140 = vector.broadcast %139 : vector<1x32xf32> to vector<8x32xf32>
    %141 = arith.mulf %138, %140 : vector<8x32xf32>
    %c0_88 = arith.constant 0 : index
    %c0_89 = arith.constant 0 : index
    %142 = vector.load %arg13[%c0_88, %c0_89] : memref<1x32xf32, #tpu.memory_space<vmem>>, vector<1x32xf32>
    %143 = vector.broadcast %142 : vector<1x32xf32> to vector<8x32xf32>
    %144 = arith.addf %141, %143 : vector<8x32xf32>
    %145 = arith.truncf %144 : vector<8x32xf32> to vector<8x32xbf16>
    %cst_90 = arith.constant 0.000000e+00 : f32
    %146 = vector.broadcast %cst_90 : f32 to vector<8x32xf32>
    %c0_i32_91 = arith.constant 0 : i32
    %147 = arith.index_cast %c0_i32_91 : i32 to index
    %c0_92 = arith.constant 0 : index
    %c0_93 = arith.constant 0 : index
    %148 = vector.load %arg14[%147, %c0_92, %c0_93] : memref<1x32x64xbf16, #tpu.memory_space<vmem>>, vector<1x32x64xbf16>
    %149 = vector.shape_cast %148 : vector<1x32x64xbf16> to vector<32x64xbf16>
    %cst_94 = arith.constant dense<0.000000e+00> : vector<8x64xf32>
    %150 = tpu.matmul %145, %149, %cst_94 {dimension_numbers = #tpu.dot_dimension_numbers<[1], [0], [0], [1], [0, 0, 1, 1], [], []>} : vector<8x32xbf16>, vector<32x64xbf16>, vector<8x64xf32> -> vector<8x64xf32>
    %151 = arith.index_cast %c0_i32_91 : i32 to index
    %c0_95 = arith.constant 0 : index
    %c0_96 = arith.constant 0 : index
    %152 = vector.load %arg15[%151, %c0_95, %c0_96] : memref<1x1x64xf32, #tpu.memory_space<vmem>>, vector<1x1x64xf32>
    %153 = vector.shape_cast %152 : vector<1x1x64xf32> to vector<1x64xf32>
    %154 = vector.broadcast %153 : vector<1x64xf32> to vector<8x64xf32>
    %155 = arith.addf %150, %154 : vector<8x64xf32>
    %cst_97 = arith.constant 0.000000e+00 : f32
    %156 = vector.broadcast %cst_97 : f32 to vector<8x64xf32>
    %157 = arith.maximumf %155, %156 : vector<8x64xf32>
    %158 = arith.truncf %157 : vector<8x64xf32> to vector<8x64xbf16>
    %159 = arith.index_cast %c0_i32_91 : i32 to index
    %c0_98 = arith.constant 0 : index
    %c0_99 = arith.constant 0 : index
    %160 = vector.load %arg16[%159, %c0_98, %c0_99] : memref<1x64x32xbf16, #tpu.memory_space<vmem>>, vector<1x64x32xbf16>
    %161 = vector.shape_cast %160 : vector<1x64x32xbf16> to vector<64x32xbf16>
    %cst_100 = arith.constant dense<0.000000e+00> : vector<8x32xf32>
    %162 = tpu.matmul %158, %161, %cst_100 {dimension_numbers = #tpu.dot_dimension_numbers<[1], [0], [0], [1], [0, 0, 1, 1], [], []>} : vector<8x64xbf16>, vector<64x32xbf16>, vector<8x32xf32> -> vector<8x32xf32>
    %163 = arith.addf %146, %162 : vector<8x32xf32>
    %c1_i32 = arith.constant 1 : i32
    %c0_101 = arith.constant 0 : index
    %c0_102 = arith.constant 0 : index
    %164 = vector.load %arg17[%c0_101, %c0_102] : memref<1x32xf32, #tpu.memory_space<vmem>>, vector<1x32xf32>
    %165 = vector.broadcast %164 : vector<1x32xf32> to vector<8x32xf32>
    %166 = arith.addf %163, %165 : vector<8x32xf32>
    %167 = arith.addf %144, %166 : vector<8x32xf32>
    %168 = arith.mulf %167, %167 : vector<8x32xf32>
    %cst_103 = arith.constant dense<0.000000e+00> : vector<8xf32>
    %169 = vector.multi_reduction <add>, %168, %cst_103 [1] : vector<8x32xf32> to vector<8xf32>
    %170 = vector.shape_cast %169 : vector<8xf32> to vector<8x1xf32>
    %cst_104 = arith.constant 3.200000e+01 : f32
    %171 = vector.broadcast %cst_104 : f32 to vector<8x1xf32>
    %172 = arith.divf %170, %171 : vector<8x1xf32>
    %cst_105 = arith.constant 9.99999974E-6 : f32
    %173 = vector.broadcast %cst_105 : f32 to vector<8x1xf32>
    %174 = arith.addf %172, %173 : vector<8x1xf32>
    %175 = math.rsqrt %174 : vector<8x1xf32>
    %176 = vector.broadcast %175 : vector<8x1xf32> to vector<8x32xf32>
    %177 = arith.mulf %167, %176 : vector<8x32xf32>
    %c0_106 = arith.constant 0 : index
    %c0_107 = arith.constant 0 : index
    %178 = vector.load %arg18[%c0_106, %c0_107] : memref<1x32xf32, #tpu.memory_space<vmem>>, vector<1x32xf32>
    %179 = vector.broadcast %178 : vector<1x32xf32> to vector<8x32xf32>
    %180 = arith.mulf %177, %179 : vector<8x32xf32>
    %c0_108 = arith.constant 0 : index
    %c0_109 = arith.constant 0 : index
    %181 = vector.load %arg19[%c0_108, %c0_109] : memref<1x32xf32, #tpu.memory_space<vmem>>, vector<1x32xf32>
    %182 = vector.broadcast %181 : vector<1x32xf32> to vector<8x32xf32>
    %183 = arith.addf %180, %182 : vector<8x32xf32>
    %c0_110 = arith.constant 0 : index
    %c0_111 = arith.constant 0 : index
    %c0_112 = arith.constant 0 : index
    %184 = vector.load %arg20[%c0_110, %c0_111, %c0_112] : memref<1x8x32xf32, #tpu.memory_space<vmem>>, vector<1x8x32xf32>
    %185 = vector.shape_cast %184 : vector<1x8x32xf32> to vector<8x32xf32>
    %186 = vector.shape_cast %183 : vector<8x32xf32> to vector<1x8x32xf32>
    tpu.vector_store %arg20[%c0_110, %c0_111, %c0_112], %186 {strides = array<i32>} : memref<1x8x32xf32, #tpu.memory_space<vmem>>, vector<1x8x32xf32>,
    return
  }
  func.func @transform_0(%arg0: i32, %arg1: i32) -> (i32, i32, i32) {
    %c0_i32 = arith.constant 0 : i32
    %c0_i32_0 = arith.constant 0 : i32
    %c0_i32_1 = arith.constant 0 : i32
    return %arg0, %c0_i32, %c0_i32_0 : i32, i32, i32
  }
  func.func @transform_1(%arg0: i32, %arg1: i32) -> (i32, i32, i32) {
    %c0_i32 = arith.constant 0 : i32
    %c0_i32_0 = arith.constant 0 : i32
    return %arg0, %arg1, %c0_i32 : i32, i32, i32
  }
  func.func @transform_2(%arg0: i32, %arg1: i32) -> (i32, i32, i32) {
    %c0_i32 = arith.constant 0 : i32
    %c0_i32_0 = arith.constant 0 : i32
    %c0_i32_1 = arith.constant 0 : i32
    %c0_i32_2 = arith.constant 0 : i32
    return %c0_i32, %c0_i32_0, %c0_i32_1 : i32, i32, i32
  }
  func.func @transform_3(%arg0: i32, %arg1: i32) -> (i32, i32, i32) {
    %c0_i32 = arith.constant 0 : i32
    %c0_i32_0 = arith.constant 0 : i32
    %c0_i32_1 = arith.constant 0 : i32
    %c0_i32_2 = arith.constant 0 : i32
    return %c0_i32, %c0_i32_0, %c0_i32_1 : i32, i32, i32
  }
  func.func @transform_4(%arg0: i32, %arg1: i32) -> (i32, i32, i32) {
    %c0_i32 = arith.constant 0 : i32
    %c0_i32_0 = arith.constant 0 : i32
    %c0_i32_1 = arith.constant 0 : i32
    %c0_i32_2 = arith.constant 0 : i32
    return %c0_i32, %c0_i32_0, %c0_i32_1 : i32, i32, i32
  }
  func.func @transform_5(%arg0: i32, %arg1: i32) -> (i32, i32, i32) {
    %c0_i32 = arith.constant 0 : i32
    %c0_i32_0 = arith.constant 0 : i32
    %c0_i32_1 = arith.constant 0 : i32
    %c0_i32_2 = arith.constant 0 : i32
    return %c0_i32, %c0_i32_0, %c0_i32_1 : i32, i32, i32
  }
  func.func @transform_6(%arg0: i32, %arg1: i32) -> (i32, i32, i32) {
    %c0_i32 = arith.constant 0 : i32
    %c0_i32_0 = arith.constant 0 : i32
    %c0_i32_1 = arith.constant 0 : i32
    %c0_i32_2 = arith.constant 0 : i32
    return %c0_i32, %c0_i32_0, %c0_i32_1 : i32, i32, i32
  }
  func.func @transform_7(%arg0: i32, %arg1: i32) -> (i32, i32, i32) {
    %c0_i32 = arith.constant 0 : i32
    %c0_i32_0 = arith.constant 0 : i32
    %c0_i32_1 = arith.constant 0 : i32
    %c0_i32_2 = arith.constant 0 : i32
    return %c0_i32, %c0_i32_0, %c0_i32_1 : i32, i32, i32
  }
  func.func @transform_8(%arg0: i32, %arg1: i32) -> (i32, i32) {
    %c0_i32 = arith.constant 0 : i32
    %c0_i32_0 = arith.constant 0 : i32
    %c0_i32_1 = arith.constant 0 : i32
    return %c0_i32, %c0_i32_0 : i32, i32
  }
  func.func @transform_9(%arg0: i32, %arg1: i32) -> (i32, i32) {
    %c0_i32 = arith.constant 0 : i32
    %c0_i32_0 = arith.constant 0 : i32
    %c0_i32_1 = arith.constant 0 : i32
    return %c0_i32, %c0_i32_0 : i32, i32
  }
  func.func @transform_10(%arg0: i32, %arg1: i32) -> (i32, i32) {
    %c0_i32 = arith.constant 0 : i32
    %c0_i32_0 = arith.constant 0 : i32
    %c0_i32_1 = arith.constant 0 : i32
    return %c0_i32, %c0_i32_0 : i32, i32
  }
  func.func @transform_11(%arg0: i32, %arg1: i32) -> (i32, i32) {
    %c0_i32 = arith.constant 0 : i32
    %c0_i32_0 = arith.constant 0 : i32
    %c0_i32_1 = arith.constant 0 : i32
    return %c0_i32, %c0_i32_0 : i32, i32
  }
  func.func @transform_12(%arg0: i32, %arg1: i32) -> (i32, i32, i32) {
    %c0_i32 = arith.constant 0 : i32
    %c0_i32_0 = arith.constant 0 : i32
    %c0_i32_1 = arith.constant 0 : i32
    %c0_i32_2 = arith.constant 0 : i32
    return %c0_i32, %c0_i32_0, %c0_i32_1 : i32, i32, i32
  }
  func.func @transform_13(%arg0: i32, %arg1: i32) -> (i32, i32, i32) {
    %c0_i32 = arith.constant 0 : i32
    %c0_i32_0 = arith.constant 0 : i32
    %c0_i32_1 = arith.constant 0 : i32
    %c0_i32_2 = arith.constant 0 : i32
    return %c0_i32, %c0_i32_0, %c0_i32_1 : i32, i32, i32
  }
  func.func @transform_14(%arg0: i32, %arg1: i32) -> (i32, i32, i32) {
    %c0_i32 = arith.constant 0 : i32
    %c0_i32_0 = arith.constant 0 : i32
    %c0_i32_1 = arith.constant 0 : i32
    %c0_i32_2 = arith.constant 0 : i32
    return %c0_i32, %c0_i32_0, %c0_i32_1 : i32, i32, i32
  }
  func.func @transform_15(%arg0: i32, %arg1: i32) -> (i32, i32) {
    %c0_i32 = arith.constant 0 : i32
    %c0_i32_0 = arith.constant 0 : i32
    %c0_i32_1 = arith.constant 0 : i32
    return %c0_i32, %c0_i32_0 : i32, i32
  }
  func.func @transform_16(%arg0: i32, %arg1: i32) -> (i32, i32) {
    %c0_i32 = arith.constant 0 : i32
    %c0_i32_0 = arith.constant 0 : i32
    %c0_i32_1 = arith.constant 0 : i32
    return %c0_i32, %c0_i32_0 : i32, i32
  }
  func.func @transform_17(%arg0: i32, %arg1: i32) -> (i32, i32) {
    %c0_i32 = arith.constant 0 : i32
    %c0_i32_0 = arith.constant 0 : i32
    %c0_i32_1 = arith.constant 0 : i32
    return %c0_i32, %c0_i32_0 : i32, i32
  }
  func.func @transform_18(%arg0: i32, %arg1: i32) -> (i32, i32, i32) {
    %c0_i32 = arith.constant 0 : i32
    %c0_i32_0 = arith.constant 0 : i32
    return %arg0, %arg1, %c0_i32 : i32, i32, i32
  }
}

module attributes {stable_mosaic.version = 11 : i64} {
  func.func @_encoder_block_kernel(%arg0: i32, %arg1: i32, %arg2: memref<1x8x32xf32, #tpu.memory_space<vmem>>, %arg3: memref<1x8x32xf32, #tpu.memory_space<vmem>>, %arg4: memref<4x32x8xbf16, #tpu.memory_space<vmem>>, %arg5: memref<4x32x8xbf16, #tpu.memory_space<vmem>>, %arg6: memref<4x32x8xbf16, #tpu.memory_space<vmem>>, %arg7: memref<4x1x8xf32, #tpu.memory_space<vmem>>, %arg8: memref<4x1x8xf32, #tpu.memory_space<vmem>>, %arg9: memref<4x1x8xf32, #tpu.memory_space<vmem>>, %arg10: memref<32x32xbf16, #tpu.memory_space<vmem>>, %arg11: memref<1x32xf32, #tpu.memory_space<vmem>>, %arg12: memref<1x32xf32, #tpu.memory_space<vmem>>, %arg13: memref<1x32xf32, #tpu.memory_space<vmem>>, %arg14: memref<1x32x64xbf16, #tpu.memory_space<vmem>>, %arg15: memref<1x1x64xf32, #tpu.memory_space<vmem>>, %arg16: memref<1x64x32xbf16, #tpu.memory_space<vmem>>, %arg17: memref<1x32xf32, #tpu.memory_space<vmem>>, %arg18: memref<1x32xf32, #tpu.memory_space<vmem>>, %arg19: memref<1x32xf32, #tpu.memory_space<vmem>>, %arg20: memref<1x8x32xf32, #tpu.memory_space<vmem>>, %arg21: memref<4x8x8xbf16, #tpu.memory_space<vmem>>, %arg22: memref<4x8x8xbf16, #tpu.memory_space<vmem>>, %arg23: memref<8x32xbf16, #tpu.memory_space<vmem>>) attributes {dimension_semantics = [#tpu.dimension_semantics<parallel>, #tpu.dimension_semantics<arbitrary>], iteration_bounds = array<i64: 2, 1>, scalar_prefetch = 0 : i64, scratch_operands = 3 : i64, tpu.core_type = #tpu.core_type<tc>, window_params = [{transform_indices = @transform_0, window_bounds = array<i64: 1, 8, 32>}, {transform_indices = @transform_1, window_bounds = array<i64: 1, 8, 32>}, {pipeline_mode = #tpu.pipeline_mode<synchronous>, transform_indices = @transform_2, window_bounds = array<i64: 4, 32, 8>}, {pipeline_mode = #tpu.pipeline_mode<synchronous>, transform_indices = @transform_3, window_bounds = array<i64: 4, 32, 8>}, {pipeline_mode = #tpu.pipeline_mode<synchronous>, transform_indices = @transform_4, window_bounds = array<i64: 4, 32, 8>}, {pipeline_mode = #tpu.pipeline_mode<synchronous>, transform_indices = @transform_5, window_bounds = array<i64: 4, 1, 8>}, {pipeline_mode = #tpu.pipeline_mode<synchronous>, transform_indices = @transform_6, window_bounds = array<i64: 4, 1, 8>}, {pipeline_mode = #tpu.pipeline_mode<synchronous>, transform_indices = @transform_7, window_bounds = array<i64: 4, 1, 8>}, {pipeline_mode = #tpu.pipeline_mode<synchronous>, transform_indices = @transform_8, window_bounds = array<i64: 32, 32>}, {pipeline_mode = #tpu.pipeline_mode<synchronous>, transform_indices = @transform_9, window_bounds = array<i64: 1, 32>}, {pipeline_mode = #tpu.pipeline_mode<synchronous>, transform_indices = @transform_10, window_bounds = array<i64: 1, 32>}, {pipeline_mode = #tpu.pipeline_mode<synchronous>, transform_indices = @transform_11, window_bounds = array<i64: 1, 32>}, {pipeline_mode = #tpu.pipeline_mode<synchronous>, transform_indices = @transform_12, window_bounds = array<i64: 1, 32, 64>}, {pipeline_mode = #tpu.pipeline_mode<synchronous>, transform_indices = @transform_13, window_bounds = array<i64: 1, 1, 64>}, {pipeline_mode = #tpu.pipeline_mode<synchronous>, transform_indices = @transform_14, window_bounds = array<i64: 1, 64, 32>}, {pipeline_mode = #tpu.pipeline_mode<synchronous>, transform_indices = @transform_15, window_bounds = array<i64: 1, 32>}, {pipeline_mode = #tpu.pipeline_mode<synchronous>, transform_indices = @transform_16, window_bounds = array<i64: 1, 32>}, {pipeline_mode = #tpu.pipeline_mode<synchronous>, transform_indices = @transform_17, window_bounds = array<i64: 1, 32>}, {transform_indices = @transform_18, window_bounds = array<i64: 1, 8, 32>}]} {
    %c0_i32 = arith.constant 0 : i32
    %0 = arith.cmpi eq, %arg1, %c0_i32 : i32
    %1 = arith.extui %0 : i1 to i32
    %c0_i32_0 = arith.constant 0 : i32
    %2 = arith.cmpi ne, %1, %c0_i32_0 : i32
    scf.if %2 {
      %c0_113 = arith.constant 0 : index
      %c0_114 = arith.constant 0 : index
      %c0_115 = arith.constant 0 : index
      %187 = vector.load %arg2[%c0_113, %c0_114, %c0_115] : memref<1x8x32xf32, #tpu.memory_space<vmem>>, vector<1x8x32xf32>
      %188 = vector.shape_cast %187 : vector<1x8x32xf32> to vector<8x32xf32>
      %189 = arith.truncf %188 : vector<8x32xf32> to vector<8x32xbf16>
      %c0_i32_116 = arith.constant 0 : i32
      %c4_i32 = arith.constant 4 : i32
      %190 = arith.addi %c0_i32_116, %c4_i32 : i32
      %c1_i32_117 = arith.constant 1 : i32
      scf.for %arg24 = %c0_i32_116 to %190 step %c1_i32_117  : i32 {
        %191 = arith.index_cast %arg24 : i32 to index
        %c0_119 = arith.constant 0 : index
        %c0_120 = arith.constant 0 : index
        %192 = vector.load %arg5[%191, %c0_119, %c0_120] : memref<4x32x8xbf16, #tpu.memory_space<vmem>>, vector<1x32x8xbf16>
        %193 = vector.shape_cast %192 : vector<1x32x8xbf16> to vector<32x8xbf16>
        %cst_121 = arith.constant dense<0.000000e+00> : vector<8x8xf32>
        %194 = tpu.matmul %189, %193, %cst_121 {dimension_numbers = #tpu.dot_dimension_numbers<[1], [0], [0], [1], [0, 0, 1, 1], [], []>} : vector<8x32xbf16>, vector<32x8xbf16>, vector<8x8xf32> -> vector<8x8xf32>
        %195 = arith.index_cast %arg24 : i32 to index
        %c0_122 = arith.constant 0 : index
        %c0_123 = arith.constant 0 : index
        %196 = vector.load %arg8[%195, %c0_122, %c0_123] : memref<4x1x8xf32, #tpu.memory_space<vmem>>, vector<1x1x8xf32>
        %197 = vector.shape_cast %196 : vector<1x1x8xf32> to vector<1x8xf32>
        %198 = vector.broadcast %197 : vector<1x8xf32> to vector<8x8xf32>
        %199 = arith.addf %194, %198 : vector<8x8xf32>
        %200 = arith.truncf %199 : vector<8x8xf32> to vector<8x8xbf16>
        %201 = arith.index_cast %arg24 : i32 to index
        %c0_124 = arith.constant 0 : index
        %c0_125 = arith.constant 0 : index
        %202 = vector.load %arg21[%201, %c0_124, %c0_125] : memref<4x8x8xbf16, #tpu.memory_space<vmem>>, vector<1x8x8xbf16>
        %203 = vector.shape_cast %202 : vector<1x8x8xbf16> to vector<8x8xbf16>
        %204 = vector.shape_cast %200 : vector<8x8xbf16> to vector<1x8x8xbf16>
        tpu.vector_store %arg21[%201, %c0_124, %c0_125], %204 {strides = array<i32>} : memref<4x8x8xbf16, #tpu.memory_space<vmem>>, vector<1x8x8xbf16>,
        %205 = arith.index_cast %arg24 : i32 to index
        %c0_126 = arith.constant 0 : index
        %c0_127 = arith.constant 0 : index
        %206 = vector.load %arg6[%205, %c0_126, %c0_127] : memref<4x32x8xbf16, #tpu.memory_space<vmem>>, vector<1x32x8xbf16>
        %207 = vector.shape_cast %206 : vector<1x32x8xbf16> to vector<32x8xbf16>
        %cst_128 = arith.constant dense<0.000000e+00> : vector<8x8xf32>
        %208 = tpu.matmul %189, %207, %cst_128 {dimension_numbers = #tpu.dot_dimension_numbers<[1], [0], [0], [1], [0, 0, 1, 1], [], []>} : vector<8x32xbf16>, vector<32x8xbf16>, vector<8x8xf32> -> vector<8x8xf32>
        %209 = arith.index_cast %arg24 : i32 to index
        %c0_129 = arith.constant 0 : index
        %c0_130 = arith.constant 0 : index
        %210 = vector.load %arg9[%209, %c0_129, %c0_130] : memref<4x1x8xf32, #tpu.memory_space<vmem>>, vector<1x1x8xf32>
        %211 = vector.shape_cast %210 : vector<1x1x8xf32> to vector<1x8xf32>
        %212 = vector.broadcast %211 : vector<1x8xf32> to vector<8x8xf32>
        %213 = arith.addf %208, %212 : vector<8x8xf32>
        %214 = arith.truncf %213 : vector<8x8xf32> to vector<8x8xbf16>
        %215 = arith.index_cast %arg24 : i32 to index
        %c0_131 = arith.constant 0 : index
        %c0_132 = arith.constant 0 : index
        %216 = vector.load %arg22[%215, %c0_131, %c0_132] : memref<4x8x8xbf16, #tpu.memory_space<vmem>>, vector<1x8x8xbf16>
        %217 = vector.shape_cast %216 : vector<1x8x8xbf16> to vector<8x8xbf16>
        %218 = vector.shape_cast %214 : vector<8x8xbf16> to vector<1x8x8xbf16>
        tpu.vector_store %arg22[%215, %c0_131, %c0_132], %218 {strides = array<i32>} : memref<4x8x8xbf16, #tpu.memory_space<vmem>>, vector<1x8x8xbf16>,
      }
      %c4_i32_118 = arith.constant 4 : i32
    } else {
    }
    %c0 = arith.constant 0 : index
    %c0_1 = arith.constant 0 : index
    %c0_2 = arith.constant 0 : index
    %3 = vector.load %arg3[%c0, %c0_1, %c0_2] : memref<1x8x32xf32, #tpu.memory_space<vmem>>, vector<1x8x32xf32>
    %4 = vector.shape_cast %3 : vector<1x8x32xf32> to vector<8x32xf32>
    %5 = arith.truncf %4 : vector<8x32xf32> to vector<8x32xbf16>
    %c0_3 = arith.constant 0 : index
    %c0_4 = arith.constant 0 : index
    %c0_5 = arith.constant 0 : index
    %6 = vector.load %arg4[%c0_3, %c0_4, %c0_5] : memref<4x32x8xbf16, #tpu.memory_space<vmem>>, vector<1x32x8xbf16>
    %7 = vector.shape_cast %6 : vector<1x32x8xbf16> to vector<32x8xbf16>
    %cst = arith.constant dense<0.000000e+00> : vector<8x8xf32>
    %8 = tpu.matmul %5, %7, %cst {dimension_numbers = #tpu.dot_dimension_numbers<[1], [0], [0], [1], [0, 0, 1, 1], [], []>} : vector<8x32xbf16>, vector<32x8xbf16>, vector<8x8xf32> -> vector<8x8xf32>
    %c0_6 = arith.constant 0 : index
    %c0_7 = arith.constant 0 : index
    %c0_8 = arith.constant 0 : index
    %9 = vector.load %arg7[%c0_6, %c0_7, %c0_8] : memref<4x1x8xf32, #tpu.memory_space<vmem>>, vector<1x1x8xf32>
    %10 = vector.shape_cast %9 : vector<1x1x8xf32> to vector<1x8xf32>
    %11 = vector.broadcast %10 : vector<1x8xf32> to vector<8x8xf32>
    %12 = arith.addf %8, %11 : vector<8x8xf32>
    %cst_9 = arith.constant 0.353553385 : f32
    %13 = vector.broadcast %cst_9 : f32 to vector<8x8xf32>
    %14 = arith.mulf %12, %13 : vector<8x8xf32>
    %15 = arith.truncf %14 : vector<8x8xf32> to vector<8x8xbf16>
    %c0_10 = arith.constant 0 : index
    %c0_11 = arith.constant 0 : index
    %c0_12 = arith.constant 0 : index
    %16 = vector.load %arg21[%c0_10, %c0_11, %c0_12] : memref<4x8x8xbf16, #tpu.memory_space<vmem>>, vector<1x8x8xbf16>
    %17 = vector.shape_cast %16 : vector<1x8x8xbf16> to vector<8x8xbf16>
    %cst_13 = arith.constant dense<0.000000e+00> : vector<8x8xf32>
    %18 = tpu.matmul %15, %17, %cst_13 {dimension_numbers = #tpu.dot_dimension_numbers<[1], [1], [0], [0], [0, 0, 1, 0], [], []>} : vector<8x8xbf16>, vector<8x8xbf16>, vector<8x8xf32> -> vector<8x8xf32>
    %cst_14 = arith.constant dense<0xFF800000> : vector<8xf32>
    %19 = vector.multi_reduction <maximumf>, %18, %cst_14 [1] : vector<8x8xf32> to vector<8xf32>
    %20 = vector.shape_cast %19 : vector<8xf32> to vector<8x1xf32>
    %21 = vector.broadcast %20 : vector<8x1xf32> to vector<8x8xf32>
    %22 = arith.subf %18, %21 : vector<8x8xf32>
    %23 = math.exp %22 : vector<8x8xf32>
    %cst_15 = arith.constant dense<0.000000e+00> : vector<8xf32>
    %24 = vector.multi_reduction <add>, %23, %cst_15 [1] : vector<8x8xf32> to vector<8xf32>
    %25 = vector.shape_cast %24 : vector<8xf32> to vector<8x1xf32>
    %26 = tpu.reciprocal %25 {approx = true} : vector<8x1xf32> -> vector<8x1xf32>
    %27 = vector.broadcast %26 : vector<8x1xf32> to vector<8x8xf32>
    %28 = arith.mulf %23, %27 : vector<8x8xf32>
    %29 = arith.truncf %28 : vector<8x8xf32> to vector<8x8xbf16>
    %c0_16 = arith.constant 0 : index
    %c0_17 = arith.constant 0 : index
    %c0_18 = arith.constant 0 : index
    %30 = vector.load %arg22[%c0_16, %c0_17, %c0_18] : memref<4x8x8xbf16, #tpu.memory_space<vmem>>, vector<1x8x8xbf16>
    %31 = vector.shape_cast %30 : vector<1x8x8xbf16> to vector<8x8xbf16>
    %cst_19 = arith.constant dense<0.000000e+00> : vector<8x8xf32>
    %32 = tpu.matmul %29, %31, %cst_19 {dimension_numbers = #tpu.dot_dimension_numbers<[1], [0], [0], [1], [0, 0, 1, 1], [], []>} : vector<8x8xbf16>, vector<8x8xbf16>, vector<8x8xf32> -> vector<8x8xf32>
    %33 = arith.truncf %32 : vector<8x8xf32> to vector<8x8xbf16>
    %c0_20 = arith.constant 0 : index
    %c0_21 = arith.constant 0 : index
    %34 = vector.load %arg23[%c0_20, %c0_21] : memref<8x32xbf16, #tpu.memory_space<vmem>>, vector<8x8xbf16>
    tpu.vector_store %arg23[%c0_20, %c0_21], %33 {strides = array<i32>} : memref<8x32xbf16, #tpu.memory_space<vmem>>, vector<8x8xbf16>,
    %c1 = arith.constant 1 : index
    %c0_22 = arith.constant 0 : index
    %c0_23 = arith.constant 0 : index
    %35 = vector.load %arg4[%c1, %c0_22, %c0_23] : memref<4x32x8xbf16, #tpu.memory_space<vmem>>, vector<1x32x8xbf16>
    %36 = vector.shape_cast %35 : vector<1x32x8xbf16> to vector<32x8xbf16>
    %cst_24 = arith.constant dense<0.000000e+00> : vector<8x8xf32>
    %37 = tpu.matmul %5, %36, %cst_24 {dimension_numbers = #tpu.dot_dimension_numbers<[1], [0], [0], [1], [0, 0, 1, 1], [], []>} : vector<8x32xbf16>, vector<32x8xbf16>, vector<8x8xf32> -> vector<8x8xf32>
    %c1_25 = arith.constant 1 : index
    %c0_26 = arith.constant 0 : index
    %c0_27 = arith.constant 0 : index
    %38 = vector.load %arg7[%c1_25, %c0_26, %c0_27] : memref<4x1x8xf32, #tpu.memory_space<vmem>>, vector<1x1x8xf32>
    %39 = vector.shape_cast %38 : vector<1x1x8xf32> to vector<1x8xf32>
    %40 = vector.broadcast %39 : vector<1x8xf32> to vector<8x8xf32>
    %41 = arith.addf %37, %40 : vector<8x8xf32>
    %cst_28 = arith.constant 0.353553385 : f32
    %42 = vector.broadcast %cst_28 : f32 to vector<8x8xf32>
    %43 = arith.mulf %41, %42 : vector<8x8xf32>
    %44 = arith.truncf %43 : vector<8x8xf32> to vector<8x8xbf16>
    %c1_29 = arith.constant 1 : index
    %c0_30 = arith.constant 0 : index
    %c0_31 = arith.constant 0 : index
    %45 = vector.load %arg21[%c1_29, %c0_30, %c0_31] : memref<4x8x8xbf16, #tpu.memory_space<vmem>>, vector<1x8x8xbf16>
    %46 = vector.shape_cast %45 : vector<1x8x8xbf16> to vector<8x8xbf16>
    %cst_32 = arith.constant dense<0.000000e+00> : vector<8x8xf32>
    %47 = tpu.matmul %44, %46, %cst_32 {dimension_numbers = #tpu.dot_dimension_numbers<[1], [1], [0], [0], [0, 0, 1, 0], [], []>} : vector<8x8xbf16>, vector<8x8xbf16>, vector<8x8xf32> -> vector<8x8xf32>
    %cst_33 = arith.constant dense<0xFF800000> : vector<8xf32>
    %48 = vector.multi_reduction <maximumf>, %47, %cst_33 [1] : vector<8x8xf32> to vector<8xf32>
    %49 = vector.shape_cast %48 : vector<8xf32> to vector<8x1xf32>
    %50 = vector.broadcast %49 : vector<8x1xf32> to vector<8x8xf32>
    %51 = arith.subf %47, %50 : vector<8x8xf32>
    %52 = math.exp %51 : vector<8x8xf32>
    %cst_34 = arith.constant dense<0.000000e+00> : vector<8xf32>
    %53 = vector.multi_reduction <add>, %52, %cst_34 [1] : vector<8x8xf32> to vector<8xf32>
    %54 = vector.shape_cast %53 : vector<8xf32> to vector<8x1xf32>
    %55 = tpu.reciprocal %54 {approx = true} : vector<8x1xf32> -> vector<8x1xf32>
    %56 = vector.broadcast %55 : vector<8x1xf32> to vector<8x8xf32>
    %57 = arith.mulf %52, %56 : vector<8x8xf32>
    %58 = arith.truncf %57 : vector<8x8xf32> to vector<8x8xbf16>
    %c1_35 = arith.constant 1 : index
    %c0_36 = arith.constant 0 : index
    %c0_37 = arith.constant 0 : index
    %59 = vector.load %arg22[%c1_35, %c0_36, %c0_37] : memref<4x8x8xbf16, #tpu.memory_space<vmem>>, vector<1x8x8xbf16>
    %60 = vector.shape_cast %59 : vector<1x8x8xbf16> to vector<8x8xbf16>
    %cst_38 = arith.constant dense<0.000000e+00> : vector<8x8xf32>
    %61 = tpu.matmul %58, %60, %cst_38 {dimension_numbers = #tpu.dot_dimension_numbers<[1], [0], [0], [1], [0, 0, 1, 1], [], []>} : vector<8x8xbf16>, vector<8x8xbf16>, vector<8x8xf32> -> vector<8x8xf32>
    %62 = arith.truncf %61 : vector<8x8xf32> to vector<8x8xbf16>
    %c0_39 = arith.constant 0 : index
    %c8 = arith.constant 8 : index
    %63 = vector.load %arg23[%c0_39, %c8] : memref<8x32xbf16, #tpu.memory_space<vmem>>, vector<8x8xbf16>
    tpu.vector_store %arg23[%c0_39, %c8], %62 {strides = array<i32>} : memref<8x32xbf16, #tpu.memory_space<vmem>>, vector<8x8xbf16>,
    %c2 = arith.constant 2 : index
    %c0_40 = arith.constant 0 : index
    %c0_41 = arith.constant 0 : index
    %64 = vector.load %arg4[%c2, %c0_40, %c0_41] : memref<4x32x8xbf16, #tpu.memory_space<vmem>>, vector<1x32x8xbf16>
    %65 = vector.shape_cast %64 : vector<1x32x8xbf16> to vector<32x8xbf16>
    %cst_42 = arith.constant dense<0.000000e+00> : vector<8x8xf32>
    %66 = tpu.matmul %5, %65, %cst_42 {dimension_numbers = #tpu.dot_dimension_numbers<[1], [0], [0], [1], [0, 0, 1, 1], [], []>} : vector<8x32xbf16>, vector<32x8xbf16>, vector<8x8xf32> -> vector<8x8xf32>
    %c2_43 = arith.constant 2 : index
    %c0_44 = arith.constant 0 : index
    %c0_45 = arith.constant 0 : index
    %67 = vector.load %arg7[%c2_43, %c0_44, %c0_45] : memref<4x1x8xf32, #tpu.memory_space<vmem>>, vector<1x1x8xf32>
    %68 = vector.shape_cast %67 : vector<1x1x8xf32> to vector<1x8xf32>
    %69 = vector.broadcast %68 : vector<1x8xf32> to vector<8x8xf32>
    %70 = arith.addf %66, %69 : vector<8x8xf32>
    %cst_46 = arith.constant 0.353553385 : f32
    %71 = vector.broadcast %cst_46 : f32 to vector<8x8xf32>
    %72 = arith.mulf %70, %71 : vector<8x8xf32>
    %73 = arith.truncf %72 : vector<8x8xf32> to vector<8x8xbf16>
    %c2_47 = arith.constant 2 : index
    %c0_48 = arith.constant 0 : index
    %c0_49 = arith.constant 0 : index
    %74 = vector.load %arg21[%c2_47, %c0_48, %c0_49] : memref<4x8x8xbf16, #tpu.memory_space<vmem>>, vector<1x8x8xbf16>
    %75 = vector.shape_cast %74 : vector<1x8x8xbf16> to vector<8x8xbf16>
    %cst_50 = arith.constant dense<0.000000e+00> : vector<8x8xf32>
    %76 = tpu.matmul %73, %75, %cst_50 {dimension_numbers = #tpu.dot_dimension_numbers<[1], [1], [0], [0], [0, 0, 1, 0], [], []>} : vector<8x8xbf16>, vector<8x8xbf16>, vector<8x8xf32> -> vector<8x8xf32>
    %cst_51 = arith.constant dense<0xFF800000> : vector<8xf32>
    %77 = vector.multi_reduction <maximumf>, %76, %cst_51 [1] : vector<8x8xf32> to vector<8xf32>
    %78 = vector.shape_cast %77 : vector<8xf32> to vector<8x1xf32>
    %79 = vector.broadcast %78 : vector<8x1xf32> to vector<8x8xf32>
    %80 = arith.subf %76, %79 : vector<8x8xf32>
    %81 = math.exp %80 : vector<8x8xf32>
    %cst_52 = arith.constant dense<0.000000e+00> : vector<8xf32>
    %82 = vector.multi_reduction <add>, %81, %cst_52 [1] : vector<8x8xf32> to vector<8xf32>
    %83 = vector.shape_cast %82 : vector<8xf32> to vector<8x1xf32>
    %84 = tpu.reciprocal %83 {approx = true} : vector<8x1xf32> -> vector<8x1xf32>
    %85 = vector.broadcast %84 : vector<8x1xf32> to vector<8x8xf32>
    %86 = arith.mulf %81, %85 : vector<8x8xf32>
    %87 = arith.truncf %86 : vector<8x8xf32> to vector<8x8xbf16>
    %c2_53 = arith.constant 2 : index
    %c0_54 = arith.constant 0 : index
    %c0_55 = arith.constant 0 : index
    %88 = vector.load %arg22[%c2_53, %c0_54, %c0_55] : memref<4x8x8xbf16, #tpu.memory_space<vmem>>, vector<1x8x8xbf16>
    %89 = vector.shape_cast %88 : vector<1x8x8xbf16> to vector<8x8xbf16>
    %cst_56 = arith.constant dense<0.000000e+00> : vector<8x8xf32>
    %90 = tpu.matmul %87, %89, %cst_56 {dimension_numbers = #tpu.dot_dimension_numbers<[1], [0], [0], [1], [0, 0, 1, 1], [], []>} : vector<8x8xbf16>, vector<8x8xbf16>, vector<8x8xf32> -> vector<8x8xf32>
    %91 = arith.truncf %90 : vector<8x8xf32> to vector<8x8xbf16>
    %c0_57 = arith.constant 0 : index
    %c16 = arith.constant 16 : index
    %92 = vector.load %arg23[%c0_57, %c16] : memref<8x32xbf16, #tpu.memory_space<vmem>>, vector<8x8xbf16>
    tpu.vector_store %arg23[%c0_57, %c16], %91 {strides = array<i32>} : memref<8x32xbf16, #tpu.memory_space<vmem>>, vector<8x8xbf16>,
    %c3 = arith.constant 3 : index
    %c0_58 = arith.constant 0 : index
    %c0_59 = arith.constant 0 : index
    %93 = vector.load %arg4[%c3, %c0_58, %c0_59] : memref<4x32x8xbf16, #tpu.memory_space<vmem>>, vector<1x32x8xbf16>
    %94 = vector.shape_cast %93 : vector<1x32x8xbf16> to vector<32x8xbf16>
    %cst_60 = arith.constant dense<0.000000e+00> : vector<8x8xf32>
    %95 = tpu.matmul %5, %94, %cst_60 {dimension_numbers = #tpu.dot_dimension_numbers<[1], [0], [0], [1], [0, 0, 1, 1], [], []>} : vector<8x32xbf16>, vector<32x8xbf16>, vector<8x8xf32> -> vector<8x8xf32>
    %c3_61 = arith.constant 3 : index
    %c0_62 = arith.constant 0 : index
    %c0_63 = arith.constant 0 : index
    %96 = vector.load %arg7[%c3_61, %c0_62, %c0_63] : memref<4x1x8xf32, #tpu.memory_space<vmem>>, vector<1x1x8xf32>
    %97 = vector.shape_cast %96 : vector<1x1x8xf32> to vector<1x8xf32>
    %98 = vector.broadcast %97 : vector<1x8xf32> to vector<8x8xf32>
    %99 = arith.addf %95, %98 : vector<8x8xf32>
    %cst_64 = arith.constant 0.353553385 : f32
    %100 = vector.broadcast %cst_64 : f32 to vector<8x8xf32>
    %101 = arith.mulf %99, %100 : vector<8x8xf32>
    %102 = arith.truncf %101 : vector<8x8xf32> to vector<8x8xbf16>
    %c3_65 = arith.constant 3 : index
    %c0_66 = arith.constant 0 : index
    %c0_67 = arith.constant 0 : index
    %103 = vector.load %arg21[%c3_65, %c0_66, %c0_67] : memref<4x8x8xbf16, #tpu.memory_space<vmem>>, vector<1x8x8xbf16>
    %104 = vector.shape_cast %103 : vector<1x8x8xbf16> to vector<8x8xbf16>
    %cst_68 = arith.constant dense<0.000000e+00> : vector<8x8xf32>
    %105 = tpu.matmul %102, %104, %cst_68 {dimension_numbers = #tpu.dot_dimension_numbers<[1], [1], [0], [0], [0, 0, 1, 0], [], []>} : vector<8x8xbf16>, vector<8x8xbf16>, vector<8x8xf32> -> vector<8x8xf32>
    %cst_69 = arith.constant dense<0xFF800000> : vector<8xf32>
    %106 = vector.multi_reduction <maximumf>, %105, %cst_69 [1] : vector<8x8xf32> to vector<8xf32>
    %107 = vector.shape_cast %106 : vector<8xf32> to vector<8x1xf32>
    %108 = vector.broadcast %107 : vector<8x1xf32> to vector<8x8xf32>
    %109 = arith.subf %105, %108 : vector<8x8xf32>
    %110 = math.exp %109 : vector<8x8xf32>
    %cst_70 = arith.constant dense<0.000000e+00> : vector<8xf32>
    %111 = vector.multi_reduction <add>, %110, %cst_70 [1] : vector<8x8xf32> to vector<8xf32>
    %112 = vector.shape_cast %111 : vector<8xf32> to vector<8x1xf32>
    %113 = tpu.reciprocal %112 {approx = true} : vector<8x1xf32> -> vector<8x1xf32>
    %114 = vector.broadcast %113 : vector<8x1xf32> to vector<8x8xf32>
    %115 = arith.mulf %110, %114 : vector<8x8xf32>
    %116 = arith.truncf %115 : vector<8x8xf32> to vector<8x8xbf16>
    %c3_71 = arith.constant 3 : index
    %c0_72 = arith.constant 0 : index
    %c0_73 = arith.constant 0 : index
    %117 = vector.load %arg22[%c3_71, %c0_72, %c0_73] : memref<4x8x8xbf16, #tpu.memory_space<vmem>>, vector<1x8x8xbf16>
    %118 = vector.shape_cast %117 : vector<1x8x8xbf16> to vector<8x8xbf16>
    %cst_74 = arith.constant dense<0.000000e+00> : vector<8x8xf32>
    %119 = tpu.matmul %116, %118, %cst_74 {dimension_numbers = #tpu.dot_dimension_numbers<[1], [0], [0], [1], [0, 0, 1, 1], [], []>} : vector<8x8xbf16>, vector<8x8xbf16>, vector<8x8xf32> -> vector<8x8xf32>
    %120 = arith.truncf %119 : vector<8x8xf32> to vector<8x8xbf16>
    %c0_75 = arith.constant 0 : index
    %c24 = arith.constant 24 : index
    %121 = vector.load %arg23[%c0_75, %c24] : memref<8x32xbf16, #tpu.memory_space<vmem>>, vector<8x8xbf16>
    tpu.vector_store %arg23[%c0_75, %c24], %120 {strides = array<i32>} : memref<8x32xbf16, #tpu.memory_space<vmem>>, vector<8x8xbf16>,
    %c0_76 = arith.constant 0 : index
    %c0_77 = arith.constant 0 : index
    %122 = vector.load %arg23[%c0_76, %c0_77] : memref<8x32xbf16, #tpu.memory_space<vmem>>, vector<8x32xbf16>
    %c0_78 = arith.constant 0 : index
    %c0_79 = arith.constant 0 : index
    %123 = vector.load %arg10[%c0_78, %c0_79] : memref<32x32xbf16, #tpu.memory_space<vmem>>, vector<32x32xbf16>
    %cst_80 = arith.constant dense<0.000000e+00> : vector<8x32xf32>
    %124 = tpu.matmul %122, %123, %cst_80 {dimension_numbers = #tpu.dot_dimension_numbers<[1], [0], [0], [1], [0, 0, 1, 1], [], []>} : vector<8x32xbf16>, vector<32x32xbf16>, vector<8x32xf32> -> vector<8x32xf32>
    %c0_81 = arith.constant 0 : index
    %c0_82 = arith.constant 0 : index
    %125 = vector.load %arg11[%c0_81, %c0_82] : memref<1x32xf32, #tpu.memory_space<vmem>>, vector<1x32xf32>
    %126 = vector.broadcast %125 : vector<1x32xf32> to vector<8x32xf32>
    %127 = arith.addf %124, %126 : vector<8x32xf32>
    %128 = arith.addf %4, %127 : vector<8x32xf32>
    %129 = arith.mulf %128, %128 : vector<8x32xf32>
    %cst_83 = arith.constant dense<0.000000e+00> : vector<8xf32>
    %130 = vector.multi_reduction <add>, %129, %cst_83 [1] : vector<8x32xf32> to vector<8xf32>
    %131 = vector.shape_cast %130 : vector<8xf32> to vector<8x1xf32>
    %cst_84 = arith.constant 3.200000e+01 : f32
    %132 = vector.broadcast %cst_84 : f32 to vector<8x1xf32>
    %133 = arith.divf %131, %132 : vector<8x1xf32>
    %cst_85 = arith.constant 9.99999974E-6 : f32
    %134 = vector.broadcast %cst_85 : f32 to vector<8x1xf32>
    %135 = arith.addf %133, %134 : vector<8x1xf32>
    %136 = math.rsqrt %135 : vector<8x1xf32>
    %137 = vector.broadcast %136 : vector<8x1xf32> to vector<8x32xf32>
    %138 = arith.mulf %128, %137 : vector<8x32xf32>
    %c0_86 = arith.constant 0 : index
    %c0_87 = arith.constant 0 : index
    %139 = vector.load %arg12[%c0_86, %c0_87] : memref<1x32xf32, #tpu.memory_space<vmem>>, vector<1x32xf32>
    %140 = vector.broadcast %139 : vector<1x32xf32> to vector<8x32xf32>
    %141 = arith.mulf %138, %140 : vector<8x32xf32>
    %c0_88 = arith.constant 0 : index
    %c0_89 = arith.constant 0 : index
    %142 = vector.load %arg13[%c0_88, %c0_89] : memref<1x32xf32, #tpu.memory_space<vmem>>, vector<1x32xf32>
    %143 = vector.broadcast %142 : vector<1x32xf32> to vector<8x32xf32>
    %144 = arith.addf %141, %143 : vector<8x32xf32>
    %145 = arith.truncf %144 : vector<8x32xf32> to vector<8x32xbf16>
    %cst_90 = arith.constant 0.000000e+00 : f32
    %146 = vector.broadcast %cst_90 : f32 to vector<8x32xf32>
    %c0_i32_91 = arith.constant 0 : i32
    %147 = arith.index_cast %c0_i32_91 : i32 to index
    %c0_92 = arith.constant 0 : index
    %c0_93 = arith.constant 0 : index
    %148 = vector.load %arg14[%147, %c0_92, %c0_93] : memref<1x32x64xbf16, #tpu.memory_space<vmem>>, vector<1x32x64xbf16>
    %149 = vector.shape_cast %148 : vector<1x32x64xbf16> to vector<32x64xbf16>
    %cst_94 = arith.constant dense<0.000000e+00> : vector<8x64xf32>
    %150 = tpu.matmul %145, %149, %cst_94 {dimension_numbers = #tpu.dot_dimension_numbers<[1], [0], [0], [1], [0, 0, 1, 1], [], []>} : vector<8x32xbf16>, vector<32x64xbf16>, vector<8x64xf32> -> vector<8x64xf32>
    %151 = arith.index_cast %c0_i32_91 : i32 to index
    %c0_95 = arith.constant 0 : index
    %c0_96 = arith.constant 0 : index
    %152 = vector.load %arg15[%151, %c0_95, %c0_96] : memref<1x1x64xf32, #tpu.memory_space<vmem>>, vector<1x1x64xf32>
    %153 = vector.shape_cast %152 : vector<1x1x64xf32> to vector<1x64xf32>
    %154 = vector.broadcast %153 : vector<1x64xf32> to vector<8x64xf32>
    %155 = arith.addf %150, %154 : vector<8x64xf32>
    %cst_97 = arith.constant 0.000000e+00 : f32
    %156 = vector.broadcast %cst_97 : f32 to vector<8x64xf32>
    %157 = arith.maximumf %155, %156 : vector<8x64xf32>
    %158 = arith.truncf %157 : vector<8x64xf32> to vector<8x64xbf16>
    %159 = arith.index_cast %c0_i32_91 : i32 to index
    %c0_98 = arith.constant 0 : index
    %c0_99 = arith.constant 0 : index
    %160 = vector.load %arg16[%159, %c0_98, %c0_99] : memref<1x64x32xbf16, #tpu.memory_space<vmem>>, vector<1x64x32xbf16>
    %161 = vector.shape_cast %160 : vector<1x64x32xbf16> to vector<64x32xbf16>
    %cst_100 = arith.constant dense<0.000000e+00> : vector<8x32xf32>
    %162 = tpu.matmul %158, %161, %cst_100 {dimension_numbers = #tpu.dot_dimension_numbers<[1], [0], [0], [1], [0, 0, 1, 1], [], []>} : vector<8x64xbf16>, vector<64x32xbf16>, vector<8x32xf32> -> vector<8x32xf32>
    %163 = arith.addf %146, %162 : vector<8x32xf32>
    %c1_i32 = arith.constant 1 : i32
    %c0_101 = arith.constant 0 : index
    %c0_102 = arith.constant 0 : index
    %164 = vector.load %arg17[%c0_101, %c0_102] : memref<1x32xf32, #tpu.memory_space<vmem>>, vector<1x32xf32>
    %165 = vector.broadcast %164 : vector<1x32xf32> to vector<8x32xf32>
    %166 = arith.addf %163, %165 : vector<8x32xf32>
    %167 = arith.addf %144, %166 : vector<8x32xf32>
    %168 = arith.mulf %167, %167 : vector<8x32xf32>
    %cst_103 = arith.constant dense<0.000000e+00> : vector<8xf32>
    %169 = vector.multi_reduction <add>, %168, %cst_103 [1] : vector<8x32xf32> to vector<8xf32>
    %170 = vector.shape_cast %169 : vector<8xf32> to vector<8x1xf32>
    %cst_104 = arith.constant 3.200000e+01 : f32
    %171 = vector.broadcast %cst_104 : f32 to vector<8x1xf32>
    %172 = arith.divf %170, %171 : vector<8x1xf32>
    %cst_105 = arith.constant 9.99999974E-6 : f32
    %173 = vector.broadcast %cst_105 : f32 to vector<8x1xf32>
    %174 = arith.addf %172, %173 : vector<8x1xf32>
    %175 = math.rsqrt %174 : vector<8x1xf32>
    %176 = vector.broadcast %175 : vector<8x1xf32> to vector<8x32xf32>
    %177 = arith.mulf %167, %176 : vector<8x32xf32>
    %c0_106 = arith.constant 0 : index
    %c0_107 = arith.constant 0 : index
    %178 = vector.load %arg18[%c0_106, %c0_107] : memref<1x32xf32, #tpu.memory_space<vmem>>, vector<1x32xf32>
    %179 = vector.broadcast %178 : vector<1x32xf32> to vector<8x32xf32>
    %180 = arith.mulf %177, %179 : vector<8x32xf32>
    %c0_108 = arith.constant 0 : index
    %c0_109 = arith.constant 0 : index
    %181 = vector.load %arg19[%c0_108, %c0_109] : memref<1x32xf32, #tpu.memory_space<vmem>>, vector<1x32xf32>
    %182 = vector.broadcast %181 : vector<1x32xf32> to vector<8x32xf32>
    %183 = arith.addf %180, %182 : vector<8x32xf32>
    %c0_110 = arith.constant 0 : index
    %c0_111 = arith.constant 0 : index
    %c0_112 = arith.constant 0 : index
    %184 = vector.load %arg20[%c0_110, %c0_111, %c0_112] : memref<1x8x32xf32, #tpu.memory_space<vmem>>, vector<1x8x32xf32>
    %185 = vector.shape_cast %184 : vector<1x8x32xf32> to vector<8x32xf32>
    %186 = vector.shape_cast %183 : vector<8x32xf32> to vector<1x8x32xf32>
    tpu.vector_store %arg20[%c0_110, %c0_111, %c0_112], %186 {strides = array<i32>} : memref<1x8x32xf32, #tpu.memory_space<vmem>>, vector<1x8x32xf32>,
    return
  }
  func.func @transform_0(%arg0: i32, %arg1: i32) -> (i32, i32, i32) {
    %c0_i32 = arith.constant 0 : i32
    %c0_i32_0 = arith.constant 0 : i32
    %c0_i32_1 = arith.constant 0 : i32
    return %arg0, %c0_i32, %c0_i32_0 : i32, i32, i32
  }
  func.func @transform_1(%arg0: i32, %arg1: i32) -> (i32, i32, i32) {
    %c0_i32 = arith.constant 0 : i32
    %c0_i32_0 = arith.constant 0 : i32
    return %arg0, %arg1, %c0_i32 : i32, i32, i32
  }
  func.func @transform_2(%arg0: i32, %arg1: i32) -> (i32, i32, i32) {
    %c0_i32 = arith.constant 0 : i32
    %c0_i32_0 = arith.constant 0 : i32
    %c0_i32_1 = arith.constant 0 : i32
    %c0_i32_2 = arith.constant 0 : i32
    return %c0_i32, %c0_i32_0, %c0_i32_1 : i32, i32, i32
  }
  func.func @transform_3(%arg0: i32, %arg1: i32) -> (i32, i32, i32) {
    %c0_i32 = arith.constant 0 : i32
    %c0_i32_0 = arith.constant 0 : i32
    %c0_i32_1 = arith.constant 0 : i32
    %c0_i32_2 = arith.constant 0 : i32
    return %c0_i32, %c0_i32_0, %c0_i32_1 : i32, i32, i32
  }
  func.func @transform_4(%arg0: i32, %arg1: i32) -> (i32, i32, i32) {
    %c0_i32 = arith.constant 0 : i32
    %c0_i32_0 = arith.constant 0 : i32
    %c0_i32_1 = arith.constant 0 : i32
    %c0_i32_2 = arith.constant 0 : i32
    return %c0_i32, %c0_i32_0, %c0_i32_1 : i32, i32, i32
  }
  func.func @transform_5(%arg0: i32, %arg1: i32) -> (i32, i32, i32) {
    %c0_i32 = arith.constant 0 : i32
    %c0_i32_0 = arith.constant 0 : i32
    %c0_i32_1 = arith.constant 0 : i32
    %c0_i32_2 = arith.constant 0 : i32
    return %c0_i32, %c0_i32_0, %c0_i32_1 : i32, i32, i32
  }
  func.func @transform_6(%arg0: i32, %arg1: i32) -> (i32, i32, i32) {
    %c0_i32 = arith.constant 0 : i32
    %c0_i32_0 = arith.constant 0 : i32
    %c0_i32_1 = arith.constant 0 : i32
    %c0_i32_2 = arith.constant 0 : i32
    return %c0_i32, %c0_i32_0, %c0_i32_1 : i32, i32, i32
  }
  func.func @transform_7(%arg0: i32, %arg1: i32) -> (i32, i32, i32) {
    %c0_i32 = arith.constant 0 : i32
    %c0_i32_0 = arith.constant 0 : i32
    %c0_i32_1 = arith.constant 0 : i32
    %c0_i32_2 = arith.constant 0 : i32
    return %c0_i32, %c0_i32_0, %c0_i32_1 : i32, i32, i32
  }
  func.func @transform_8(%arg0: i32, %arg1: i32) -> (i32, i32) {
    %c0_i32 = arith.constant 0 : i32
    %c0_i32_0 = arith.constant 0 : i32
    %c0_i32_1 = arith.constant 0 : i32
    return %c0_i32, %c0_i32_0 : i32, i32
  }
  func.func @transform_9(%arg0: i32, %arg1: i32) -> (i32, i32) {
    %c0_i32 = arith.constant 0 : i32
    %c0_i32_0 = arith.constant 0 : i32
    %c0_i32_1 = arith.constant 0 : i32
    return %c0_i32, %c0_i32_0 : i32, i32
  }
  func.func @transform_10(%arg0: i32, %arg1: i32) -> (i32, i32) {
    %c0_i32 = arith.constant 0 : i32
    %c0_i32_0 = arith.constant 0 : i32
    %c0_i32_1 = arith.constant 0 : i32
    return %c0_i32, %c0_i32_0 : i32, i32
  }
  func.func @transform_11(%arg0: i32, %arg1: i32) -> (i32, i32) {
    %c0_i32 = arith.constant 0 : i32
    %c0_i32_0 = arith.constant 0 : i32
    %c0_i32_1 = arith.constant 0 : i32
    return %c0_i32, %c0_i32_0 : i32, i32
  }
  func.func @transform_12(%arg0: i32, %arg1: i32) -> (i32, i32, i32) {
    %c0_i32 = arith.constant 0 : i32
    %c0_i32_0 = arith.constant 0 : i32
    %c0_i32_1 = arith.constant 0 : i32
    %c0_i32_2 = arith.constant 0 : i32
    return %c0_i32, %c0_i32_0, %c0_i32_1 : i32, i32, i32
  }
  func.func @transform_13(%arg0: i32, %arg1: i32) -> (i32, i32, i32) {
    %c0_i32 = arith.constant 0 : i32
    %c0_i32_0 = arith.constant 0 : i32
    %c0_i32_1 = arith.constant 0 : i32
    %c0_i32_2 = arith.constant 0 : i32
    return %c0_i32, %c0_i32_0, %c0_i32_1 : i32, i32, i32
  }
  func.func @transform_14(%arg0: i32, %arg1: i32) -> (i32, i32, i32) {
    %c0_i32 = arith.constant 0 : i32
    %c0_i32_0 = arith.constant 0 : i32
    %c0_i32_1 = arith.constant 0 : i32
    %c0_i32_2 = arith.constant 0 : i32
    return %c0_i32, %c0_i32_0, %c0_i32_1 : i32, i32, i32
  }
  func.func @transform_15(%arg0: i32, %arg1: i32) -> (i32, i32) {
    %c0_i32 = arith.constant 0 : i32
    %c0_i32_0 = arith.constant 0 : i32
    %c0_i32_1 = arith.constant 0 : i32
    return %c0_i32, %c0_i32_0 : i32, i32
  }
  func.func @transform_16(%arg0: i32, %arg1: i32) -> (i32, i32) {
    %c0_i32 = arith.constant 0 : i32
    %c0_i32_0 = arith.constant 0 : i32
    %c0_i32_1 = arith.constant 0 : i32
    return %c0_i32, %c0_i32_0 : i32, i32
  }
  func.func @transform_17(%arg0: i32, %arg1: i32) -> (i32, i32) {
    %c0_i32 = arith.constant 0 : i32
    %c0_i32_0 = arith.constant 0 : i32
    %c0_i32_1 = arith.constant 0 : i32
    return %c0_i32, %c0_i32_0 : i32, i32
  }
  func.func @transform_18(%arg0: i32, %arg1: i32) -> (i32, i32, i32) {
    %c0_i32 = arith.constant 0 : i32
    %c0_i32_0 = arith.constant 0 : i32
    return %arg0, %arg1, %c0_i32 : i32, i32, i32
  }
}

</mosaic_0001>

<llo_original>
// kernel: tpu_custom_call.1
$region0: #{tpu_custom_call.1}
  #allocation0 [shape = 'u32[]', space=smem, size = 0x4, offset = 0x4, fixed_abs, tag = 'smem constant byte address 0x4 - core index']
  #allocation1 [shape = 'u32[72,128]{1,0:T(1,128)}', space=vmem, size = 0x9000, scoped, tag = 'internal scratch']
  #allocation2 [shape = 'bf16[4,8,8]{2,1,0:T(8,128)(2,1)}', space=vmem, size = 0x2000, scoped, tag = 'scratch operand']
  #allocation3 [shape = 'bf16[4,8,8]{2,1,0:T(8,128)(2,1)}', space=vmem, size = 0x2000, scoped, tag = 'scratch operand']
  #allocation4 [shape = 'bf16[8,32]{1,0:T(8,128)(2,1)}', space=vmem, size = 0x800, scoped, tag = 'scratch operand']
  %s0 = inlined_call_operand.vmem [shape: f32[2,8,32], index: 0, kind: input, shape index: {}]
  %s1 = inlined_call_operand.vmem [shape: f32[2,8,32], index: 1, kind: input, shape index: {}]
  %s2 = inlined_call_operand.vmem [shape: bf16[4,32,8], index: 2, kind: input, shape index: {}]
  %s3 = inlined_call_operand.vmem [shape: bf16[4,32,8], index: 3, kind: input, shape index: {}]
  %s4 = inlined_call_operand.vmem [shape: bf16[4,32,8], index: 4, kind: input, shape index: {}]
  %s5 = inlined_call_operand.vmem [shape: f32[4,1,8], index: 5, kind: input, shape index: {}]
  %s6 = inlined_call_operand.vmem [shape: f32[4,1,8], index: 6, kind: input, shape index: {}]
  %s7 = inlined_call_operand.vmem [shape: f32[4,1,8], index: 7, kind: input, shape index: {}]
  %s8 = inlined_call_operand.vmem [shape: bf16[32,32], index: 8, kind: input, shape index: {}]
  %s9 = inlined_call_operand.vmem [shape: f32[1,32], index: 9, kind: input, shape index: {}]
  %s10 = inlined_call_operand.vmem [shape: f32[1,32], index: 10, kind: input, shape index: {}]
  %s11 = inlined_call_operand.vmem [shape: f32[1,32], index: 11, kind: input, shape index: {}]
  %s12 = inlined_call_operand.vmem [shape: bf16[1,32,64], index: 12, kind: input, shape index: {}]
  %s13 = inlined_call_operand.vmem [shape: f32[1,1,64], index: 13, kind: input, shape index: {}]
  %s14 = inlined_call_operand.vmem [shape: bf16[1,64,32], index: 14, kind: input, shape index: {}]
  %s15 = inlined_call_operand.vmem [shape: f32[1,32], index: 15, kind: input, shape index: {}]
  %s16 = inlined_call_operand.vmem [shape: f32[1,32], index: 16, kind: input, shape index: {}]
  %s17 = inlined_call_operand.vmem [shape: f32[1,32], index: 17, kind: input, shape index: {}]
  %s18 = inlined_call_operand.hbm [shape: f32[2,8,32], index: 18, kind: output, shape index: {}]
  %s19 = sld [smem:[#allocation0]]
  $region116: #{tpu_custom_call.1} parent=0
    _
  %s21 = ssub.s32 1, %s19
  %s22 = scalar_select 0, %s21, %s19
  $region1: #{tpu_custom_call.1} parent=0
    #allocation5 [shape = 'u8[8192]{0}', space=vmem, size = 0x2000, scoped, tag = 'output window, operand 0']
    #allocation6 [shape = 's32[2]{0}', space=sflag, size = 0x8, scoped, tag = 'scoped memory for tpu_custom_call.1']
    %23 = vsyncpa [#allocation6], 0
    %s24 = scalar_lea.sflag [#allocation6], 1
    %25 = vsyncpa %s24, 0
    loop: start=0, step=1, limit=4
    $region2: #{tpu_custom_call.1} parent=1 // loop_pre_header
      _
    $region3: #{tpu_custom_call.1} parent=1 // loop_header
      %s27 = sphi 0, %s31
      %p28 = scmp.ge.s32.totalorder %s27, 4
      %s34 = sphi 0, %s46
      %s35 = sphi 0, %s42
      %s36 = sphi 0, %s34
      %s37 = sphi 0, %s35
      %s38 = sphi 0, %s36
      %s39 = sphi 0, %s37
      %s49 = sphi 0, %s51
      %s52 = sphi 0, %s49
      %s53 = sphi 0, %s52
      %s69 = sphi 0, %s53
      %s77 = sphi 0, %s79
      %s80 = sphi 0, %s77
      %s81 = sphi 0, %s80
      %s97 = sphi 0, %s81
      %s101 = sphi 0, %s101
      %s103 = sphi 0, %s101
      %s104 = sphi 0, %s103
      %s118 = sphi 0, %s104
      %s122 = sphi 0, %s122
      %s124 = sphi 0, %s122
      %s125 = sphi 0, %s124
      %s139 = sphi 0, %s125
      %s143 = sphi 0, %s143
      %s145 = sphi 0, %s143
      %s146 = sphi 0, %s145
      %s160 = sphi 0, %s146
      %s164 = sphi 0, %s164
      %s166 = sphi 0, %s164
      %s167 = sphi 0, %s166
      %s181 = sphi 0, %s167
      %s185 = sphi 0, %s185
      %s187 = sphi 0, %s185
      %s188 = sphi 0, %s187
      %s202 = sphi 0, %s188
      %s206 = sphi 0, %s206
      %s208 = sphi 0, %s206
      %s209 = sphi 0, %s208
      %s223 = sphi 0, %s209
      %s227 = sphi 0, %s227
      %s229 = sphi 0, %s227
      %s230 = sphi 0, %s229
      %s244 = sphi 0, %s230
      %s248 = sphi 0, %s248
      %s250 = sphi 0, %s248
      %s251 = sphi 0, %s250
      %s265 = sphi 0, %s251
      %s269 = sphi 0, %s269
      %s271 = sphi 0, %s269
      %s272 = sphi 0, %s271
      %s286 = sphi 0, %s272
      %s290 = sphi 0, %s290
      %s292 = sphi 0, %s290
      %s293 = sphi 0, %s292
      %s307 = sphi 0, %s293
      %s311 = sphi 0, %s311
      %s313 = sphi 0, %s311
      %s314 = sphi 0, %s313
      %s328 = sphi 0, %s314
      %s332 = sphi 0, %s332
      %s334 = sphi 0, %s332
      %s335 = sphi 0, %s334
      %s349 = sphi 0, %s335
      %s353 = sphi 0, %s353
      %s355 = sphi 0, %s353
      %s356 = sphi 0, %s355
      %s370 = sphi 0, %s356
      %s374 = sphi 0, %s374
      %s376 = sphi 0, %s374
      %s377 = sphi 0, %s376
      %s391 = sphi 0, %s377
      %s395 = sphi 0, %s395
      %s397 = sphi 0, %s395
      %s398 = sphi 0, %s397
      %s412 = sphi 0, %s398
      %s416 = sphi 0, %s416
      %s418 = sphi 0, %s416
      %s419 = sphi 0, %s418
      %s433 = sphi 0, %s419
      %s441 = sphi 0, %s443
      %s444 = sphi 0, %s441
      %s445 = sphi 0, %s444
      %s461 = sphi 0, %s445
    $region4: #{tpu_custom_call.1} parent=1 // loop_header_branch
      %30 = sbr.rel (%p28) target = $region8
    $region5: #{tpu_custom_call.1} parent=1 // loop_body
      %s32 = ssub.s32 %s27, 1
      %s33 = ssub.s32 %s27, 2
      %s40 = sadd.s32 1, %s35
      %p41 = scmp.ge.s32.totalorder %s40, 1
      %s42 = scalar_select %p41, 0, %s40
      %s43 = sadd.s32 1, %s34
      %s44 = scalar_select %p41, %s43, %s34
      %p45 = scmp.ge.s32.totalorder %s44, 2
      %s46 = scalar_select %p45, 0, %s44
      %s47 = ssub.s32 %s34, %s46
      %p48 = scmp.eq.s32.totalorder %s47, 0
      %s50 = sadd.s32 %s49, 1
      %s51 = scalar_select %p48, %s49, %s50
      %p54 = pneg %p48
      %p55 = scmp.eq.s32.totalorder %s27, 1
      %p56 = por %p54, %p55
      %p57 = scmp.ne.s32.totalorder %s49, %s52
      %p58 = scmp.eq.s32.totalorder %s27, 0
      %p59 = por %p57, %p58
      %p60 = scmp.ne.s32.totalorder %s49, %s52
      %p61 = scmp.eq.s32.totalorder %s32, 1
      %p62 = por %p60, %p61
      %p63 = scmp.ne.s32.totalorder %s52, %s53
      %p64 = scmp.eq.s32.totalorder %s32, 0
      %p65 = por %p63, %p64
      %p66 = scmp.ne.s32.totalorder %s52, %s53
      %p67 = scmp.eq.s32.totalorder %s33, 1
      %p68 = por %p66, %p67
      %p70 = scmp.ne.s32.totalorder %s53, %s69
      %p71 = scmp.eq.s32.totalorder %s33, 0
      %p72 = por %p70, %p71
      %s73 = ssub.s32 %s34, %s46
      %s74 = ssub.s32 %s35, %s42
      %s75 = sor.u32 %s73, %s74
      %p76 = scmp.eq.s32.totalorder %s75, 0
      %s78 = sadd.s32 %s77, 1
      %s79 = scalar_select %p76, %s77, %s78
      %p82 = pneg %p76
      %p83 = scmp.eq.s32.totalorder %s27, 1
      %p84 = por %p82, %p83
      %p85 = scmp.ne.s32.totalorder %s77, %s80
      %p86 = scmp.eq.s32.totalorder %s27, 0
      %p87 = por %p85, %p86
      %p88 = scmp.ne.s32.totalorder %s77, %s80
      %p89 = scmp.eq.s32.totalorder %s32, 1
      %p90 = por %p88, %p89
      %p91 = scmp.ne.s32.totalorder %s80, %s81
      %p92 = scmp.eq.s32.totalorder %s32, 0
      %p93 = por %p91, %p92
      %p94 = scmp.ne.s32.totalorder %s80, %s81
      %p95 = scmp.eq.s32.totalorder %s33, 1
      %p96 = por %p94, %p95
      %p98 = scmp.ne.s32.totalorder %s81, %s97
      %p99 = scmp.eq.s32.totalorder %s33, 0
      %p100 = por %p98, %p99
      %s102 = sadd.s32 %s101, 1
      %p105 = scmp.eq.s32.totalorder %s27, 1
      %p106 = scmp.ne.s32.totalorder %s101, %s103
      %p107 = scmp.eq.s32.totalorder %s27, 0
      %p108 = por %p106, %p107
      %p109 = scmp.ne.s32.totalorder %s101, %s103
      %p110 = scmp.eq.s32.totalorder %s32, 1
      %p111 = por %p109, %p110
      %p112 = scmp.ne.s32.totalorder %s103, %s104
      %p113 = scmp.eq.s32.totalorder %s32, 0
      %p114 = por %p112, %p113
      %p115 = scmp.ne.s32.totalorder %s103, %s104
      %p116 = scmp.eq.s32.totalorder %s33, 1
      %p117 = por %p115, %p116
      %p119 = scmp.ne.s32.totalorder %s104, %s118
      %p120 = scmp.eq.s32.totalorder %s33, 0
      %p121 = por %p119, %p120
      %s123 = sadd.s32 %s122, 1
      %p126 = scmp.eq.s32.totalorder %s27, 1
      %p127 = scmp.ne.s32.totalorder %s122, %s124
      %p128 = scmp.eq.s32.totalorder %s27, 0
      %p129 = por %p127, %p128
      %p130 = scmp.ne.s32.totalorder %s122, %s124
      %p131 = scmp.eq.s32.totalorder %s32, 1
      %p132 = por %p130, %p131
      %p133 = scmp.ne.s32.totalorder %s124, %s125
      %p134 = scmp.eq.s32.totalorder %s32, 0
      %p135 = por %p133, %p134
      %p136 = scmp.ne.s32.totalorder %s124, %s125
      %p137 = scmp.eq.s32.totalorder %s33, 1
      %p138 = por %p136, %p137
      %p140 = scmp.ne.s32.totalorder %s125, %s139
      %p141 = scmp.eq.s32.totalorder %s33, 0
      %p142 = por %p140, %p141
      %s144 = sadd.s32 %s143, 1
      %p147 = scmp.eq.s32.totalorder %s27, 1
      %p148 = scmp.ne.s32.totalorder %s143, %s145
      %p149 = scmp.eq.s32.totalorder %s27, 0
      %p150 = por %p148, %p149
      %p151 = scmp.ne.s32.totalorder %s143, %s145
      %p152 = scmp.eq.s32.totalorder %s32, 1
      %p153 = por %p151, %p152
      %p154 = scmp.ne.s32.totalorder %s145, %s146
      %p155 = scmp.eq.s32.totalorder %s32, 0
      %p156 = por %p154, %p155
      %p157 = scmp.ne.s32.totalorder %s145, %s146
      %p158 = scmp.eq.s32.totalorder %s33, 1
      %p159 = por %p157, %p158
      %p161 = scmp.ne.s32.totalorder %s146, %s160
      %p162 = scmp.eq.s32.totalorder %s33, 0
      %p163 = por %p161, %p162
      %s165 = sadd.s32 %s164, 1
      %p168 = scmp.eq.s32.totalorder %s27, 1
      %p169 = scmp.ne.s32.totalorder %s164, %s166
      %p170 = scmp.eq.s32.totalorder %s27, 0
      %p171 = por %p169, %p170
      %p172 = scmp.ne.s32.totalorder %s164, %s166
      %p173 = scmp.eq.s32.totalorder %s32, 1
      %p174 = por %p172, %p173
      %p175 = scmp.ne.s32.totalorder %s166, %s167
      %p176 = scmp.eq.s32.totalorder %s32, 0
      %p177 = por %p175, %p176
      %p178 = scmp.ne.s32.totalorder %s166, %s167
      %p179 = scmp.eq.s32.totalorder %s33, 1
      %p180 = por %p178, %p179
      %p182 = scmp.ne.s32.totalorder %s167, %s181
      %p183 = scmp.eq.s32.totalorder %s33, 0
      %p184 = por %p182, %p183
      %s186 = sadd.s32 %s185, 1
      %p189 = scmp.eq.s32.totalorder %s27, 1
      %p190 = scmp.ne.s32.totalorder %s185, %s187
      %p191 = scmp.eq.s32.totalorder %s27, 0
      %p192 = por %p190, %p191
      %p193 = scmp.ne.s32.totalorder %s185, %s187
      %p194 = scmp.eq.s32.totalorder %s32, 1
      %p195 = por %p193, %p194
      %p196 = scmp.ne.s32.totalorder %s187, %s188
      %p197 = scmp.eq.s32.totalorder %s32, 0
      %p198 = por %p196, %p197
      %p199 = scmp.ne.s32.totalorder %s187, %s188
      %p200 = scmp.eq.s32.totalorder %s33, 1
      %p201 = por %p199, %p200
      %p203 = scmp.ne.s32.totalorder %s188, %s202
      %p204 = scmp.eq.s32.totalorder %s33, 0
      %p205 = por %p203, %p204
      %s207 = sadd.s32 %s206, 1
      %p210 = scmp.eq.s32.totalorder %s27, 1
      %p211 = scmp.ne.s32.totalorder %s206, %s208
      %p212 = scmp.eq.s32.totalorder %s27, 0
      %p213 = por %p211, %p212
      %p214 = scmp.ne.s32.totalorder %s206, %s208
      %p215 = scmp.eq.s32.totalorder %s32, 1
      %p216 = por %p214, %p215
      %p217 = scmp.ne.s32.totalorder %s208, %s209
      %p218 = scmp.eq.s32.totalorder %s32, 0
      %p219 = por %p217, %p218
      %p220 = scmp.ne.s32.totalorder %s208, %s209
      %p221 = scmp.eq.s32.totalorder %s33, 1
      %p222 = por %p220, %p221
      %p224 = scmp.ne.s32.totalorder %s209, %s223
      %p225 = scmp.eq.s32.totalorder %s33, 0
      %p226 = por %p224, %p225
      %s228 = sadd.s32 %s227, 1
      %p231 = scmp.eq.s32.totalorder %s27, 1
      %p232 = scmp.ne.s32.totalorder %s227, %s229
      %p233 = scmp.eq.s32.totalorder %s27, 0
      %p234 = por %p232, %p233
      %p235 = scmp.ne.s32.totalorder %s227, %s229
      %p236 = scmp.eq.s32.totalorder %s32, 1
      %p237 = por %p235, %p236
      %p238 = scmp.ne.s32.totalorder %s229, %s230
      %p239 = scmp.eq.s32.totalorder %s32, 0
      %p240 = por %p238, %p239
      %p241 = scmp.ne.s32.totalorder %s229, %s230
      %p242 = scmp.eq.s32.totalorder %s33, 1
      %p243 = por %p241, %p242
      %p245 = scmp.ne.s32.totalorder %s230, %s244
      %p246 = scmp.eq.s32.totalorder %s33, 0
      %p247 = por %p245, %p246
      %s249 = sadd.s32 %s248, 1
      %p252 = scmp.eq.s32.totalorder %s27, 1
      %p253 = scmp.ne.s32.totalorder %s248, %s250
      %p254 = scmp.eq.s32.totalorder %s27, 0
      %p255 = por %p253, %p254
      %p256 = scmp.ne.s32.totalorder %s248, %s250
      %p257 = scmp.eq.s32.totalorder %s32, 1
      %p258 = por %p256, %p257
      %p259 = scmp.ne.s32.totalorder %s250, %s251
      %p260 = scmp.eq.s32.totalorder %s32, 0
      %p261 = por %p259, %p260
      %p262 = scmp.ne.s32.totalorder %s250, %s251
      %p263 = scmp.eq.s32.totalorder %s33, 1
      %p264 = por %p262, %p263
      %p266 = scmp.ne.s32.totalorder %s251, %s265
      %p267 = scmp.eq.s32.totalorder %s33, 0
      %p268 = por %p266, %p267
      %s270 = sadd.s32 %s269, 1
      %p273 = scmp.eq.s32.totalorder %s27, 1
      %p274 = scmp.ne.s32.totalorder %s269, %s271
      %p275 = scmp.eq.s32.totalorder %s27, 0
      %p276 = por %p274, %p275
      %p277 = scmp.ne.s32.totalorder %s269, %s271
      %p278 = scmp.eq.s32.totalorder %s32, 1
      %p279 = por %p277, %p278
      %p280 = scmp.ne.s32.totalorder %s271, %s272
      %p281 = scmp.eq.s32.totalorder %s32, 0
      %p282 = por %p280, %p281
      %p283 = scmp.ne.s32.totalorder %s271, %s272
      %p284 = scmp.eq.s32.totalorder %s33, 1
      %p285 = por %p283, %p284
      %p287 = scmp.ne.s32.totalorder %s272, %s286
      %p288 = scmp.eq.s32.totalorder %s33, 0
      %p289 = por %p287, %p288
      %s291 = sadd.s32 %s290, 1
      %p294 = scmp.eq.s32.totalorder %s27, 1
      %p295 = scmp.ne.s32.totalorder %s290, %s292
      %p296 = scmp.eq.s32.totalorder %s27, 0
      %p297 = por %p295, %p296
      %p298 = scmp.ne.s32.totalorder %s290, %s292
      %p299 = scmp.eq.s32.totalorder %s32, 1
      %p300 = por %p298, %p299
      %p301 = scmp.ne.s32.totalorder %s292, %s293
      %p302 = scmp.eq.s32.totalorder %s32, 0
      %p303 = por %p301, %p302
      %p304 = scmp.ne.s32.totalorder %s292, %s293
      %p305 = scmp.eq.s32.totalorder %s33, 1
      %p306 = por %p304, %p305
      %p308 = scmp.ne.s32.totalorder %s293, %s307
      %p309 = scmp.eq.s32.totalorder %s33, 0
      %p310 = por %p308, %p309
      %s312 = sadd.s32 %s311, 1
      %p315 = scmp.eq.s32.totalorder %s27, 1
      %p316 = scmp.ne.s32.totalorder %s311, %s313
      %p317 = scmp.eq.s32.totalorder %s27, 0
      %p318 = por %p316, %p317
      %p319 = scmp.ne.s32.totalorder %s311, %s313
      %p320 = scmp.eq.s32.totalorder %s32, 1
      %p321 = por %p319, %p320
      %p322 = scmp.ne.s32.totalorder %s313, %s314
      %p323 = scmp.eq.s32.totalorder %s32, 0
      %p324 = por %p322, %p323
      %p325 = scmp.ne.s32.totalorder %s313, %s314
      %p326 = scmp.eq.s32.totalorder %s33, 1
      %p327 = por %p325, %p326
      %p329 = scmp.ne.s32.totalorder %s314, %s328
      %p330 = scmp.eq.s32.totalorder %s33, 0
      %p331 = por %p329, %p330
      %s333 = sadd.s32 %s332, 1
      %p336 = scmp.eq.s32.totalorder %s27, 1
      %p337 = scmp.ne.s32.totalorder %s332, %s334
      %p338 = scmp.eq.s32.totalorder %s27, 0
      %p339 = por %p337, %p338
      %p340 = scmp.ne.s32.totalorder %s332, %s334
      %p341 = scmp.eq.s32.totalorder %s32, 1
      %p342 = por %p340, %p341
      %p343 = scmp.ne.s32.totalorder %s334, %s335
      %p344 = scmp.eq.s32.totalorder %s32, 0
      %p345 = por %p343, %p344
      %p346 = scmp.ne.s32.totalorder %s334, %s335
      %p347 = scmp.eq.s32.totalorder %s33, 1
      %p348 = por %p346, %p347
      %p350 = scmp.ne.s32.totalorder %s335, %s349
      %p351 = scmp.eq.s32.totalorder %s33, 0
      %p352 = por %p350, %p351
      %s354 = sadd.s32 %s353, 1
      %p357 = scmp.eq.s32.totalorder %s27, 1
      %p358 = scmp.ne.s32.totalorder %s353, %s355
      %p359 = scmp.eq.s32.totalorder %s27, 0
      %p360 = por %p358, %p359
      %p361 = scmp.ne.s32.totalorder %s353, %s355
      %p362 = scmp.eq.s32.totalorder %s32, 1
      %p363 = por %p361, %p362
      %p364 = scmp.ne.s32.totalorder %s355, %s356
      %p365 = scmp.eq.s32.totalorder %s32, 0
      %p366 = por %p364, %p365
      %p367 = scmp.ne.s32.totalorder %s355, %s356
      %p368 = scmp.eq.s32.totalorder %s33, 1
      %p369 = por %p367, %p368
      %p371 = scmp.ne.s32.totalorder %s356, %s370
      %p372 = scmp.eq.s32.totalorder %s33, 0
      %p373 = por %p371, %p372
      %s375 = sadd.s32 %s374, 1
      %p378 = scmp.eq.s32.totalorder %s27, 1
      %p379 = scmp.ne.s32.totalorder %s374, %s376
      %p380 = scmp.eq.s32.totalorder %s27, 0
      %p381 = por %p379, %p380
      %p382 = scmp.ne.s32.totalorder %s374, %s376
      %p383 = scmp.eq.s32.totalorder %s32, 1
      %p384 = por %p382, %p383
      %p385 = scmp.ne.s32.totalorder %s376, %s377
      %p386 = scmp.eq.s32.totalorder %s32, 0
      %p387 = por %p385, %p386
      %p388 = scmp.ne.s32.totalorder %s376, %s377
      %p389 = scmp.eq.s32.totalorder %s33, 1
      %p390 = por %p388, %p389
      %p392 = scmp.ne.s32.totalorder %s377, %s391
      %p393 = scmp.eq.s32.totalorder %s33, 0
      %p394 = por %p392, %p393
      %s396 = sadd.s32 %s395, 1
      %p399 = scmp.eq.s32.totalorder %s27, 1
      %p400 = scmp.ne.s32.totalorder %s395, %s397
      %p401 = scmp.eq.s32.totalorder %s27, 0
      %p402 = por %p400, %p401
      %p403 = scmp.ne.s32.totalorder %s395, %s397
      %p404 = scmp.eq.s32.totalorder %s32, 1
      %p405 = por %p403, %p404
      %p406 = scmp.ne.s32.totalorder %s397, %s398
      %p407 = scmp.eq.s32.totalorder %s32, 0
      %p408 = por %p406, %p407
      %p409 = scmp.ne.s32.totalorder %s397, %s398
      %p410 = scmp.eq.s32.totalorder %s33, 1
      %p411 = por %p409, %p410
      %p413 = scmp.ne.s32.totalorder %s398, %s412
      %p414 = scmp.eq.s32.totalorder %s33, 0
      %p415 = por %p413, %p414
      %s417 = sadd.s32 %s416, 1
      %p420 = scmp.eq.s32.totalorder %s27, 1
      %p421 = scmp.ne.s32.totalorder %s416, %s418
      %p422 = scmp.eq.s32.totalorder %s27, 0
      %p423 = por %p421, %p422
      %p424 = scmp.ne.s32.totalorder %s416, %s418
      %p425 = scmp.eq.s32.totalorder %s32, 1
      %p426 = por %p424, %p425
      %p427 = scmp.ne.s32.totalorder %s418, %s419
      %p428 = scmp.eq.s32.totalorder %s32, 0
      %p429 = por %p427, %p428
      %p430 = scmp.ne.s32.totalorder %s418, %s419
      %p431 = scmp.eq.s32.totalorder %s33, 1
      %p432 = por %p430, %p431
      %p434 = scmp.ne.s32.totalorder %s419, %s433
      %p435 = scmp.eq.s32.totalorder %s33, 0
      %p436 = por %p434, %p435
      %s437 = ssub.s32 %s34, %s46
      %s438 = ssub.s32 %s35, %s42
      %s439 = sor.u32 %s437, %s438
      %p440 = scmp.eq.s32.totalorder %s439, 0
      %s442 = sadd.s32 %s441, 1
      %s443 = scalar_select %p440, %s441, %s442
      %p446 = pneg %p440
      %p447 = scmp.eq.s32.totalorder %s27, 1
      %p448 = por %p446, %p447
      %p449 = scmp.ne.s32.totalorder %s441, %s444
      %p450 = scmp.eq.s32.totalorder %s27, 0
      %p451 = por %p449, %p450
      %p452 = scmp.ne.s32.totalorder %s441, %s444
      %p453 = scmp.eq.s32.totalorder %s32, 1
      %p454 = por %p452, %p453
      %p455 = scmp.ne.s32.totalorder %s444, %s445
      %p456 = scmp.eq.s32.totalorder %s32, 0
      %p457 = por %p455, %p456
      %p458 = scmp.ne.s32.totalorder %s444, %s445
      %p459 = scmp.eq.s32.totalorder %s33, 1
      %p460 = por %p458, %p459
      %p462 = scmp.ne.s32.totalorder %s445, %s461
      %p463 = scmp.eq.s32.totalorder %s33, 0
      %p464 = por %p462, %p463
      %p465 = scmp.le.s32.totalorder 1, %s27
      %p466 = scmp.lt.s32.totalorder %s27, 3
      %p467 = pnand %p465, %p466
      %p468 = pneg %p467
      // Predicated region
      $region9: #{tpu_custom_call.1} parent=5 // pred_check
        _
      $region10: #{tpu_custom_call.1} parent=5 // pred_check_branch
        %470 = sbr.rel (%p467) target = $region12
      $region11: #{tpu_custom_call.1} parent=5 // pred_region
        %s471 = ssub.s32 %s27, 1
        // Predicated region
        $region13: #{tpu_custom_call.1} parent=11 // pred_check
          %p472 = pneg %p114
        $region14: #{tpu_custom_call.1} parent=11 // pred_check_branch
          %474 = sbr.rel (%p472) target = $region16
        $region15: #{tpu_custom_call.1} parent=11 // pred_region
          _
        $region16: #{tpu_custom_call.1} parent=11 // pred_fallthru
          _
        // Predicated region
        $region17: #{tpu_custom_call.1} parent=11 // pred_check
          %p475 = pneg %p135
        $region18: #{tpu_custom_call.1} parent=11 // pred_check_branch
          %477 = sbr.rel (%p475) target = $region20
        $region19: #{tpu_custom_call.1} parent=11 // pred_region
          _
        $region20: #{tpu_custom_call.1} parent=11 // pred_fallthru
          _
        // Predicated region
        $region21: #{tpu_custom_call.1} parent=11 // pred_check
          %p478 = pneg %p156
        $region22: #{tpu_custom_call.1} parent=11 // pred_check_branch
          %480 = sbr.rel (%p478) target = $region24
        $region23: #{tpu_custom_call.1} parent=11 // pred_region
          _
        $region24: #{tpu_custom_call.1} parent=11 // pred_fallthru
          _
        // Predicated region
        $region25: #{tpu_custom_call.1} parent=11 // pred_check
          %p481 = pneg %p177
        $region26: #{tpu_custom_call.1} parent=11 // pred_check_branch
          %483 = sbr.rel (%p481) target = $region28
        $region27: #{tpu_custom_call.1} parent=11 // pred_region
          _
        $region28: #{tpu_custom_call.1} parent=11 // pred_fallthru
          _
        // Predicated region
        $region29: #{tpu_custom_call.1} parent=11 // pred_check
          %p484 = pneg %p198
        $region30: #{tpu_custom_call.1} parent=11 // pred_check_branch
          %486 = sbr.rel (%p484) target = $region32
        $region31: #{tpu_custom_call.1} parent=11 // pred_region
          _
        $region32: #{tpu_custom_call.1} parent=11 // pred_fallthru
          _
        // Predicated region
        $region33: #{tpu_custom_call.1} parent=11 // pred_check
          %p487 = pneg %p219
        $region34: #{tpu_custom_call.1} parent=11 // pred_check_branch
          %489 = sbr.rel (%p487) target = $region36
        $region35: #{tpu_custom_call.1} parent=11 // pred_region
          _
        $region36: #{tpu_custom_call.1} parent=11 // pred_fallthru
          _
        // Predicated region
        $region37: #{tpu_custom_call.1} parent=11 // pred_check
          %p490 = pneg %p240
        $region38: #{tpu_custom_call.1} parent=11 // pred_check_branch
          %492 = sbr.rel (%p490) target = $region40
        $region39: #{tpu_custom_call.1} parent=11 // pred_region
          _
        $region40: #{tpu_custom_call.1} parent=11 // pred_fallthru
          _
        // Predicated region
        $region41: #{tpu_custom_call.1} parent=11 // pred_check
          %p493 = pneg %p261
        $region42: #{tpu_custom_call.1} parent=11 // pred_check_branch
          %495 = sbr.rel (%p493) target = $region44
        $region43: #{tpu_custom_call.1} parent=11 // pred_region
          _
        $region44: #{tpu_custom_call.1} parent=11 // pred_fallthru
          _
        // Predicated region
        $region45: #{tpu_custom_call.1} parent=11 // pred_check
          %p496 = pneg %p282
        $region46: #{tpu_custom_call.1} parent=11 // pred_check_branch
          %498 = sbr.rel (%p496) target = $region48
        $region47: #{tpu_custom_call.1} parent=11 // pred_region
          _
        $region48: #{tpu_custom_call.1} parent=11 // pred_fallthru
          _
        // Predicated region
        $region49: #{tpu_custom_call.1} parent=11 // pred_check
          %p499 = pneg %p303
        $region50: #{tpu_custom_call.1} parent=11 // pred_check_branch
          %501 = sbr.rel (%p499) target = $region52
        $region51: #{tpu_custom_call.1} parent=11 // pred_region
          _
        $region52: #{tpu_custom_call.1} parent=11 // pred_fallthru
          _
        // Predicated region
        $region53: #{tpu_custom_call.1} parent=11 // pred_check
          %p502 = pneg %p324
        $region54: #{tpu_custom_call.1} parent=11 // pred_check_branch
          %504 = sbr.rel (%p502) target = $region56
        $region55: #{tpu_custom_call.1} parent=11 // pred_region
          _
        $region56: #{tpu_custom_call.1} parent=11 // pred_fallthru
          _
        // Predicated region
        $region57: #{tpu_custom_call.1} parent=11 // pred_check
          %p505 = pneg %p345
        $region58: #{tpu_custom_call.1} parent=11 // pred_check_branch
          %507 = sbr.rel (%p505) target = $region60
        $region59: #{tpu_custom_call.1} parent=11 // pred_region
          _
        $region60: #{tpu_custom_call.1} parent=11 // pred_fallthru
          _
        // Predicated region
        $region61: #{tpu_custom_call.1} parent=11 // pred_check
          %p508 = pneg %p366
        $region62: #{tpu_custom_call.1} parent=11 // pred_check_branch
          %510 = sbr.rel (%p508) target = $region64
        $region63: #{tpu_custom_call.1} parent=11 // pred_region
          _
        $region64: #{tpu_custom_call.1} parent=11 // pred_fallthru
          _
        // Predicated region
        $region65: #{tpu_custom_call.1} parent=11 // pred_check
          %p511 = pneg %p387
        $region66: #{tpu_custom_call.1} parent=11 // pred_check_branch
          %513 = sbr.rel (%p511) target = $region68
        $region67: #{tpu_custom_call.1} parent=11 // pred_region
          _
        $region68: #{tpu_custom_call.1} parent=11 // pred_fallthru
          _
        // Predicated region
        $region69: #{tpu_custom_call.1} parent=11 // pred_check
          %p514 = pneg %p408
        $region70: #{tpu_custom_call.1} parent=11 // pred_check_branch
          %516 = sbr.rel (%p514) target = $region72
        $region71: #{tpu_custom_call.1} parent=11 // pred_region
          _
        $region72: #{tpu_custom_call.1} parent=11 // pred_fallthru
          _
        // Predicated region
        $region73: #{tpu_custom_call.1} parent=11 // pred_check
          %p517 = pneg %p429
        $region74: #{tpu_custom_call.1} parent=11 // pred_check_branch
          %519 = sbr.rel (%p517) target = $region76
        $region75: #{tpu_custom_call.1} parent=11 // pred_region
          _
        $region76: #{tpu_custom_call.1} parent=11 // pred_fallthru
          _
      $region12: #{tpu_custom_call.1} parent=5 // pred_fallthru
        _
      %p520 = scmp.lt.s32.totalorder %s27, 2
      // Predicated region
      $region77: #{tpu_custom_call.1} parent=5 // pred_check
        %p521 = pneg %p520
      $region78: #{tpu_custom_call.1} parent=5 // pred_check_branch
        %523 = sbr.rel (%p521) target = $region80
      $region79: #{tpu_custom_call.1} parent=5 // pred_region
        // Predicated region
        $region81: #{tpu_custom_call.1} parent=79 // pred_check
          %p524 = pneg %p59
        $region82: #{tpu_custom_call.1} parent=79 // pred_check_branch
          %526 = sbr.rel (%p524) target = $region84
        $region83: #{tpu_custom_call.1} parent=79 // pred_region
          %p527 = scmp.lt.s32.totalorder %s34, 1
          %s528 = scalar_select %p527, %s34, 1
          %s529 = smul.addr %s528, 8
          %s530 = scalar_lea.vmem %s0, %s529
        $region84: #{tpu_custom_call.1} parent=79 // pred_fallthru
          _
        // Predicated region
        $region85: #{tpu_custom_call.1} parent=79 // pred_check
          %p531 = pneg %p87
        $region86: #{tpu_custom_call.1} parent=79 // pred_check_branch
          %533 = sbr.rel (%p531) target = $region88
        $region87: #{tpu_custom_call.1} parent=79 // pred_region
          %p534 = scmp.lt.s32.totalorder %s34, 1
          %s535 = scalar_select %p534, %s34, 1
          %p536 = scmp.lt.s32.totalorder %s35, 0
          %s537 = scalar_select %p536, %s35, 0
          %s538 = sadd.s32 %s537, %s535
          %s539 = smul.addr %s538, 8
          %s540 = scalar_lea.vmem %s1, %s539
        $region88: #{tpu_custom_call.1} parent=79 // pred_fallthru
          _
      $region80: #{tpu_custom_call.1} parent=5 // pred_fallthru
        _
      %p541 = scmp.le.s32.totalorder 1, %s27
      %p542 = scmp.lt.s32.totalorder %s27, 3
      %p543 = pnand %p541, %p542
      %p544 = pneg %p543
      // Predicated region
      $region89: #{tpu_custom_call.1} parent=5 // pred_check
        _
      $region90: #{tpu_custom_call.1} parent=5 // pred_check_branch
        %546 = sbr.rel (%p543) target = $region92
      $region91: #{tpu_custom_call.1} parent=5 // pred_region
        %s547 = ssub.s32 %s27, 1
        %p548 = scmp.lt.s32.totalorder %s36, 1
        %s549 = scalar_select %p548, %s36, 1
        %s550 = smul.addr %s549, 8
        %s551 = scalar_lea.vmem %s0, %s550
        %p552 = pneg %p65
        %p553 = pneg %p62
        %p554 = scmp.lt.s32.totalorder %s36, 1
        %s555 = scalar_select %p554, %s36, 1
        %p556 = scmp.lt.s32.totalorder %s37, 0
        %s557 = scalar_select %p556, %s37, 0
        %s558 = sadd.s32 %s557, %s555
        %s559 = smul.addr %s558, 8
        %s560 = scalar_lea.vmem %s1, %s559
        %p561 = pneg %p93
        %p562 = pneg %p90
        %p563 = pneg %p114
        %p564 = pneg %p111
        %p565 = pneg %p135
        %p566 = pneg %p132
        %p567 = pneg %p156
        %p568 = pneg %p153
        %p569 = pneg %p177
        %p570 = pneg %p174
        %p571 = pneg %p198
        %p572 = pneg %p195
        %p573 = pneg %p219
        %p574 = pneg %p216
        %p575 = pneg %p240
        %p576 = pneg %p237
        %p577 = pneg %p261
        %p578 = pneg %p258
        %p579 = pneg %p282
        %p580 = pneg %p279
        %p581 = pneg %p303
        %p582 = pneg %p300
        %p583 = pneg %p324
        %p584 = pneg %p321
        %p585 = pneg %p345
        %p586 = pneg %p342
        %p587 = pneg %p366
        %p588 = pneg %p363
        %p589 = pneg %p387
        %p590 = pneg %p384
        %p591 = pneg %p408
        %p592 = pneg %p405
        %p593 = pneg %p429
        %p594 = pneg %p426
        %p595 = pneg %p457
        %p596 = pneg %p454
        %s597 = sand.u32 %s444, 1
        %s598 = scalar_lea.sflag [#allocation6], %s597
        %s599 = sand.u32 %s444, 1
        %s600 = smul.addr %s599, 8
        %s601 = scalar_lea.vmem [#allocation5], %s600
        %p602 = scmp.lt.s32.totalorder %s36, 1
        %s603 = scalar_select %p602, %s36, 1
        %s604 = smul.addr %s603, 8
        %s605 = scalar_lea.vmem %s0, %s604
        %p606 = scmp.lt.s32.totalorder %s36, 1
        %s607 = scalar_select %p606, %s36, 1
        %p608 = scmp.lt.s32.totalorder %s37, 0
        %s609 = scalar_select %p608, %s37, 0
        %s610 = sadd.s32 %s609, %s607
        %s611 = smul.addr %s610, 8
        %s612 = scalar_lea.vmem %s1, %s611
        %p614 = scmp.eq.s32.totalorder %s37, 0
        // Predicated region
        $region93: #{tpu_custom_call.1} parent=91 // pred_check
          %p615 = pneg %p614
        $region94: #{tpu_custom_call.1} parent=91 // pred_check_branch
          %617 = sbr.rel (%p615) target = $region96
        $region95: #{tpu_custom_call.1} parent=91 // pred_region
          %v618 = vld [vmem:[%s605] sm:$0xff]
          %v619 = vpack.c.bf16 %v618, %v618
          loop: start=0, step=1, limit=4
          $region97: #{tpu_custom_call.1} parent=95 // loop_pre_header
            _
          $region98: #{tpu_custom_call.1} parent=95 // loop_header
            %s621 = sphi 0, %s625
            %p622 = scmp.ge.s32.totalorder %s621, 4
          $region99: #{tpu_custom_call.1} parent=95 // loop_header_branch
            %624 = sbr.rel (%p622) target = $region103
          $region100: #{tpu_custom_call.1} parent=95 // loop_body
            %s626 = smul.u32 %s621, 4
            %s627 = smul.addr %s626, 4
            %s628 = scalar_lea.vmem %s3, %s627
            %v629 = vld [vmem:[%s628] sm:$0xf]
            %v630 = vld [vmem:[%s628 + $0x4] sm:$0xf]
            %v631 = vld [vmem:[%s628 + $0x8] sm:$0xf]
            %v632 = vld [vmem:[%s628 + $0xc] sm:$0xf]
            %s633 = scalar_lea.vmem %s6, %s621
            %v634 = vld [vmem:[%s633] sm:$0x1]
            %v636 = vperm.slane %v634, 0
            %v642 = vunpack.c.l.b16 %v629
            %v643 = vunpack.c.l.b16 %v630
            %v644 = vunpack.c.l.b16 %v631
            %v645 = vunpack.c.l.b16 %v632
            %v646 = vpack.c.b16 %v643, %v642
            %v647 = vpack.c.b16 %v645, %v644
            %vm650 = vcmask 261120
            %v652 = vsel %vm650, %v619, 0
            %654 = vmatpush.bf16.msra.mxu0 0
            %655 = vmatpush.bf16.msra.mxu0 0
            %656 = vmatpush.bf16.msra.mxu0 0
            %657 = vmatpush.bf16.msra.mxu0 0
            %658 = vmatpush.bf16.msra.mxu0 0
            %659 = vmatpush.bf16.msra.mxu0 0
            %660 = vmatpush.bf16.msra.mxu0 %v647
            %661 = vmatpush.bf16.msra.mxu0 %v646
            %662 = vmatmul.bf16.gmra.mxu0 %v652
            %v663 = vpop.f32.mrf.mxu0
            %v664 = vadd.f32 %v636, %v663
            %v665 = vpop.f32.mrf.mxu0
            %666 = vdwg.mxu0
            %v667 = vpack.c.bf16 %v664, %v664
            %s668 = smul.addr %s621, 4
            %s669 = scalar_lea.vmem [#allocation2], %s668
            %vm670 = vcmask 60416
            %671 = vst.msk [vmem:[%s669] sm:$0xf] %vm670, %v667
            %s672 = smul.addr %s626, 4
            %s673 = scalar_lea.vmem %s4, %s672
            %v674 = vld [vmem:[%s673] sm:$0xf]
            %v675 = vld [vmem:[%s673 + $0x4] sm:$0xf]
            %v676 = vld [vmem:[%s673 + $0x8] sm:$0xf]
            %v677 = vld [vmem:[%s673 + $0xc] sm:$0xf]
            %s678 = scalar_lea.vmem %s7, %s621
            %v679 = vld [vmem:[%s678] sm:$0x1]
            %v681 = vperm.slane %v679, 0
            %v687 = vunpack.c.l.b16 %v674
            %v688 = vunpack.c.l.b16 %v675
            %v689 = vunpack.c.l.b16 %v676
            %v690 = vunpack.c.l.b16 %v677
            %v691 = vpack.c.b16 %v688, %v687
            %v692 = vpack.c.b16 %v690, %v689
            %695 = vmatpush.bf16.msra.mxu0 0
            %696 = vmatpush.bf16.msra.mxu0 0
            %697 = vmatpush.bf16.msra.mxu0 0
            %698 = vmatpush.bf16.msra.mxu0 0
            %699 = vmatpush.bf16.msra.mxu0 0
            %700 = vmatpush.bf16.msra.mxu0 0
            %701 = vmatpush.bf16.msra.mxu0 %v692
            %702 = vmatpush.bf16.msra.mxu0 %v691
            %703 = vmatmul.bf16.gmra.mxu0 %v652
            %v704 = vpop.f32.mrf.mxu0
            %v705 = vadd.f32 %v681, %v704
            %v706 = vpop.f32.mrf.mxu0
            %707 = vdwg.mxu0
            %v708 = vpack.c.bf16 %v705, %v705
            %s709 = smul.addr %s621, 4
            %s710 = scalar_lea.vmem [#allocation3], %s709
            %711 = vst.msk [vmem:[%s710] sm:$0xf] %vm670, %v708
          $region101: #{tpu_custom_call.1} parent=95 // loop_footer
            %s625 = sadd.s32 1, %s621
          $region102: #{tpu_custom_call.1} parent=95 // loop_footer_branch
            %620 = sbr.rel target = $region98
          $region103: #{tpu_custom_call.1} parent=95 // loop_exit
            _
        $region96: #{tpu_custom_call.1} parent=91 // pred_fallthru
          _
        %v712 = vld [vmem:[%s612] sm:$0xff]
        %v713 = vpack.c.bf16 %v712, %v712
        %v714 = vld [vmem:[%s2] sm:$0xf]
        %v715 = vld [vmem:[%s2 + $0x4] sm:$0xf]
        %v716 = vld [vmem:[%s2 + $0x8] sm:$0xf]
        %v717 = vld [vmem:[%s2 + $0xc] sm:$0xf]
        %v718 = vld [vmem:[%s5] sm:$0x1]
        %v720 = vperm.slane %v718, 0
        %v726 = vunpack.c.l.b16 %v714
        %v727 = vunpack.c.l.b16 %v715
        %v728 = vunpack.c.l.b16 %v716
        %v729 = vunpack.c.l.b16 %v717
        %v730 = vpack.c.b16 %v727, %v726
        %v731 = vpack.c.b16 %v729, %v728
        %vm734 = vcmask 261120
        %v736 = vsel %vm734, %v713, 0
        %738 = vmatpush.bf16.msra.mxu0 0
        %739 = vmatpush.bf16.msra.mxu0 0
        %740 = vmatpush.bf16.msra.mxu0 0
        %741 = vmatpush.bf16.msra.mxu0 0
        %742 = vmatpush.bf16.msra.mxu0 0
        %743 = vmatpush.bf16.msra.mxu0 0
        %744 = vmatpush.bf16.msra.mxu0 %v731
        %745 = vmatpush.bf16.msra.mxu0 %v730
        %746 = vmatmul.bf16.gmra.mxu0 %v736
        %v747 = vpop.f32.mrf.mxu0
        %v748 = vadd.f32 %v720, %v747
        %v749 = vpop.f32.mrf.mxu0
        %750 = vdwg.mxu0
        %v751 = vmul.f32 %v748, 0.35355338
        %v752 = vpack.c.bf16 %v751, %v751
        %v753 = vld [vmem:[#allocation2] sm:$0xf]
        %vm754 = vcmask 64512
        %v756 = vsel %vm754, %v752, 0
        %v759 = vsel %vm754, %v753, 0
        %761 = vmatpush.bf16.xpose.msra.mxu0 0
        %762 = vmatpush.bf16.xpose.msra.mxu0 0
        %763 = vmatpush.bf16.xpose.msra.mxu0 0
        %764 = vmatpush.bf16.xpose.msra.mxu0 0
        %765 = vmatpush.bf16.xpose.msra.mxu0 0
        %766 = vmatpush.bf16.xpose.msra.mxu0 0
        %767 = vmatpush.bf16.xpose.msra.mxu0 0
        %768 = vmatpush.bf16.xpose.msra.mxu0 %v759
        %769 = vmatmul.bf16.gmra.mxu0 %v756
        %v770 = vpop.f32.mrf.mxu0
        %v771 = vadd.f32 0.0, %v770
        %v772 = vpop.f32.mrf.mxu0
        %773 = vdwg.mxu0
        %v774 = vsel %vm754, %v771, -inf
        %775 = vmax.xlane.f32.xlu0 %v774
        %v776 = vpop.xlane.xlu0 %775
        %v777 = vsub.f32 %v771, %v776
        %v778 = vmul.f32 %v777, 1.442695
        %v779 = vpow.pop %v778
        %v780 = vsel %vm754, %v779, 0.0
        %781 = vadd.xlane.f32.xlu0 %v780
        %v782 = vpop.xlane.xlu0 %781
        %v783 = vrcp.pop %v782
        %v784 = vmul.f32 %v779, %v783
        %v785 = vpack.c.bf16 %v784, %v784
        %v786 = vld [vmem:[#allocation3] sm:$0xf]
        %v788 = vsel %vm754, %v785, 0
        %vm790 = vcmask 1043456
        %v792 = vsel %vm790, %v786, 0
        %794 = vmatpush.bf16.msra.mxu0 0
        %795 = vmatpush.bf16.msra.mxu0 0
        %796 = vmatpush.bf16.msra.mxu0 0
        %797 = vmatpush.bf16.msra.mxu0 0
        %798 = vmatpush.bf16.msra.mxu0 0
        %799 = vmatpush.bf16.msra.mxu0 0
        %800 = vmatpush.bf16.msra.mxu0 0
        %801 = vmatpush.bf16.msra.mxu0 %v792
        %802 = vmatmul.bf16.gmra.mxu0 %v788
        %v803 = vpop.f32.mrf.mxu0
        %v804 = vadd.f32 0.0, %v803
        %v805 = vpop.f32.mrf.mxu0
        %806 = vdwg.mxu0
        %v807 = vpack.c.bf16 %v804, %v804
        %vm808 = vcmask 60416
        %809 = vst.msk [vmem:[#allocation4] sm:$0xf] %vm808, %v807
        %s810 = scalar_lea.vmem %s2, 16
        %v811 = vld [vmem:[%s810] sm:$0xf]
        %v812 = vld [vmem:[%s810 + $0x4] sm:$0xf]
        %v813 = vld [vmem:[%s810 + $0x8] sm:$0xf]
        %v814 = vld [vmem:[%s810 + $0xc] sm:$0xf]
        %s815 = scalar_lea.vmem %s5, 1
        %v816 = vld [vmem:[%s815] sm:$0x1]
        %v818 = vperm.slane %v816, 0
        %v824 = vunpack.c.l.b16 %v811
        %v825 = vunpack.c.l.b16 %v812
        %v826 = vunpack.c.l.b16 %v813
        %v827 = vunpack.c.l.b16 %v814
        %v828 = vpack.c.b16 %v825, %v824
        %v829 = vpack.c.b16 %v827, %v826
        %832 = vmatpush.bf16.msra.mxu0 0
        %833 = vmatpush.bf16.msra.mxu0 0
        %834 = vmatpush.bf16.msra.mxu0 0
        %835 = vmatpush.bf16.msra.mxu0 0
        %836 = vmatpush.bf16.msra.mxu0 0
        %837 = vmatpush.bf16.msra.mxu0 0
        %838 = vmatpush.bf16.msra.mxu0 %v829
        %839 = vmatpush.bf16.msra.mxu0 %v828
        %840 = vmatmul.bf16.gmra.mxu0 %v736
        %v841 = vpop.f32.mrf.mxu0
        %v842 = vadd.f32 %v818, %v841
        %v843 = vpop.f32.mrf.mxu0
        %844 = vdwg.mxu0
        %v845 = vmul.f32 %v842, 0.35355338
        %v846 = vpack.c.bf16 %v845, %v845
        %s847 = scalar_lea.vmem [#allocation2], 4
        %v848 = vld [vmem:[%s847] sm:$0xf]
        %v850 = vsel %vm754, %v846, 0
        %v853 = vsel %vm754, %v848, 0
        %855 = vmatpush.bf16.xpose.msra.mxu0 0
        %856 = vmatpush.bf16.xpose.msra.mxu0 0
        %857 = vmatpush.bf16.xpose.msra.mxu0 0
        %858 = vmatpush.bf16.xpose.msra.mxu0 0
        %859 = vmatpush.bf16.xpose.msra.mxu0 0
        %860 = vmatpush.bf16.xpose.msra.mxu0 0
        %861 = vmatpush.bf16.xpose.msra.mxu0 0
        %862 = vmatpush.bf16.xpose.msra.mxu0 %v853
        %863 = vmatmul.bf16.gmra.mxu0 %v850
        %v864 = vpop.f32.mrf.mxu0
        %v865 = vadd.f32 0.0, %v864
        %v866 = vpop.f32.mrf.mxu0
        %867 = vdwg.mxu0
        %v868 = vsel %vm754, %v865, -inf
        %869 = vmax.xlane.f32.xlu0 %v868
        %v870 = vpop.xlane.xlu0 %869
        %v871 = vsub.f32 %v865, %v870
        %v872 = vmul.f32 %v871, 1.442695
        %v873 = vpow.pop %v872
        %v874 = vsel %vm754, %v873, 0.0
        %875 = vadd.xlane.f32.xlu0 %v874
        %v876 = vpop.xlane.xlu0 %875
        %v877 = vrcp.pop %v876
        %v878 = vmul.f32 %v873, %v877
        %v879 = vpack.c.bf16 %v878, %v878
        %s880 = scalar_lea.vmem [#allocation3], 4
        %v881 = vld [vmem:[%s880] sm:$0xf]
        %v883 = vsel %vm754, %v879, 0
        %v886 = vsel %vm790, %v881, 0
        %888 = vmatpush.bf16.msra.mxu0 0
        %889 = vmatpush.bf16.msra.mxu0 0
        %890 = vmatpush.bf16.msra.mxu0 0
        %891 = vmatpush.bf16.msra.mxu0 0
        %892 = vmatpush.bf16.msra.mxu0 0
        %893 = vmatpush.bf16.msra.mxu0 0
        %894 = vmatpush.bf16.msra.mxu0 0
        %895 = vmatpush.bf16.msra.mxu0 %v886
        %896 = vmatmul.bf16.gmra.mxu0 %v883
        %v897 = vpop.f32.mrf.mxu0
        %v898 = vadd.f32 0.0, %v897
        %v899 = vpop.f32.mrf.mxu0
        %900 = vdwg.mxu0
        %v901 = vpack.c.bf16 %v898, %v898
        %903 = vrot.lane.b32.xlu0 %v901, 8
        %v904 = vpop.permute.xlu0 %903
        %vm906 = vcmask 126016
        %907 = vst.msk [vmem:[#allocation4] sm:$0xf] %vm906, %v904
        %s908 = scalar_lea.vmem %s2, 32
        %v909 = vld [vmem:[%s908] sm:$0xf]
        %v910 = vld [vmem:[%s908 + $0x4] sm:$0xf]
        %v911 = vld [vmem:[%s908 + $0x8] sm:$0xf]
        %v912 = vld [vmem:[%s908 + $0xc] sm:$0xf]
        %s913 = scalar_lea.vmem %s5, 2
        %v914 = vld [vmem:[%s913] sm:$0x1]
        %v916 = vperm.slane %v914, 0
        %v922 = vunpack.c.l.b16 %v909
        %v923 = vunpack.c.l.b16 %v910
        %v924 = vunpack.c.l.b16 %v911
        %v925 = vunpack.c.l.b16 %v912
        %v926 = vpack.c.b16 %v923, %v922
        %v927 = vpack.c.b16 %v925, %v924
        %930 = vmatpush.bf16.msra.mxu0 0
        %931 = vmatpush.bf16.msra.mxu0 0
        %932 = vmatpush.bf16.msra.mxu0 0
        %933 = vmatpush.bf16.msra.mxu0 0
        %934 = vmatpush.bf16.msra.mxu0 0
        %935 = vmatpush.bf16.msra.mxu0 0
        %936 = vmatpush.bf16.msra.mxu0 %v927
        %937 = vmatpush.bf16.msra.mxu0 %v926
        %938 = vmatmul.bf16.gmra.mxu0 %v736
        %v939 = vpop.f32.mrf.mxu0
        %v940 = vadd.f32 %v916, %v939
        %v941 = vpop.f32.mrf.mxu0
        %942 = vdwg.mxu0
        %v943 = vmul.f32 %v940, 0.35355338
        %v944 = vpack.c.bf16 %v943, %v943
        %s945 = scalar_lea.vmem [#allocation2], 8
        %v946 = vld [vmem:[%s945] sm:$0xf]
        %v948 = vsel %vm754, %v944, 0
        %v951 = vsel %vm754, %v946, 0
        %953 = vmatpush.bf16.xpose.msra.mxu0 0
        %954 = vmatpush.bf16.xpose.msra.mxu0 0
        %955 = vmatpush.bf16.xpose.msra.mxu0 0
        %956 = vmatpush.bf16.xpose.msra.mxu0 0
        %957 = vmatpush.bf16.xpose.msra.mxu0 0
        %958 = vmatpush.bf16.xpose.msra.mxu0 0
        %959 = vmatpush.bf16.xpose.msra.mxu0 0
        %960 = vmatpush.bf16.xpose.msra.mxu0 %v951
        %961 = vmatmul.bf16.gmra.mxu0 %v948
        %v962 = vpop.f32.mrf.mxu0
        %v963 = vadd.f32 0.0, %v962
        %v964 = vpop.f32.mrf.mxu0
        %965 = vdwg.mxu0
        %v966 = vsel %vm754, %v963, -inf
        %967 = vmax.xlane.f32.xlu0 %v966
        %v968 = vpop.xlane.xlu0 %967
        %v969 = vsub.f32 %v963, %v968
        %v970 = vmul.f32 %v969, 1.442695
        %v971 = vpow.pop %v970
        %v972 = vsel %vm754, %v971, 0.0
        %973 = vadd.xlane.f32.xlu0 %v972
        %v974 = vpop.xlane.xlu0 %973
        %v975 = vrcp.pop %v974
        %v976 = vmul.f32 %v971, %v975
        %v977 = vpack.c.bf16 %v976, %v976
        %s978 = scalar_lea.vmem [#allocation3], 8
        %v979 = vld [vmem:[%s978] sm:$0xf]
        %v981 = vsel %vm754, %v977, 0
        %v984 = vsel %vm790, %v979, 0
        %986 = vmatpush.bf16.msra.mxu0 0
        %987 = vmatpush.bf16.msra.mxu0 0
        %988 = vmatpush.bf16.msra.mxu0 0
        %989 = vmatpush.bf16.msra.mxu0 0
        %990 = vmatpush.bf16.msra.mxu0 0
        %991 = vmatpush.bf16.msra.mxu0 0
        %992 = vmatpush.bf16.msra.mxu0 0
        %993 = vmatpush.bf16.msra.mxu0 %v984
        %994 = vmatmul.bf16.gmra.mxu0 %v981
        %v995 = vpop.f32.mrf.mxu0
        %v996 = vadd.f32 0.0, %v995
        %v997 = vpop.f32.mrf.mxu0
        %998 = vdwg.mxu0
        %v999 = vpack.c.bf16 %v996, %v996
        %1001 = vrot.lane.b32.xlu0 %v999, 16
        %v1002 = vpop.permute.xlu0 %1001
        %vm1004 = vcmask 191616
        %1005 = vst.msk [vmem:[#allocation4] sm:$0xf] %vm1004, %v1002
        %s1006 = scalar_lea.vmem %s2, 48
        %v1007 = vld [vmem:[%s1006] sm:$0xf]
        %v1008 = vld [vmem:[%s1006 + $0x4] sm:$0xf]
        %v1009 = vld [vmem:[%s1006 + $0x8] sm:$0xf]
        %v1010 = vld [vmem:[%s1006 + $0xc] sm:$0xf]
        %s1011 = scalar_lea.vmem %s5, 3
        %v1012 = vld [vmem:[%s1011] sm:$0x1]
        %v1014 = vperm.slane %v1012, 0
        %v1020 = vunpack.c.l.b16 %v1007
        %v1021 = vunpack.c.l.b16 %v1008
        %v1022 = vunpack.c.l.b16 %v1009
        %v1023 = vunpack.c.l.b16 %v1010
        %v1024 = vpack.c.b16 %v1021, %v1020
        %v1025 = vpack.c.b16 %v1023, %v1022
        %1028 = vmatpush.bf16.msra.mxu0 0
        %1029 = vmatpush.bf16.msra.mxu0 0
        %1030 = vmatpush.bf16.msra.mxu0 0
        %1031 = vmatpush.bf16.msra.mxu0 0
        %1032 = vmatpush.bf16.msra.mxu0 0
        %1033 = vmatpush.bf16.msra.mxu0 0
        %1034 = vmatpush.bf16.msra.mxu0 %v1025
        %1035 = vmatpush.bf16.msra.mxu0 %v1024
        %1036 = vmatmul.bf16.gmra.mxu0 %v736
        %v1037 = vpop.f32.mrf.mxu0
        %v1038 = vadd.f32 %v1014, %v1037
        %v1039 = vpop.f32.mrf.mxu0
        %1040 = vdwg.mxu0
        %v1041 = vmul.f32 %v1038, 0.35355338
        %v1042 = vpack.c.bf16 %v1041, %v1041
        %s1043 = scalar_lea.vmem [#allocation2], 12
        %v1044 = vld [vmem:[%s1043] sm:$0xf]
        %v1046 = vsel %vm754, %v1042, 0
        %v1049 = vsel %vm754, %v1044, 0
        %1051 = vmatpush.bf16.xpose.msra.mxu0 0
        %1052 = vmatpush.bf16.xpose.msra.mxu0 0
        %1053 = vmatpush.bf16.xpose.msra.mxu0 0
        %1054 = vmatpush.bf16.xpose.msra.mxu0 0
        %1055 = vmatpush.bf16.xpose.msra.mxu0 0
        %1056 = vmatpush.bf16.xpose.msra.mxu0 0
        %1057 = vmatpush.bf16.xpose.msra.mxu0 0
        %1058 = vmatpush.bf16.xpose.msra.mxu0 %v1049
        %1059 = vmatmul.bf16.gmra.mxu0 %v1046
        %v1060 = vpop.f32.mrf.mxu0
        %v1061 = vadd.f32 0.0, %v1060
        %v1062 = vpop.f32.mrf.mxu0
        %1063 = vdwg.mxu0
        %v1064 = vsel %vm754, %v1061, -inf
        %1065 = vmax.xlane.f32.xlu0 %v1064
        %v1066 = vpop.xlane.xlu0 %1065
        %v1067 = vsub.f32 %v1061, %v1066
        %v1068 = vmul.f32 %v1067, 1.442695
        %v1069 = vpow.pop %v1068
        %v1070 = vsel %vm754, %v1069, 0.0
        %1071 = vadd.xlane.f32.xlu0 %v1070
        %v1072 = vpop.xlane.xlu0 %1071
        %v1073 = vrcp.pop %v1072
        %v1074 = vmul.f32 %v1069, %v1073
        %v1075 = vpack.c.bf16 %v1074, %v1074
        %s1076 = scalar_lea.vmem [#allocation3], 12
        %v1077 = vld [vmem:[%s1076] sm:$0xf]
        %v1079 = vsel %vm754, %v1075, 0
        %v1082 = vsel %vm790, %v1077, 0
        %1084 = vmatpush.bf16.msra.mxu0 0
        %1085 = vmatpush.bf16.msra.mxu0 0
        %1086 = vmatpush.bf16.msra.mxu0 0
        %1087 = vmatpush.bf16.msra.mxu0 0
        %1088 = vmatpush.bf16.msra.mxu0 0
        %1089 = vmatpush.bf16.msra.mxu0 0
        %1090 = vmatpush.bf16.msra.mxu0 0
        %1091 = vmatpush.bf16.msra.mxu0 %v1082
        %1092 = vmatmul.bf16.gmra.mxu0 %v1079
        %v1093 = vpop.f32.mrf.mxu0
        %v1094 = vadd.f32 0.0, %v1093
        %v1095 = vpop.f32.mrf.mxu0
        %1096 = vdwg.mxu0
        %v1097 = vpack.c.bf16 %v1094, %v1094
        %1099 = vrot.lane.b32.xlu0 %v1097, 24
        %v1100 = vpop.permute.xlu0 %1099
        %vm1102 = vcmask 257216
        %1103 = vst.msk [vmem:[#allocation4] sm:$0xf] %vm1102, %v1100
        %v1104 = vld [vmem:[#allocation4] sm:$0xf]
        %v1105 = vld [vmem:[%s8] sm:$0xf]
        %v1106 = vld [vmem:[%s8 + $0x4] sm:$0xf]
        %v1107 = vld [vmem:[%s8 + $0x8] sm:$0xf]
        %v1108 = vld [vmem:[%s8 + $0xc] sm:$0xf]
        %v1109 = vld [vmem:[%s9] sm:$0x1]
        %v1111 = vperm.slane %v1109, 0
        %v1117 = vunpack.c.l.b16 %v1105
        %v1118 = vunpack.c.l.b16 %v1106
        %v1119 = vunpack.c.l.b16 %v1107
        %v1120 = vunpack.c.l.b16 %v1108
        %v1121 = vpack.c.b16 %v1118, %v1117
        %v1122 = vpack.c.b16 %v1120, %v1119
        %v1126 = vsel %vm734, %v1104, 0
        %1128 = vmatpush.bf16.msra.mxu0 0
        %1129 = vmatpush.bf16.msra.mxu0 0
        %1130 = vmatpush.bf16.msra.mxu0 0
        %1131 = vmatpush.bf16.msra.mxu0 0
        %1132 = vmatpush.bf16.msra.mxu0 0
        %1133 = vmatpush.bf16.msra.mxu0 0
        %1134 = vmatpush.bf16.msra.mxu0 %v1122
        %1135 = vmatpush.bf16.msra.mxu0 %v1121
        %1136 = vmatmul.bf16.gmra.mxu0 %v1126
        %v1137 = vpop.f32.mrf.mxu0
        %v1138 = vadd.f32 %v1111, %v1137
        %v1139 = vpop.f32.mrf.mxu0
        %1140 = vdwg.mxu0
        %v1141 = vadd.f32 %v712, %v1138
        %v1142 = vmul.f32 %v1141, %v1141
        %v1143 = vsel %vm734, %v1142, 0.0
        %1144 = vadd.xlane.f32.xlu0 %v1143
        %v1145 = vpop.xlane.xlu0 %1144
        %v1146 = vrcp.pop 32.0
        %v1147 = vmul.f32 32.0, %v1146
        %v1148 = vsub.f32 1.0, %v1147
        %v1149 = vmul.f32 %v1146, %v1148
        %v1150 = vadd.f32 %v1146, %v1149
        %vm1151 = vweird.f32 %v1146
        %v1152 = vsel %vm1151, %v1146, %v1150
        %v1153 = vmul.f32 %v1145, %v1152
        %v1154 = vadd.f32 %v1153, 1e-05
        %v1155 = vrsqrt.pop %v1154
        %v1156 = vmul.f32 %v1155, %v1154
        %v1157 = vmul.f32 %v1156, %v1155
        %v1158 = vmul.f32 0.5, %v1157
        %v1159 = vsub.f32 1.5, %v1158
        %v1160 = vmul.f32 %v1155, %v1159
        %vm1161 = vweird.f32 %v1154
        %vm1162 = vweird.f32 %v1155
        %vm1163 = vmor %vm1161, %vm1162
        %v1164 = vsel %vm1163, %v1155, %v1160
        %v1165 = vmul.f32 %v1141, %v1164
        %v1166 = vld [vmem:[%s10] sm:$0x1]
        %v1168 = vperm.slane %v1166, 0
        %v1170 = vmul.f32 %v1165, %v1168
        %v1171 = vld [vmem:[%s11] sm:$0x1]
        %v1173 = vperm.slane %v1171, 0
        %v1175 = vadd.f32 %v1170, %v1173
        %v1176 = vpack.c.bf16 %v1175, %v1175
        %v1177 = vld [vmem:[%s12] sm:$0xf]
        %v1178 = vld [vmem:[%s12 + $0x4] sm:$0xf]
        %v1179 = vld [vmem:[%s12 + $0x8] sm:$0xf]
        %v1180 = vld [vmem:[%s12 + $0xc] sm:$0xf]
        %v1181 = vld [vmem:[%s13] sm:$0x1]
        %v1183 = vperm.slane %v1181, 0
        %v1189 = vunpack.c.l.b16 %v1177
        %v1190 = vunpack.c.l.b16 %v1178
        %v1191 = vunpack.c.l.b16 %v1179
        %v1192 = vunpack.c.l.b16 %v1180
        %v1193 = vpack.c.b16 %v1190, %v1189
        %v1194 = vpack.c.b16 %v1192, %v1191
        %v1198 = vsel %vm734, %v1176, 0
        %1200 = vmatpush.bf16.msra.mxu0 0
        %1201 = vmatpush.bf16.msra.mxu0 0
        %1202 = vmatpush.bf16.msra.mxu0 0
        %1203 = vmatpush.bf16.msra.mxu0 0
        %1204 = vmatpush.bf16.msra.mxu0 0
        %1205 = vmatpush.bf16.msra.mxu0 0
        %1206 = vmatpush.bf16.msra.mxu0 %v1194
        %1207 = vmatpush.bf16.msra.mxu0 %v1193
        %1208 = vmatmul.bf16.gmra.mxu0 %v1198
        %v1209 = vpop.f32.mrf.mxu0
        %v1210 = vadd.f32 %v1183, %v1209
        %v1211 = vpop.f32.mrf.mxu0
        %1212 = vdwg.mxu0
        %v1213 = vmax.f32 %v1210, 0.0
        %v1214 = vpack.c.bf16 %v1213, %v1213
        %v1215 = vld [vmem:[%s14] sm:$0xf]
        %v1216 = vld [vmem:[%s14 + $0x4] sm:$0xf]
        %v1217 = vld [vmem:[%s14 + $0x8] sm:$0xf]
        %v1218 = vld [vmem:[%s14 + $0xc] sm:$0xf]
        %v1219 = vld [vmem:[%s14 + $0x10] sm:$0xf]
        %v1220 = vld [vmem:[%s14 + $0x14] sm:$0xf]
        %v1221 = vld [vmem:[%s14 + $0x18] sm:$0xf]
        %v1222 = vld [vmem:[%s14 + $0x1c] sm:$0xf]
        %v1223 = vld [vmem:[%s15] sm:$0x1]
        %v1225 = vperm.slane %v1223, 0
        %v1235 = vunpack.c.l.b16 %v1215
        %v1236 = vunpack.c.l.b16 %v1216
        %v1237 = vunpack.c.l.b16 %v1217
        %v1238 = vunpack.c.l.b16 %v1218
        %v1239 = vunpack.c.l.b16 %v1219
        %v1240 = vunpack.c.l.b16 %v1220
        %v1241 = vunpack.c.l.b16 %v1221
        %v1242 = vunpack.c.l.b16 %v1222
        %v1243 = vpack.c.b16 %v1236, %v1235
        %v1244 = vpack.c.b16 %v1238, %v1237
        %v1245 = vpack.c.b16 %v1240, %v1239
        %v1246 = vpack.c.b16 %v1242, %v1241
        %vm1251 = vcmask 523264
        %v1253 = vsel %vm1251, %v1214, 0
        %1255 = vmatpush.bf16.msra.mxu0 0
        %1256 = vmatpush.bf16.msra.mxu0 0
        %1257 = vmatpush.bf16.msra.mxu0 0
        %1258 = vmatpush.bf16.msra.mxu0 0
        %1259 = vmatpush.bf16.msra.mxu0 %v1246
        %1260 = vmatpush.bf16.msra.mxu0 %v1245
        %1261 = vmatpush.bf16.msra.mxu0 %v1244
        %1262 = vmatpush.bf16.msra.mxu0 %v1243
        %1263 = vmatmul.bf16.gmra.mxu0 %v1253
        %v1264 = vpop.f32.mrf.mxu0
        %v1265 = vadd.f32 %v1225, %v1264
        %v1266 = vpop.f32.mrf.mxu0
        %1267 = vdwg.mxu0
        %v1268 = vadd.f32 %v1175, %v1265
        %v1269 = vmul.f32 %v1268, %v1268
        %v1270 = vsel %vm734, %v1269, 0.0
        %1271 = vadd.xlane.f32.xlu0 %v1270
        %v1272 = vpop.xlane.xlu0 %1271
        %v1273 = vmul.f32 %v1272, %v1152
        %v1274 = vadd.f32 %v1273, 1e-05
        %v1275 = vrsqrt.pop %v1274
        %v1276 = vmul.f32 %v1275, %v1274
        %v1277 = vmul.f32 %v1276, %v1275
        %v1278 = vmul.f32 0.5, %v1277
        %v1279 = vsub.f32 1.5, %v1278
        %v1280 = vmul.f32 %v1275, %v1279
        %vm1281 = vweird.f32 %v1274
        %vm1282 = vweird.f32 %v1275
        %vm1283 = vmor %vm1281, %vm1282
        %v1284 = vsel %vm1283, %v1275, %v1280
        %v1285 = vmul.f32 %v1268, %v1284
        %v1286 = vld [vmem:[%s16] sm:$0x1]
        %v1288 = vperm.slane %v1286, 0
        %v1290 = vmul.f32 %v1285, %v1288
        %v1291 = vld [vmem:[%s17] sm:$0x1]
        %v1293 = vperm.slane %v1291, 0
        %v1295 = vadd.f32 %v1290, %v1293
        %1296 = vst.msk [vmem:[%s601] sm:$0xff] %vm734, %v1295
        %s1297 = sand.u32 %s444, 1
        %s1298 = scalar_lea.sflag [#allocation6], %s1297
        %s1299 = sand.u32 %s444, 1
        %s1300 = smul.addr %s1299, 8
        %s1301 = scalar_lea.vmem [#allocation5], %s1300
        // Predicated region
        $region104: #{tpu_custom_call.1} parent=91 // pred_check
          %p1302 = pneg %p454
        $region105: #{tpu_custom_call.1} parent=91 // pred_check_branch
          %1304 = sbr.rel (%p1302) target = $region107
        $region106: #{tpu_custom_call.1} parent=91 // pred_region
          %1306 = vsyncadd %s1298, 0
          %s1307 = sadd.s32 %s37, %s36
          %s1308 = smul.addr %s1307, 8
          %s1309 = scalar_lea.hbm %s18, %s1308
          %s1311 = sshll.u32 %s1301, 4
          %s1312 = int_to_ptr.vmem [resolvable:$true] %s1311
          %s1313 = sshll.u32 %s1309, 4
          %s1314 = int_to_ptr.hbm [resolvable:$true] %s1313
          %1316 = dma.vmem_to_hbm [thread:$0]  %s1312, 128, %s1314, %s1298
        $region107: #{tpu_custom_call.1} parent=91 // pred_fallthru
          _
      $region92: #{tpu_custom_call.1} parent=5 // pred_fallthru
        _
      %p1317 = scmp.le.s32.totalorder 2, %s27
      // Predicated region
      $region108: #{tpu_custom_call.1} parent=5 // pred_check
        %p1318 = pneg %p1317
      $region109: #{tpu_custom_call.1} parent=5 // pred_check_branch
        %1320 = sbr.rel (%p1318) target = $region111
      $region110: #{tpu_custom_call.1} parent=5 // pred_region
        %s1321 = ssub.s32 %s27, 2
        // Predicated region
        $region112: #{tpu_custom_call.1} parent=110 // pred_check
          %p1322 = pneg %p460
        $region113: #{tpu_custom_call.1} parent=110 // pred_check_branch
          %1324 = sbr.rel (%p1322) target = $region115
        $region114: #{tpu_custom_call.1} parent=110 // pred_region
          %s1325 = sand.u32 %s445, 1
          %s1326 = scalar_lea.sflag [#allocation6], %s1325
          %s1327 = sand.u32 %s445, 1
          %s1328 = smul.addr %s1327, 8
          %s1329 = scalar_lea.vmem [#allocation5], %s1328
          %1331 = dma.done %s1326, 128
        $region115: #{tpu_custom_call.1} parent=110 // pred_fallthru
          _
      $region111: #{tpu_custom_call.1} parent=5 // pred_fallthru
        _
    $region6: #{tpu_custom_call.1} parent=1 // loop_footer
      %s31 = sadd.s32 1, %s27
    $region7: #{tpu_custom_call.1} parent=1 // loop_footer_branch
      %26 = sbr.rel target = $region3
    $region8: #{tpu_custom_call.1} parent=1 // loop_exit
      _
    %1332 = vsyncpa [#allocation6], 1
    %s1333 = scalar_lea.sflag [#allocation6], 1
    %1334 = vsyncpa %s1333, 1

// kernel: tpu_custom_call.1
$region0: #{tpu_custom_call.1}
  #allocation0 [shape = 'u32[]', space=smem, size = 0x4, offset = 0x4, fixed_abs, tag = 'smem constant byte address 0x4 - core index']
  #allocation1 [shape = 'u32[72,128]{1,0:T(1,128)}', space=vmem, size = 0x9000, scoped, tag = 'internal scratch']
  #allocation2 [shape = 'bf16[4,8,8]{2,1,0:T(8,128)(2,1)}', space=vmem, size = 0x2000, scoped, tag = 'scratch operand']
  #allocation3 [shape = 'bf16[4,8,8]{2,1,0:T(8,128)(2,1)}', space=vmem, size = 0x2000, scoped, tag = 'scratch operand']
  #allocation4 [shape = 'bf16[8,32]{1,0:T(8,128)(2,1)}', space=vmem, size = 0x800, scoped, tag = 'scratch operand']
  %s0 = inlined_call_operand.vmem [shape: f32[2,8,32], index: 0, kind: input, shape index: {}]
  %s1 = inlined_call_operand.vmem [shape: f32[2,8,32], index: 1, kind: input, shape index: {}]
  %s2 = inlined_call_operand.vmem [shape: bf16[4,32,8], index: 2, kind: input, shape index: {}]
  %s3 = inlined_call_operand.vmem [shape: bf16[4,32,8], index: 3, kind: input, shape index: {}]
  %s4 = inlined_call_operand.vmem [shape: bf16[4,32,8], index: 4, kind: input, shape index: {}]
  %s5 = inlined_call_operand.vmem [shape: f32[4,1,8], index: 5, kind: input, shape index: {}]
  %s6 = inlined_call_operand.vmem [shape: f32[4,1,8], index: 6, kind: input, shape index: {}]
  %s7 = inlined_call_operand.vmem [shape: f32[4,1,8], index: 7, kind: input, shape index: {}]
  %s8 = inlined_call_operand.vmem [shape: bf16[32,32], index: 8, kind: input, shape index: {}]
  %s9 = inlined_call_operand.vmem [shape: f32[1,32], index: 9, kind: input, shape index: {}]
  %s10 = inlined_call_operand.vmem [shape: f32[1,32], index: 10, kind: input, shape index: {}]
  %s11 = inlined_call_operand.vmem [shape: f32[1,32], index: 11, kind: input, shape index: {}]
  %s12 = inlined_call_operand.vmem [shape: bf16[1,32,64], index: 12, kind: input, shape index: {}]
  %s13 = inlined_call_operand.vmem [shape: f32[1,1,64], index: 13, kind: input, shape index: {}]
  %s14 = inlined_call_operand.vmem [shape: bf16[1,64,32], index: 14, kind: input, shape index: {}]
  %s15 = inlined_call_operand.vmem [shape: f32[1,32], index: 15, kind: input, shape index: {}]
  %s16 = inlined_call_operand.vmem [shape: f32[1,32], index: 16, kind: input, shape index: {}]
  %s17 = inlined_call_operand.vmem [shape: f32[1,32], index: 17, kind: input, shape index: {}]
  %s18 = inlined_call_operand.hbm [shape: f32[2,8,32], index: 18, kind: output, shape index: {}]
  %s19 = sld [smem:[#allocation0]]
  $region116: #{tpu_custom_call.1} parent=0
    _
  %s21 = ssub.s32 1, %s19
  %s22 = scalar_select 0, %s21, %s19
  $region1: #{tpu_custom_call.1} parent=0
    #allocation5 [shape = 'u8[8192]{0}', space=vmem, size = 0x2000, scoped, tag = 'output window, operand 0']
    #allocation6 [shape = 's32[2]{0}', space=sflag, size = 0x8, scoped, tag = 'scoped memory for tpu_custom_call.1']
    %23 = vsyncpa [#allocation6], 0
    %s24 = scalar_lea.sflag [#allocation6], 1
    %25 = vsyncpa %s24, 0
    loop: start=0, step=1, limit=4
    $region2: #{tpu_custom_call.1} parent=1 // loop_pre_header
      _
    $region3: #{tpu_custom_call.1} parent=1 // loop_header
      %s27 = sphi 0, %s31
      %p28 = scmp.ge.s32.totalorder %s27, 4
      %s34 = sphi 0, %s46
      %s35 = sphi 0, %s42
      %s36 = sphi 0, %s34
      %s37 = sphi 0, %s35
      %s38 = sphi 0, %s36
      %s39 = sphi 0, %s37
      %s49 = sphi 0, %s51
      %s52 = sphi 0, %s49
      %s53 = sphi 0, %s52
      %s69 = sphi 0, %s53
      %s77 = sphi 0, %s79
      %s80 = sphi 0, %s77
      %s81 = sphi 0, %s80
      %s97 = sphi 0, %s81
      %s101 = sphi 0, %s101
      %s103 = sphi 0, %s101
      %s104 = sphi 0, %s103
      %s118 = sphi 0, %s104
      %s122 = sphi 0, %s122
      %s124 = sphi 0, %s122
      %s125 = sphi 0, %s124
      %s139 = sphi 0, %s125
      %s143 = sphi 0, %s143
      %s145 = sphi 0, %s143
      %s146 = sphi 0, %s145
      %s160 = sphi 0, %s146
      %s164 = sphi 0, %s164
      %s166 = sphi 0, %s164
      %s167 = sphi 0, %s166
      %s181 = sphi 0, %s167
      %s185 = sphi 0, %s185
      %s187 = sphi 0, %s185
      %s188 = sphi 0, %s187
      %s202 = sphi 0, %s188
      %s206 = sphi 0, %s206
      %s208 = sphi 0, %s206
      %s209 = sphi 0, %s208
      %s223 = sphi 0, %s209
      %s227 = sphi 0, %s227
      %s229 = sphi 0, %s227
      %s230 = sphi 0, %s229
      %s244 = sphi 0, %s230
      %s248 = sphi 0, %s248
      %s250 = sphi 0, %s248
      %s251 = sphi 0, %s250
      %s265 = sphi 0, %s251
      %s269 = sphi 0, %s269
      %s271 = sphi 0, %s269
      %s272 = sphi 0, %s271
      %s286 = sphi 0, %s272
      %s290 = sphi 0, %s290
      %s292 = sphi 0, %s290
      %s293 = sphi 0, %s292
      %s307 = sphi 0, %s293
      %s311 = sphi 0, %s311
      %s313 = sphi 0, %s311
      %s314 = sphi 0, %s313
      %s328 = sphi 0, %s314
      %s332 = sphi 0, %s332
      %s334 = sphi 0, %s332
      %s335 = sphi 0, %s334
      %s349 = sphi 0, %s335
      %s353 = sphi 0, %s353
      %s355 = sphi 0, %s353
      %s356 = sphi 0, %s355
      %s370 = sphi 0, %s356
      %s374 = sphi 0, %s374
      %s376 = sphi 0, %s374
      %s377 = sphi 0, %s376
      %s391 = sphi 0, %s377
      %s395 = sphi 0, %s395
      %s397 = sphi 0, %s395
      %s398 = sphi 0, %s397
      %s412 = sphi 0, %s398
      %s416 = sphi 0, %s416
      %s418 = sphi 0, %s416
      %s419 = sphi 0, %s418
      %s433 = sphi 0, %s419
      %s441 = sphi 0, %s443
      %s444 = sphi 0, %s441
      %s445 = sphi 0, %s444
      %s461 = sphi 0, %s445
    $region4: #{tpu_custom_call.1} parent=1 // loop_header_branch
      %30 = sbr.rel (%p28) target = $region8
    $region5: #{tpu_custom_call.1} parent=1 // loop_body
      %s32 = ssub.s32 %s27, 1
      %s33 = ssub.s32 %s27, 2
      %s40 = sadd.s32 1, %s35
      %p41 = scmp.ge.s32.totalorder %s40, 1
      %s42 = scalar_select %p41, 0, %s40
      %s43 = sadd.s32 1, %s34
      %s44 = scalar_select %p41, %s43, %s34
      %p45 = scmp.ge.s32.totalorder %s44, 2
      %s46 = scalar_select %p45, 0, %s44
      %s47 = ssub.s32 %s34, %s46
      %p48 = scmp.eq.s32.totalorder %s47, 0
      %s50 = sadd.s32 %s49, 1
      %s51 = scalar_select %p48, %s49, %s50
      %p54 = pneg %p48
      %p55 = scmp.eq.s32.totalorder %s27, 1
      %p56 = por %p54, %p55
      %p57 = scmp.ne.s32.totalorder %s49, %s52
      %p58 = scmp.eq.s32.totalorder %s27, 0
      %p59 = por %p57, %p58
      %p60 = scmp.ne.s32.totalorder %s49, %s52
      %p61 = scmp.eq.s32.totalorder %s32, 1
      %p62 = por %p60, %p61
      %p63 = scmp.ne.s32.totalorder %s52, %s53
      %p64 = scmp.eq.s32.totalorder %s32, 0
      %p65 = por %p63, %p64
      %p66 = scmp.ne.s32.totalorder %s52, %s53
      %p67 = scmp.eq.s32.totalorder %s33, 1
      %p68 = por %p66, %p67
      %p70 = scmp.ne.s32.totalorder %s53, %s69
      %p71 = scmp.eq.s32.totalorder %s33, 0
      %p72 = por %p70, %p71
      %s73 = ssub.s32 %s34, %s46
      %s74 = ssub.s32 %s35, %s42
      %s75 = sor.u32 %s73, %s74
      %p76 = scmp.eq.s32.totalorder %s75, 0
      %s78 = sadd.s32 %s77, 1
      %s79 = scalar_select %p76, %s77, %s78
      %p82 = pneg %p76
      %p83 = scmp.eq.s32.totalorder %s27, 1
      %p84 = por %p82, %p83
      %p85 = scmp.ne.s32.totalorder %s77, %s80
      %p86 = scmp.eq.s32.totalorder %s27, 0
      %p87 = por %p85, %p86
      %p88 = scmp.ne.s32.totalorder %s77, %s80
      %p89 = scmp.eq.s32.totalorder %s32, 1
      %p90 = por %p88, %p89
      %p91 = scmp.ne.s32.totalorder %s80, %s81
      %p92 = scmp.eq.s32.totalorder %s32, 0
      %p93 = por %p91, %p92
      %p94 = scmp.ne.s32.totalorder %s80, %s81
      %p95 = scmp.eq.s32.totalorder %s33, 1
      %p96 = por %p94, %p95
      %p98 = scmp.ne.s32.totalorder %s81, %s97
      %p99 = scmp.eq.s32.totalorder %s33, 0
      %p100 = por %p98, %p99
      %s102 = sadd.s32 %s101, 1
      %p105 = scmp.eq.s32.totalorder %s27, 1
      %p106 = scmp.ne.s32.totalorder %s101, %s103
      %p107 = scmp.eq.s32.totalorder %s27, 0
      %p108 = por %p106, %p107
      %p109 = scmp.ne.s32.totalorder %s101, %s103
      %p110 = scmp.eq.s32.totalorder %s32, 1
      %p111 = por %p109, %p110
      %p112 = scmp.ne.s32.totalorder %s103, %s104
      %p113 = scmp.eq.s32.totalorder %s32, 0
      %p114 = por %p112, %p113
      %p115 = scmp.ne.s32.totalorder %s103, %s104
      %p116 = scmp.eq.s32.totalorder %s33, 1
      %p117 = por %p115, %p116
      %p119 = scmp.ne.s32.totalorder %s104, %s118
      %p120 = scmp.eq.s32.totalorder %s33, 0
      %p121 = por %p119, %p120
      %s123 = sadd.s32 %s122, 1
      %p126 = scmp.eq.s32.totalorder %s27, 1
      %p127 = scmp.ne.s32.totalorder %s122, %s124
      %p128 = scmp.eq.s32.totalorder %s27, 0
      %p129 = por %p127, %p128
      %p130 = scmp.ne.s32.totalorder %s122, %s124
      %p131 = scmp.eq.s32.totalorder %s32, 1
      %p132 = por %p130, %p131
      %p133 = scmp.ne.s32.totalorder %s124, %s125
      %p134 = scmp.eq.s32.totalorder %s32, 0
      %p135 = por %p133, %p134
      %p136 = scmp.ne.s32.totalorder %s124, %s125
      %p137 = scmp.eq.s32.totalorder %s33, 1
      %p138 = por %p136, %p137
      %p140 = scmp.ne.s32.totalorder %s125, %s139
      %p141 = scmp.eq.s32.totalorder %s33, 0
      %p142 = por %p140, %p141
      %s144 = sadd.s32 %s143, 1
      %p147 = scmp.eq.s32.totalorder %s27, 1
      %p148 = scmp.ne.s32.totalorder %s143, %s145
      %p149 = scmp.eq.s32.totalorder %s27, 0
      %p150 = por %p148, %p149
      %p151 = scmp.ne.s32.totalorder %s143, %s145
      %p152 = scmp.eq.s32.totalorder %s32, 1
      %p153 = por %p151, %p152
      %p154 = scmp.ne.s32.totalorder %s145, %s146
      %p155 = scmp.eq.s32.totalorder %s32, 0
      %p156 = por %p154, %p155
      %p157 = scmp.ne.s32.totalorder %s145, %s146
      %p158 = scmp.eq.s32.totalorder %s33, 1
      %p159 = por %p157, %p158
      %p161 = scmp.ne.s32.totalorder %s146, %s160
      %p162 = scmp.eq.s32.totalorder %s33, 0
      %p163 = por %p161, %p162
      %s165 = sadd.s32 %s164, 1
      %p168 = scmp.eq.s32.totalorder %s27, 1
      %p169 = scmp.ne.s32.totalorder %s164, %s166
      %p170 = scmp.eq.s32.totalorder %s27, 0
      %p171 = por %p169, %p170
      %p172 = scmp.ne.s32.totalorder %s164, %s166
      %p173 = scmp.eq.s32.totalorder %s32, 1
      %p174 = por %p172, %p173
      %p175 = scmp.ne.s32.totalorder %s166, %s167
      %p176 = scmp.eq.s32.totalorder %s32, 0
      %p177 = por %p175, %p176
      %p178 = scmp.ne.s32.totalorder %s166, %s167
      %p179 = scmp.eq.s32.totalorder %s33, 1
      %p180 = por %p178, %p179
      %p182 = scmp.ne.s32.totalorder %s167, %s181
      %p183 = scmp.eq.s32.totalorder %s33, 0
      %p184 = por %p182, %p183
      %s186 = sadd.s32 %s185, 1
      %p189 = scmp.eq.s32.totalorder %s27, 1
      %p190 = scmp.ne.s32.totalorder %s185, %s187
      %p191 = scmp.eq.s32.totalorder %s27, 0
      %p192 = por %p190, %p191
      %p193 = scmp.ne.s32.totalorder %s185, %s187
      %p194 = scmp.eq.s32.totalorder %s32, 1
      %p195 = por %p193, %p194
      %p196 = scmp.ne.s32.totalorder %s187, %s188
      %p197 = scmp.eq.s32.totalorder %s32, 0
      %p198 = por %p196, %p197
      %p199 = scmp.ne.s32.totalorder %s187, %s188
      %p200 = scmp.eq.s32.totalorder %s33, 1
      %p201 = por %p199, %p200
      %p203 = scmp.ne.s32.totalorder %s188, %s202
      %p204 = scmp.eq.s32.totalorder %s33, 0
      %p205 = por %p203, %p204
      %s207 = sadd.s32 %s206, 1
      %p210 = scmp.eq.s32.totalorder %s27, 1
      %p211 = scmp.ne.s32.totalorder %s206, %s208
      %p212 = scmp.eq.s32.totalorder %s27, 0
      %p213 = por %p211, %p212
      %p214 = scmp.ne.s32.totalorder %s206, %s208
      %p215 = scmp.eq.s32.totalorder %s32, 1
      %p216 = por %p214, %p215
      %p217 = scmp.ne.s32.totalorder %s208, %s209
      %p218 = scmp.eq.s32.totalorder %s32, 0
      %p219 = por %p217, %p218
      %p220 = scmp.ne.s32.totalorder %s208, %s209
      %p221 = scmp.eq.s32.totalorder %s33, 1
      %p222 = por %p220, %p221
      %p224 = scmp.ne.s32.totalorder %s209, %s223
      %p225 = scmp.eq.s32.totalorder %s33, 0
      %p226 = por %p224, %p225
      %s228 = sadd.s32 %s227, 1
      %p231 = scmp.eq.s32.totalorder %s27, 1
      %p232 = scmp.ne.s32.totalorder %s227, %s229
      %p233 = scmp.eq.s32.totalorder %s27, 0
      %p234 = por %p232, %p233
      %p235 = scmp.ne.s32.totalorder %s227, %s229
      %p236 = scmp.eq.s32.totalorder %s32, 1
      %p237 = por %p235, %p236
      %p238 = scmp.ne.s32.totalorder %s229, %s230
      %p239 = scmp.eq.s32.totalorder %s32, 0
      %p240 = por %p238, %p239
      %p241 = scmp.ne.s32.totalorder %s229, %s230
      %p242 = scmp.eq.s32.totalorder %s33, 1
      %p243 = por %p241, %p242
      %p245 = scmp.ne.s32.totalorder %s230, %s244
      %p246 = scmp.eq.s32.totalorder %s33, 0
      %p247 = por %p245, %p246
      %s249 = sadd.s32 %s248, 1
      %p252 = scmp.eq.s32.totalorder %s27, 1
      %p253 = scmp.ne.s32.totalorder %s248, %s250
      %p254 = scmp.eq.s32.totalorder %s27, 0
      %p255 = por %p253, %p254
      %p256 = scmp.ne.s32.totalorder %s248, %s250
      %p257 = scmp.eq.s32.totalorder %s32, 1
      %p258 = por %p256, %p257
      %p259 = scmp.ne.s32.totalorder %s250, %s251
      %p260 = scmp.eq.s32.totalorder %s32, 0
      %p261 = por %p259, %p260
      %p262 = scmp.ne.s32.totalorder %s250, %s251
      %p263 = scmp.eq.s32.totalorder %s33, 1
      %p264 = por %p262, %p263
      %p266 = scmp.ne.s32.totalorder %s251, %s265
      %p267 = scmp.eq.s32.totalorder %s33, 0
      %p268 = por %p266, %p267
      %s270 = sadd.s32 %s269, 1
      %p273 = scmp.eq.s32.totalorder %s27, 1
      %p274 = scmp.ne.s32.totalorder %s269, %s271
      %p275 = scmp.eq.s32.totalorder %s27, 0
      %p276 = por %p274, %p275
      %p277 = scmp.ne.s32.totalorder %s269, %s271
      %p278 = scmp.eq.s32.totalorder %s32, 1
      %p279 = por %p277, %p278
      %p280 = scmp.ne.s32.totalorder %s271, %s272
      %p281 = scmp.eq.s32.totalorder %s32, 0
      %p282 = por %p280, %p281
      %p283 = scmp.ne.s32.totalorder %s271, %s272
      %p284 = scmp.eq.s32.totalorder %s33, 1
      %p285 = por %p283, %p284
      %p287 = scmp.ne.s32.totalorder %s272, %s286
      %p288 = scmp.eq.s32.totalorder %s33, 0
      %p289 = por %p287, %p288
      %s291 = sadd.s32 %s290, 1
      %p294 = scmp.eq.s32.totalorder %s27, 1
      %p295 = scmp.ne.s32.totalorder %s290, %s292
      %p296 = scmp.eq.s32.totalorder %s27, 0
      %p297 = por %p295, %p296
      %p298 = scmp.ne.s32.totalorder %s290, %s292
      %p299 = scmp.eq.s32.totalorder %s32, 1
      %p300 = por %p298, %p299
      %p301 = scmp.ne.s32.totalorder %s292, %s293
      %p302 = scmp.eq.s32.totalorder %s32, 0
      %p303 = por %p301, %p302
      %p304 = scmp.ne.s32.totalorder %s292, %s293
      %p305 = scmp.eq.s32.totalorder %s33, 1
      %p306 = por %p304, %p305
      %p308 = scmp.ne.s32.totalorder %s293, %s307
      %p309 = scmp.eq.s32.totalorder %s33, 0
      %p310 = por %p308, %p309
      %s312 = sadd.s32 %s311, 1
      %p315 = scmp.eq.s32.totalorder %s27, 1
      %p316 = scmp.ne.s32.totalorder %s311, %s313
      %p317 = scmp.eq.s32.totalorder %s27, 0
      %p318 = por %p316, %p317
      %p319 = scmp.ne.s32.totalorder %s311, %s313
      %p320 = scmp.eq.s32.totalorder %s32, 1
      %p321 = por %p319, %p320
      %p322 = scmp.ne.s32.totalorder %s313, %s314
      %p323 = scmp.eq.s32.totalorder %s32, 0
      %p324 = por %p322, %p323
      %p325 = scmp.ne.s32.totalorder %s313, %s314
      %p326 = scmp.eq.s32.totalorder %s33, 1
      %p327 = por %p325, %p326
      %p329 = scmp.ne.s32.totalorder %s314, %s328
      %p330 = scmp.eq.s32.totalorder %s33, 0
      %p331 = por %p329, %p330
      %s333 = sadd.s32 %s332, 1
      %p336 = scmp.eq.s32.totalorder %s27, 1
      %p337 = scmp.ne.s32.totalorder %s332, %s334
      %p338 = scmp.eq.s32.totalorder %s27, 0
      %p339 = por %p337, %p338
      %p340 = scmp.ne.s32.totalorder %s332, %s334
      %p341 = scmp.eq.s32.totalorder %s32, 1
      %p342 = por %p340, %p341
      %p343 = scmp.ne.s32.totalorder %s334, %s335
      %p344 = scmp.eq.s32.totalorder %s32, 0
      %p345 = por %p343, %p344
      %p346 = scmp.ne.s32.totalorder %s334, %s335
      %p347 = scmp.eq.s32.totalorder %s33, 1
      %p348 = por %p346, %p347
      %p350 = scmp.ne.s32.totalorder %s335, %s349
      %p351 = scmp.eq.s32.totalorder %s33, 0
      %p352 = por %p350, %p351
      %s354 = sadd.s32 %s353, 1
      %p357 = scmp.eq.s32.totalorder %s27, 1
      %p358 = scmp.ne.s32.totalorder %s353, %s355
      %p359 = scmp.eq.s32.totalorder %s27, 0
      %p360 = por %p358, %p359
      %p361 = scmp.ne.s32.totalorder %s353, %s355
      %p362 = scmp.eq.s32.totalorder %s32, 1
      %p363 = por %p361, %p362
      %p364 = scmp.ne.s32.totalorder %s355, %s356
      %p365 = scmp.eq.s32.totalorder %s32, 0
      %p366 = por %p364, %p365
      %p367 = scmp.ne.s32.totalorder %s355, %s356
      %p368 = scmp.eq.s32.totalorder %s33, 1
      %p369 = por %p367, %p368
      %p371 = scmp.ne.s32.totalorder %s356, %s370
      %p372 = scmp.eq.s32.totalorder %s33, 0
      %p373 = por %p371, %p372
      %s375 = sadd.s32 %s374, 1
      %p378 = scmp.eq.s32.totalorder %s27, 1
      %p379 = scmp.ne.s32.totalorder %s374, %s376
      %p380 = scmp.eq.s32.totalorder %s27, 0
      %p381 = por %p379, %p380
      %p382 = scmp.ne.s32.totalorder %s374, %s376
      %p383 = scmp.eq.s32.totalorder %s32, 1
      %p384 = por %p382, %p383
      %p385 = scmp.ne.s32.totalorder %s376, %s377
      %p386 = scmp.eq.s32.totalorder %s32, 0
      %p387 = por %p385, %p386
      %p388 = scmp.ne.s32.totalorder %s376, %s377
      %p389 = scmp.eq.s32.totalorder %s33, 1
      %p390 = por %p388, %p389
      %p392 = scmp.ne.s32.totalorder %s377, %s391
      %p393 = scmp.eq.s32.totalorder %s33, 0
      %p394 = por %p392, %p393
      %s396 = sadd.s32 %s395, 1
      %p399 = scmp.eq.s32.totalorder %s27, 1
      %p400 = scmp.ne.s32.totalorder %s395, %s397
      %p401 = scmp.eq.s32.totalorder %s27, 0
      %p402 = por %p400, %p401
      %p403 = scmp.ne.s32.totalorder %s395, %s397
      %p404 = scmp.eq.s32.totalorder %s32, 1
      %p405 = por %p403, %p404
      %p406 = scmp.ne.s32.totalorder %s397, %s398
      %p407 = scmp.eq.s32.totalorder %s32, 0
      %p408 = por %p406, %p407
      %p409 = scmp.ne.s32.totalorder %s397, %s398
      %p410 = scmp.eq.s32.totalorder %s33, 1
      %p411 = por %p409, %p410
      %p413 = scmp.ne.s32.totalorder %s398, %s412
      %p414 = scmp.eq.s32.totalorder %s33, 0
      %p415 = por %p413, %p414
      %s417 = sadd.s32 %s416, 1
      %p420 = scmp.eq.s32.totalorder %s27, 1
      %p421 = scmp.ne.s32.totalorder %s416, %s418
      %p422 = scmp.eq.s32.totalorder %s27, 0
      %p423 = por %p421, %p422
      %p424 = scmp.ne.s32.totalorder %s416, %s418
      %p425 = scmp.eq.s32.totalorder %s32, 1
      %p426 = por %p424, %p425
      %p427 = scmp.ne.s32.totalorder %s418, %s419
      %p428 = scmp.eq.s32.totalorder %s32, 0
      %p429 = por %p427, %p428
      %p430 = scmp.ne.s32.totalorder %s418, %s419
      %p431 = scmp.eq.s32.totalorder %s33, 1
      %p432 = por %p430, %p431
      %p434 = scmp.ne.s32.totalorder %s419, %s433
      %p435 = scmp.eq.s32.totalorder %s33, 0
      %p436 = por %p434, %p435
      %s437 = ssub.s32 %s34, %s46
      %s438 = ssub.s32 %s35, %s42
      %s439 = sor.u32 %s437, %s438
      %p440 = scmp.eq.s32.totalorder %s439, 0
      %s442 = sadd.s32 %s441, 1
      %s443 = scalar_select %p440, %s441, %s442
      %p446 = pneg %p440
      %p447 = scmp.eq.s32.totalorder %s27, 1
      %p448 = por %p446, %p447
      %p449 = scmp.ne.s32.totalorder %s441, %s444
      %p450 = scmp.eq.s32.totalorder %s27, 0
      %p451 = por %p449, %p450
      %p452 = scmp.ne.s32.totalorder %s441, %s444
      %p453 = scmp.eq.s32.totalorder %s32, 1
      %p454 = por %p452, %p453
      %p455 = scmp.ne.s32.totalorder %s444, %s445
      %p456 = scmp.eq.s32.totalorder %s32, 0
      %p457 = por %p455, %p456
      %p458 = scmp.ne.s32.totalorder %s444, %s445
      %p459 = scmp.eq.s32.totalorder %s33, 1
      %p460 = por %p458, %p459
      %p462 = scmp.ne.s32.totalorder %s445, %s461
      %p463 = scmp.eq.s32.totalorder %s33, 0
      %p464 = por %p462, %p463
      %p465 = scmp.le.s32.totalorder 1, %s27
      %p466 = scmp.lt.s32.totalorder %s27, 3
      %p467 = pnand %p465, %p466
      %p468 = pneg %p467
      // Predicated region
      $region9: #{tpu_custom_call.1} parent=5 // pred_check
        _
      $region10: #{tpu_custom_call.1} parent=5 // pred_check_branch
        %470 = sbr.rel (%p467) target = $region12
      $region11: #{tpu_custom_call.1} parent=5 // pred_region
        %s471 = ssub.s32 %s27, 1
        // Predicated region
        $region13: #{tpu_custom_call.1} parent=11 // pred_check
          %p472 = pneg %p114
        $region14: #{tpu_custom_call.1} parent=11 // pred_check_branch
          %474 = sbr.rel (%p472) target = $region16
        $region15: #{tpu_custom_call.1} parent=11 // pred_region
          _
        $region16: #{tpu_custom_call.1} parent=11 // pred_fallthru
          _
        // Predicated region
        $region17: #{tpu_custom_call.1} parent=11 // pred_check
          %p475 = pneg %p135
        $region18: #{tpu_custom_call.1} parent=11 // pred_check_branch
          %477 = sbr.rel (%p475) target = $region20
        $region19: #{tpu_custom_call.1} parent=11 // pred_region
          _
        $region20: #{tpu_custom_call.1} parent=11 // pred_fallthru
          _
        // Predicated region
        $region21: #{tpu_custom_call.1} parent=11 // pred_check
          %p478 = pneg %p156
        $region22: #{tpu_custom_call.1} parent=11 // pred_check_branch
          %480 = sbr.rel (%p478) target = $region24
        $region23: #{tpu_custom_call.1} parent=11 // pred_region
          _
        $region24: #{tpu_custom_call.1} parent=11 // pred_fallthru
          _
        // Predicated region
        $region25: #{tpu_custom_call.1} parent=11 // pred_check
          %p481 = pneg %p177
        $region26: #{tpu_custom_call.1} parent=11 // pred_check_branch
          %483 = sbr.rel (%p481) target = $region28
        $region27: #{tpu_custom_call.1} parent=11 // pred_region
          _
        $region28: #{tpu_custom_call.1} parent=11 // pred_fallthru
          _
        // Predicated region
        $region29: #{tpu_custom_call.1} parent=11 // pred_check
          %p484 = pneg %p198
        $region30: #{tpu_custom_call.1} parent=11 // pred_check_branch
          %486 = sbr.rel (%p484) target = $region32
        $region31: #{tpu_custom_call.1} parent=11 // pred_region
          _
        $region32: #{tpu_custom_call.1} parent=11 // pred_fallthru
          _
        // Predicated region
        $region33: #{tpu_custom_call.1} parent=11 // pred_check
          %p487 = pneg %p219
        $region34: #{tpu_custom_call.1} parent=11 // pred_check_branch
          %489 = sbr.rel (%p487) target = $region36
        $region35: #{tpu_custom_call.1} parent=11 // pred_region
          _
        $region36: #{tpu_custom_call.1} parent=11 // pred_fallthru
          _
        // Predicated region
        $region37: #{tpu_custom_call.1} parent=11 // pred_check
          %p490 = pneg %p240
        $region38: #{tpu_custom_call.1} parent=11 // pred_check_branch
          %492 = sbr.rel (%p490) target = $region40
        $region39: #{tpu_custom_call.1} parent=11 // pred_region
          _
        $region40: #{tpu_custom_call.1} parent=11 // pred_fallthru
          _
        // Predicated region
        $region41: #{tpu_custom_call.1} parent=11 // pred_check
          %p493 = pneg %p261
        $region42: #{tpu_custom_call.1} parent=11 // pred_check_branch
          %495 = sbr.rel (%p493) target = $region44
        $region43: #{tpu_custom_call.1} parent=11 // pred_region
          _
        $region44: #{tpu_custom_call.1} parent=11 // pred_fallthru
          _
        // Predicated region
        $region45: #{tpu_custom_call.1} parent=11 // pred_check
          %p496 = pneg %p282
        $region46: #{tpu_custom_call.1} parent=11 // pred_check_branch
          %498 = sbr.rel (%p496) target = $region48
        $region47: #{tpu_custom_call.1} parent=11 // pred_region
          _
        $region48: #{tpu_custom_call.1} parent=11 // pred_fallthru
          _
        // Predicated region
        $region49: #{tpu_custom_call.1} parent=11 // pred_check
          %p499 = pneg %p303
        $region50: #{tpu_custom_call.1} parent=11 // pred_check_branch
          %501 = sbr.rel (%p499) target = $region52
        $region51: #{tpu_custom_call.1} parent=11 // pred_region
          _
        $region52: #{tpu_custom_call.1} parent=11 // pred_fallthru
          _
        // Predicated region
        $region53: #{tpu_custom_call.1} parent=11 // pred_check
          %p502 = pneg %p324
        $region54: #{tpu_custom_call.1} parent=11 // pred_check_branch
          %504 = sbr.rel (%p502) target = $region56
        $region55: #{tpu_custom_call.1} parent=11 // pred_region
          _
        $region56: #{tpu_custom_call.1} parent=11 // pred_fallthru
          _
        // Predicated region
        $region57: #{tpu_custom_call.1} parent=11 // pred_check
          %p505 = pneg %p345
        $region58: #{tpu_custom_call.1} parent=11 // pred_check_branch
          %507 = sbr.rel (%p505) target = $region60
        $region59: #{tpu_custom_call.1} parent=11 // pred_region
          _
        $region60: #{tpu_custom_call.1} parent=11 // pred_fallthru
          _
        // Predicated region
        $region61: #{tpu_custom_call.1} parent=11 // pred_check
          %p508 = pneg %p366
        $region62: #{tpu_custom_call.1} parent=11 // pred_check_branch
          %510 = sbr.rel (%p508) target = $region64
        $region63: #{tpu_custom_call.1} parent=11 // pred_region
          _
        $region64: #{tpu_custom_call.1} parent=11 // pred_fallthru
          _
        // Predicated region
        $region65: #{tpu_custom_call.1} parent=11 // pred_check
          %p511 = pneg %p387
        $region66: #{tpu_custom_call.1} parent=11 // pred_check_branch
          %513 = sbr.rel (%p511) target = $region68
        $region67: #{tpu_custom_call.1} parent=11 // pred_region
          _
        $region68: #{tpu_custom_call.1} parent=11 // pred_fallthru
          _
        // Predicated region
        $region69: #{tpu_custom_call.1} parent=11 // pred_check
          %p514 = pneg %p408
        $region70: #{tpu_custom_call.1} parent=11 // pred_check_branch
          %516 = sbr.rel (%p514) target = $region72
        $region71: #{tpu_custom_call.1} parent=11 // pred_region
          _
        $region72: #{tpu_custom_call.1} parent=11 // pred_fallthru
          _
        // Predicated region
        $region73: #{tpu_custom_call.1} parent=11 // pred_check
          %p517 = pneg %p429
        $region74: #{tpu_custom_call.1} parent=11 // pred_check_branch
          %519 = sbr.rel (%p517) target = $region76
        $region75: #{tpu_custom_call.1} parent=11 // pred_region
          _
        $region76: #{tpu_custom_call.1} parent=11 // pred_fallthru
          _
      $region12: #{tpu_custom_call.1} parent=5 // pred_fallthru
        _
      %p520 = scmp.lt.s32.totalorder %s27, 2
      // Predicated region
      $region77: #{tpu_custom_call.1} parent=5 // pred_check
        %p521 = pneg %p520
      $region78: #{tpu_custom_call.1} parent=5 // pred_check_branch
        %523 = sbr.rel (%p521) target = $region80
      $region79: #{tpu_custom_call.1} parent=5 // pred_region
        // Predicated region
        $region81: #{tpu_custom_call.1} parent=79 // pred_check
          %p524 = pneg %p59
        $region82: #{tpu_custom_call.1} parent=79 // pred_check_branch
          %526 = sbr.rel (%p524) target = $region84
        $region83: #{tpu_custom_call.1} parent=79 // pred_region
          %p527 = scmp.lt.s32.totalorder %s34, 1
          %s528 = scalar_select %p527, %s34, 1
          %s529 = smul.addr %s528, 8
          %s530 = scalar_lea.vmem %s0, %s529
        $region84: #{tpu_custom_call.1} parent=79 // pred_fallthru
          _
        // Predicated region
        $region85: #{tpu_custom_call.1} parent=79 // pred_check
          %p531 = pneg %p87
        $region86: #{tpu_custom_call.1} parent=79 // pred_check_branch
          %533 = sbr.rel (%p531) target = $region88
        $region87: #{tpu_custom_call.1} parent=79 // pred_region
          %p534 = scmp.lt.s32.totalorder %s34, 1
          %s535 = scalar_select %p534, %s34, 1
          %p536 = scmp.lt.s32.totalorder %s35, 0
          %s537 = scalar_select %p536, %s35, 0
          %s538 = sadd.s32 %s537, %s535
          %s539 = smul.addr %s538, 8
          %s540 = scalar_lea.vmem %s1, %s539
        $region88: #{tpu_custom_call.1} parent=79 // pred_fallthru
          _
      $region80: #{tpu_custom_call.1} parent=5 // pred_fallthru
        _
      %p541 = scmp.le.s32.totalorder 1, %s27
      %p542 = scmp.lt.s32.totalorder %s27, 3
      %p543 = pnand %p541, %p542
      %p544 = pneg %p543
      // Predicated region
      $region89: #{tpu_custom_call.1} parent=5 // pred_check
        _
      $region90: #{tpu_custom_call.1} parent=5 // pred_check_branch
        %546 = sbr.rel (%p543) target = $region92
      $region91: #{tpu_custom_call.1} parent=5 // pred_region
        %s547 = ssub.s32 %s27, 1
        %p548 = scmp.lt.s32.totalorder %s36, 1
        %s549 = scalar_select %p548, %s36, 1
        %s550 = smul.addr %s549, 8
        %s551 = scalar_lea.vmem %s0, %s550
        %p552 = pneg %p65
        %p553 = pneg %p62
        %p554 = scmp.lt.s32.totalorder %s36, 1
        %s555 = scalar_select %p554, %s36, 1
        %p556 = scmp.lt.s32.totalorder %s37, 0
        %s557 = scalar_select %p556, %s37, 0
        %s558 = sadd.s32 %s557, %s555
        %s559 = smul.addr %s558, 8
        %s560 = scalar_lea.vmem %s1, %s559
        %p561 = pneg %p93
        %p562 = pneg %p90
        %p563 = pneg %p114
        %p564 = pneg %p111
        %p565 = pneg %p135
        %p566 = pneg %p132
        %p567 = pneg %p156
        %p568 = pneg %p153
        %p569 = pneg %p177
        %p570 = pneg %p174
        %p571 = pneg %p198
        %p572 = pneg %p195
        %p573 = pneg %p219
        %p574 = pneg %p216
        %p575 = pneg %p240
        %p576 = pneg %p237
        %p577 = pneg %p261
        %p578 = pneg %p258
        %p579 = pneg %p282
        %p580 = pneg %p279
        %p581 = pneg %p303
        %p582 = pneg %p300
        %p583 = pneg %p324
        %p584 = pneg %p321
        %p585 = pneg %p345
        %p586 = pneg %p342
        %p587 = pneg %p366
        %p588 = pneg %p363
        %p589 = pneg %p387
        %p590 = pneg %p384
        %p591 = pneg %p408
        %p592 = pneg %p405
        %p593 = pneg %p429
        %p594 = pneg %p426
        %p595 = pneg %p457
        %p596 = pneg %p454
        %s597 = sand.u32 %s444, 1
        %s598 = scalar_lea.sflag [#allocation6], %s597
        %s599 = sand.u32 %s444, 1
        %s600 = smul.addr %s599, 8
        %s601 = scalar_lea.vmem [#allocation5], %s600
        %p602 = scmp.lt.s32.totalorder %s36, 1
        %s603 = scalar_select %p602, %s36, 1
        %s604 = smul.addr %s603, 8
        %s605 = scalar_lea.vmem %s0, %s604
        %p606 = scmp.lt.s32.totalorder %s36, 1
        %s607 = scalar_select %p606, %s36, 1
        %p608 = scmp.lt.s32.totalorder %s37, 0
        %s609 = scalar_select %p608, %s37, 0
        %s610 = sadd.s32 %s609, %s607
        %s611 = smul.addr %s610, 8
        %s612 = scalar_lea.vmem %s1, %s611
        %p614 = scmp.eq.s32.totalorder %s37, 0
        // Predicated region
        $region93: #{tpu_custom_call.1} parent=91 // pred_check
          %p615 = pneg %p614
        $region94: #{tpu_custom_call.1} parent=91 // pred_check_branch
          %617 = sbr.rel (%p615) target = $region96
        $region95: #{tpu_custom_call.1} parent=91 // pred_region
          %v618 = vld [vmem:[%s605] sm:$0xff]
          %v619 = vpack.c.bf16 %v618, %v618
          loop: start=0, step=1, limit=4
          $region97: #{tpu_custom_call.1} parent=95 // loop_pre_header
            _
          $region98: #{tpu_custom_call.1} parent=95 // loop_header
            %s621 = sphi 0, %s625
            %p622 = scmp.ge.s32.totalorder %s621, 4
          $region99: #{tpu_custom_call.1} parent=95 // loop_header_branch
            %624 = sbr.rel (%p622) target = $region103
          $region100: #{tpu_custom_call.1} parent=95 // loop_body
            %s626 = smul.u32 %s621, 4
            %s627 = smul.addr %s626, 4
            %s628 = scalar_lea.vmem %s3, %s627
            %v629 = vld [vmem:[%s628] sm:$0xf]
            %v630 = vld [vmem:[%s628 + $0x4] sm:$0xf]
            %v631 = vld [vmem:[%s628 + $0x8] sm:$0xf]
            %v632 = vld [vmem:[%s628 + $0xc] sm:$0xf]
            %s633 = scalar_lea.vmem %s6, %s621
            %v634 = vld [vmem:[%s633] sm:$0x1]
            %v636 = vperm.slane %v634, 0
            %v642 = vunpack.c.l.b16 %v629
            %v643 = vunpack.c.l.b16 %v630
            %v644 = vunpack.c.l.b16 %v631
            %v645 = vunpack.c.l.b16 %v632
            %v646 = vpack.c.b16 %v643, %v642
            %v647 = vpack.c.b16 %v645, %v644
            %vm650 = vcmask 261120
            %v652 = vsel %vm650, %v619, 0
            %654 = vmatpush.bf16.msra.mxu0 0
            %655 = vmatpush.bf16.msra.mxu0 0
            %656 = vmatpush.bf16.msra.mxu0 0
            %657 = vmatpush.bf16.msra.mxu0 0
            %658 = vmatpush.bf16.msra.mxu0 0
            %659 = vmatpush.bf16.msra.mxu0 0
            %660 = vmatpush.bf16.msra.mxu0 %v647
            %661 = vmatpush.bf16.msra.mxu0 %v646
            %662 = vmatmul.bf16.gmra.mxu0 %v652
            %v663 = vpop.f32.mrf.mxu0
            %v664 = vadd.f32 %v636, %v663
            %v665 = vpop.f32.mrf.mxu0
            %666 = vdwg.mxu0
            %v667 = vpack.c.bf16 %v664, %v664
            %s668 = smul.addr %s621, 4
            %s669 = scalar_lea.vmem [#allocation2], %s668
            %vm670 = vcmask 60416
            %671 = vst.msk [vmem:[%s669] sm:$0xf] %vm670, %v667
            %s672 = smul.addr %s626, 4
            %s673 = scalar_lea.vmem %s4, %s672
            %v674 = vld [vmem:[%s673] sm:$0xf]
            %v675 = vld [vmem:[%s673 + $0x4] sm:$0xf]
            %v676 = vld [vmem:[%s673 + $0x8] sm:$0xf]
            %v677 = vld [vmem:[%s673 + $0xc] sm:$0xf]
            %s678 = scalar_lea.vmem %s7, %s621
            %v679 = vld [vmem:[%s678] sm:$0x1]
            %v681 = vperm.slane %v679, 0
            %v687 = vunpack.c.l.b16 %v674
            %v688 = vunpack.c.l.b16 %v675
            %v689 = vunpack.c.l.b16 %v676
            %v690 = vunpack.c.l.b16 %v677
            %v691 = vpack.c.b16 %v688, %v687
            %v692 = vpack.c.b16 %v690, %v689
            %695 = vmatpush.bf16.msra.mxu0 0
            %696 = vmatpush.bf16.msra.mxu0 0
            %697 = vmatpush.bf16.msra.mxu0 0
            %698 = vmatpush.bf16.msra.mxu0 0
            %699 = vmatpush.bf16.msra.mxu0 0
            %700 = vmatpush.bf16.msra.mxu0 0
            %701 = vmatpush.bf16.msra.mxu0 %v692
            %702 = vmatpush.bf16.msra.mxu0 %v691
            %703 = vmatmul.bf16.gmra.mxu0 %v652
            %v704 = vpop.f32.mrf.mxu0
            %v705 = vadd.f32 %v681, %v704
            %v706 = vpop.f32.mrf.mxu0
            %707 = vdwg.mxu0
            %v708 = vpack.c.bf16 %v705, %v705
            %s709 = smul.addr %s621, 4
            %s710 = scalar_lea.vmem [#allocation3], %s709
            %711 = vst.msk [vmem:[%s710] sm:$0xf] %vm670, %v708
          $region101: #{tpu_custom_call.1} parent=95 // loop_footer
            %s625 = sadd.s32 1, %s621
          $region102: #{tpu_custom_call.1} parent=95 // loop_footer_branch
            %620 = sbr.rel target = $region98
          $region103: #{tpu_custom_call.1} parent=95 // loop_exit
            _
        $region96: #{tpu_custom_call.1} parent=91 // pred_fallthru
          _
        %v712 = vld [vmem:[%s612] sm:$0xff]
        %v713 = vpack.c.bf16 %v712, %v712
        %v714 = vld [vmem:[%s2] sm:$0xf]
        %v715 = vld [vmem:[%s2 + $0x4] sm:$0xf]
        %v716 = vld [vmem:[%s2 + $0x8] sm:$0xf]
        %v717 = vld [vmem:[%s2 + $0xc] sm:$0xf]
        %v718 = vld [vmem:[%s5] sm:$0x1]
        %v720 = vperm.slane %v718, 0
        %v726 = vunpack.c.l.b16 %v714
        %v727 = vunpack.c.l.b16 %v715
        %v728 = vunpack.c.l.b16 %v716
        %v729 = vunpack.c.l.b16 %v717
        %v730 = vpack.c.b16 %v727, %v726
        %v731 = vpack.c.b16 %v729, %v728
        %vm734 = vcmask 261120
        %v736 = vsel %vm734, %v713, 0
        %738 = vmatpush.bf16.msra.mxu0 0
        %739 = vmatpush.bf16.msra.mxu0 0
        %740 = vmatpush.bf16.msra.mxu0 0
        %741 = vmatpush.bf16.msra.mxu0 0
        %742 = vmatpush.bf16.msra.mxu0 0
        %743 = vmatpush.bf16.msra.mxu0 0
        %744 = vmatpush.bf16.msra.mxu0 %v731
        %745 = vmatpush.bf16.msra.mxu0 %v730
        %746 = vmatmul.bf16.gmra.mxu0 %v736
        %v747 = vpop.f32.mrf.mxu0
        %v748 = vadd.f32 %v720, %v747
        %v749 = vpop.f32.mrf.mxu0
        %750 = vdwg.mxu0
        %v751 = vmul.f32 %v748, 0.35355338
        %v752 = vpack.c.bf16 %v751, %v751
        %v753 = vld [vmem:[#allocation2] sm:$0xf]
        %vm754 = vcmask 64512
        %v756 = vsel %vm754, %v752, 0
        %v759 = vsel %vm754, %v753, 0
        %761 = vmatpush.bf16.xpose.msra.mxu0 0
        %762 = vmatpush.bf16.xpose.msra.mxu0 0
        %763 = vmatpush.bf16.xpose.msra.mxu0 0
        %764 = vmatpush.bf16.xpose.msra.mxu0 0
        %765 = vmatpush.bf16.xpose.msra.mxu0 0
        %766 = vmatpush.bf16.xpose.msra.mxu0 0
        %767 = vmatpush.bf16.xpose.msra.mxu0 0
        %768 = vmatpush.bf16.xpose.msra.mxu0 %v759
        %769 = vmatmul.bf16.gmra.mxu0 %v756
        %v770 = vpop.f32.mrf.mxu0
        %v771 = vadd.f32 0.0, %v770
        %v772 = vpop.f32.mrf.mxu0
        %773 = vdwg.mxu0
        %v774 = vsel %vm754, %v771, -inf
        %775 = vmax.xlane.f32.xlu0 %v774
        %v776 = vpop.xlane.xlu0 %775
        %v777 = vsub.f32 %v771, %v776
        %v778 = vmul.f32 %v777, 1.442695
        %v779 = vpow.pop %v778
        %v780 = vsel %vm754, %v779, 0.0
        %781 = vadd.xlane.f32.xlu0 %v780
        %v782 = vpop.xlane.xlu0 %781
        %v783 = vrcp.pop %v782
        %v784 = vmul.f32 %v779, %v783
        %v785 = vpack.c.bf16 %v784, %v784
        %v786 = vld [vmem:[#allocation3] sm:$0xf]
        %v788 = vsel %vm754, %v785, 0
        %vm790 = vcmask 1043456
        %v792 = vsel %vm790, %v786, 0
        %794 = vmatpush.bf16.msra.mxu0 0
        %795 = vmatpush.bf16.msra.mxu0 0
        %796 = vmatpush.bf16.msra.mxu0 0
        %797 = vmatpush.bf16.msra.mxu0 0
        %798 = vmatpush.bf16.msra.mxu0 0
        %799 = vmatpush.bf16.msra.mxu0 0
        %800 = vmatpush.bf16.msra.mxu0 0
        %801 = vmatpush.bf16.msra.mxu0 %v792
        %802 = vmatmul.bf16.gmra.mxu0 %v788
        %v803 = vpop.f32.mrf.mxu0
        %v804 = vadd.f32 0.0, %v803
        %v805 = vpop.f32.mrf.mxu0
        %806 = vdwg.mxu0
        %v807 = vpack.c.bf16 %v804, %v804
        %vm808 = vcmask 60416
        %809 = vst.msk [vmem:[#allocation4] sm:$0xf] %vm808, %v807
        %s810 = scalar_lea.vmem %s2, 16
        %v811 = vld [vmem:[%s810] sm:$0xf]
        %v812 = vld [vmem:[%s810 + $0x4] sm:$0xf]
        %v813 = vld [vmem:[%s810 + $0x8] sm:$0xf]
        %v814 = vld [vmem:[%s810 + $0xc] sm:$0xf]
        %s815 = scalar_lea.vmem %s5, 1
        %v816 = vld [vmem:[%s815] sm:$0x1]
        %v818 = vperm.slane %v816, 0
        %v824 = vunpack.c.l.b16 %v811
        %v825 = vunpack.c.l.b16 %v812
        %v826 = vunpack.c.l.b16 %v813
        %v827 = vunpack.c.l.b16 %v814
        %v828 = vpack.c.b16 %v825, %v824
        %v829 = vpack.c.b16 %v827, %v826
        %832 = vmatpush.bf16.msra.mxu0 0
        %833 = vmatpush.bf16.msra.mxu0 0
        %834 = vmatpush.bf16.msra.mxu0 0
        %835 = vmatpush.bf16.msra.mxu0 0
        %836 = vmatpush.bf16.msra.mxu0 0
        %837 = vmatpush.bf16.msra.mxu0 0
        %838 = vmatpush.bf16.msra.mxu0 %v829
        %839 = vmatpush.bf16.msra.mxu0 %v828
        %840 = vmatmul.bf16.gmra.mxu0 %v736
        %v841 = vpop.f32.mrf.mxu0
        %v842 = vadd.f32 %v818, %v841
        %v843 = vpop.f32.mrf.mxu0
        %844 = vdwg.mxu0
        %v845 = vmul.f32 %v842, 0.35355338
        %v846 = vpack.c.bf16 %v845, %v845
        %s847 = scalar_lea.vmem [#allocation2], 4
        %v848 = vld [vmem:[%s847] sm:$0xf]
        %v850 = vsel %vm754, %v846, 0
        %v853 = vsel %vm754, %v848, 0
        %855 = vmatpush.bf16.xpose.msra.mxu0 0
        %856 = vmatpush.bf16.xpose.msra.mxu0 0
        %857 = vmatpush.bf16.xpose.msra.mxu0 0
        %858 = vmatpush.bf16.xpose.msra.mxu0 0
        %859 = vmatpush.bf16.xpose.msra.mxu0 0
        %860 = vmatpush.bf16.xpose.msra.mxu0 0
        %861 = vmatpush.bf16.xpose.msra.mxu0 0
        %862 = vmatpush.bf16.xpose.msra.mxu0 %v853
        %863 = vmatmul.bf16.gmra.mxu0 %v850
        %v864 = vpop.f32.mrf.mxu0
        %v865 = vadd.f32 0.0, %v864
        %v866 = vpop.f32.mrf.mxu0
        %867 = vdwg.mxu0
        %v868 = vsel %vm754, %v865, -inf
        %869 = vmax.xlane.f32.xlu0 %v868
        %v870 = vpop.xlane.xlu0 %869
        %v871 = vsub.f32 %v865, %v870
        %v872 = vmul.f32 %v871, 1.442695
        %v873 = vpow.pop %v872
        %v874 = vsel %vm754, %v873, 0.0
        %875 = vadd.xlane.f32.xlu0 %v874
        %v876 = vpop.xlane.xlu0 %875
        %v877 = vrcp.pop %v876
        %v878 = vmul.f32 %v873, %v877
        %v879 = vpack.c.bf16 %v878, %v878
        %s880 = scalar_lea.vmem [#allocation3], 4
        %v881 = vld [vmem:[%s880] sm:$0xf]
        %v883 = vsel %vm754, %v879, 0
        %v886 = vsel %vm790, %v881, 0
        %888 = vmatpush.bf16.msra.mxu0 0
        %889 = vmatpush.bf16.msra.mxu0 0
        %890 = vmatpush.bf16.msra.mxu0 0
        %891 = vmatpush.bf16.msra.mxu0 0
        %892 = vmatpush.bf16.msra.mxu0 0
        %893 = vmatpush.bf16.msra.mxu0 0
        %894 = vmatpush.bf16.msra.mxu0 0
        %895 = vmatpush.bf16.msra.mxu0 %v886
        %896 = vmatmul.bf16.gmra.mxu0 %v883
        %v897 = vpop.f32.mrf.mxu0
        %v898 = vadd.f32 0.0, %v897
        %v899 = vpop.f32.mrf.mxu0
        %900 = vdwg.mxu0
        %v901 = vpack.c.bf16 %v898, %v898
        %903 = vrot.lane.b32.xlu0 %v901, 8
        %v904 = vpop.permute.xlu0 %903
        %vm906 = vcmask 126016
        %907 = vst.msk [vmem:[#allocation4] sm:$0xf] %vm906, %v904
        %s908 = scalar_lea.vmem %s2, 32
        %v909 = vld [vmem:[%s908] sm:$0xf]
        %v910 = vld [vmem:[%s908 + $0x4] sm:$0xf]
        %v911 = vld [vmem:[%s908 + $0x8] sm:$0xf]
        %v912 = vld [vmem:[%s908 + $0xc] sm:$0xf]
        %s913 = scalar_lea.vmem %s5, 2
        %v914 = vld [vmem:[%s913] sm:$0x1]
        %v916 = vperm.slane %v914, 0
        %v922 = vunpack.c.l.b16 %v909
        %v923 = vunpack.c.l.b16 %v910
        %v924 = vunpack.c.l.b16 %v911
        %v925 = vunpack.c.l.b16 %v912
        %v926 = vpack.c.b16 %v923, %v922
        %v927 = vpack.c.b16 %v925, %v924
        %930 = vmatpush.bf16.msra.mxu0 0
        %931 = vmatpush.bf16.msra.mxu0 0
        %932 = vmatpush.bf16.msra.mxu0 0
        %933 = vmatpush.bf16.msra.mxu0 0
        %934 = vmatpush.bf16.msra.mxu0 0
        %935 = vmatpush.bf16.msra.mxu0 0
        %936 = vmatpush.bf16.msra.mxu0 %v927
        %937 = vmatpush.bf16.msra.mxu0 %v926
        %938 = vmatmul.bf16.gmra.mxu0 %v736
        %v939 = vpop.f32.mrf.mxu0
        %v940 = vadd.f32 %v916, %v939
        %v941 = vpop.f32.mrf.mxu0
        %942 = vdwg.mxu0
        %v943 = vmul.f32 %v940, 0.35355338
        %v944 = vpack.c.bf16 %v943, %v943
        %s945 = scalar_lea.vmem [#allocation2], 8
        %v946 = vld [vmem:[%s945] sm:$0xf]
        %v948 = vsel %vm754, %v944, 0
        %v951 = vsel %vm754, %v946, 0
        %953 = vmatpush.bf16.xpose.msra.mxu0 0
        %954 = vmatpush.bf16.xpose.msra.mxu0 0
        %955 = vmatpush.bf16.xpose.msra.mxu0 0
        %956 = vmatpush.bf16.xpose.msra.mxu0 0
        %957 = vmatpush.bf16.xpose.msra.mxu0 0
        %958 = vmatpush.bf16.xpose.msra.mxu0 0
        %959 = vmatpush.bf16.xpose.msra.mxu0 0
        %960 = vmatpush.bf16.xpose.msra.mxu0 %v951
        %961 = vmatmul.bf16.gmra.mxu0 %v948
        %v962 = vpop.f32.mrf.mxu0
        %v963 = vadd.f32 0.0, %v962
        %v964 = vpop.f32.mrf.mxu0
        %965 = vdwg.mxu0
        %v966 = vsel %vm754, %v963, -inf
        %967 = vmax.xlane.f32.xlu0 %v966
        %v968 = vpop.xlane.xlu0 %967
        %v969 = vsub.f32 %v963, %v968
        %v970 = vmul.f32 %v969, 1.442695
        %v971 = vpow.pop %v970
        %v972 = vsel %vm754, %v971, 0.0
        %973 = vadd.xlane.f32.xlu0 %v972
        %v974 = vpop.xlane.xlu0 %973
        %v975 = vrcp.pop %v974
        %v976 = vmul.f32 %v971, %v975
        %v977 = vpack.c.bf16 %v976, %v976
        %s978 = scalar_lea.vmem [#allocation3], 8
        %v979 = vld [vmem:[%s978] sm:$0xf]
        %v981 = vsel %vm754, %v977, 0
        %v984 = vsel %vm790, %v979, 0
        %986 = vmatpush.bf16.msra.mxu0 0
        %987 = vmatpush.bf16.msra.mxu0 0
        %988 = vmatpush.bf16.msra.mxu0 0
        %989 = vmatpush.bf16.msra.mxu0 0
        %990 = vmatpush.bf16.msra.mxu0 0
        %991 = vmatpush.bf16.msra.mxu0 0
        %992 = vmatpush.bf16.msra.mxu0 0
        %993 = vmatpush.bf16.msra.mxu0 %v984
        %994 = vmatmul.bf16.gmra.mxu0 %v981
        %v995 = vpop.f32.mrf.mxu0
        %v996 = vadd.f32 0.0, %v995
        %v997 = vpop.f32.mrf.mxu0
        %998 = vdwg.mxu0
        %v999 = vpack.c.bf16 %v996, %v996
        %1001 = vrot.lane.b32.xlu0 %v999, 16
        %v1002 = vpop.permute.xlu0 %1001
        %vm1004 = vcmask 191616
        %1005 = vst.msk [vmem:[#allocation4] sm:$0xf] %vm1004, %v1002
        %s1006 = scalar_lea.vmem %s2, 48
        %v1007 = vld [vmem:[%s1006] sm:$0xf]
        %v1008 = vld [vmem:[%s1006 + $0x4] sm:$0xf]
        %v1009 = vld [vmem:[%s1006 + $0x8] sm:$0xf]
        %v1010 = vld [vmem:[%s1006 + $0xc] sm:$0xf]
        %s1011 = scalar_lea.vmem %s5, 3
        %v1012 = vld [vmem:[%s1011] sm:$0x1]
        %v1014 = vperm.slane %v1012, 0
        %v1020 = vunpack.c.l.b16 %v1007
        %v1021 = vunpack.c.l.b16 %v1008
        %v1022 = vunpack.c.l.b16 %v1009
        %v1023 = vunpack.c.l.b16 %v1010
        %v1024 = vpack.c.b16 %v1021, %v1020
        %v1025 = vpack.c.b16 %v1023, %v1022
        %1028 = vmatpush.bf16.msra.mxu0 0
        %1029 = vmatpush.bf16.msra.mxu0 0
        %1030 = vmatpush.bf16.msra.mxu0 0
        %1031 = vmatpush.bf16.msra.mxu0 0
        %1032 = vmatpush.bf16.msra.mxu0 0
        %1033 = vmatpush.bf16.msra.mxu0 0
        %1034 = vmatpush.bf16.msra.mxu0 %v1025
        %1035 = vmatpush.bf16.msra.mxu0 %v1024
        %1036 = vmatmul.bf16.gmra.mxu0 %v736
        %v1037 = vpop.f32.mrf.mxu0
        %v1038 = vadd.f32 %v1014, %v1037
        %v1039 = vpop.f32.mrf.mxu0
        %1040 = vdwg.mxu0
        %v1041 = vmul.f32 %v1038, 0.35355338
        %v1042 = vpack.c.bf16 %v1041, %v1041
        %s1043 = scalar_lea.vmem [#allocation2], 12
        %v1044 = vld [vmem:[%s1043] sm:$0xf]
        %v1046 = vsel %vm754, %v1042, 0
        %v1049 = vsel %vm754, %v1044, 0
        %1051 = vmatpush.bf16.xpose.msra.mxu0 0
        %1052 = vmatpush.bf16.xpose.msra.mxu0 0
        %1053 = vmatpush.bf16.xpose.msra.mxu0 0
        %1054 = vmatpush.bf16.xpose.msra.mxu0 0
        %1055 = vmatpush.bf16.xpose.msra.mxu0 0
        %1056 = vmatpush.bf16.xpose.msra.mxu0 0
        %1057 = vmatpush.bf16.xpose.msra.mxu0 0
        %1058 = vmatpush.bf16.xpose.msra.mxu0 %v1049
        %1059 = vmatmul.bf16.gmra.mxu0 %v1046
        %v1060 = vpop.f32.mrf.mxu0
        %v1061 = vadd.f32 0.0, %v1060
        %v1062 = vpop.f32.mrf.mxu0
        %1063 = vdwg.mxu0
        %v1064 = vsel %vm754, %v1061, -inf
        %1065 = vmax.xlane.f32.xlu0 %v1064
        %v1066 = vpop.xlane.xlu0 %1065
        %v1067 = vsub.f32 %v1061, %v1066
        %v1068 = vmul.f32 %v1067, 1.442695
        %v1069 = vpow.pop %v1068
        %v1070 = vsel %vm754, %v1069, 0.0
        %1071 = vadd.xlane.f32.xlu0 %v1070
        %v1072 = vpop.xlane.xlu0 %1071
        %v1073 = vrcp.pop %v1072
        %v1074 = vmul.f32 %v1069, %v1073
        %v1075 = vpack.c.bf16 %v1074, %v1074
        %s1076 = scalar_lea.vmem [#allocation3], 12
        %v1077 = vld [vmem:[%s1076] sm:$0xf]
        %v1079 = vsel %vm754, %v1075, 0
        %v1082 = vsel %vm790, %v1077, 0
        %1084 = vmatpush.bf16.msra.mxu0 0
        %1085 = vmatpush.bf16.msra.mxu0 0
        %1086 = vmatpush.bf16.msra.mxu0 0
        %1087 = vmatpush.bf16.msra.mxu0 0
        %1088 = vmatpush.bf16.msra.mxu0 0
        %1089 = vmatpush.bf16.msra.mxu0 0
        %1090 = vmatpush.bf16.msra.mxu0 0
        %1091 = vmatpush.bf16.msra.mxu0 %v1082
        %1092 = vmatmul.bf16.gmra.mxu0 %v1079
        %v1093 = vpop.f32.mrf.mxu0
        %v1094 = vadd.f32 0.0, %v1093
        %v1095 = vpop.f32.mrf.mxu0
        %1096 = vdwg.mxu0
        %v1097 = vpack.c.bf16 %v1094, %v1094
        %1099 = vrot.lane.b32.xlu0 %v1097, 24
        %v1100 = vpop.permute.xlu0 %1099
        %vm1102 = vcmask 257216
        %1103 = vst.msk [vmem:[#allocation4] sm:$0xf] %vm1102, %v1100
        %v1104 = vld [vmem:[#allocation4] sm:$0xf]
        %v1105 = vld [vmem:[%s8] sm:$0xf]
        %v1106 = vld [vmem:[%s8 + $0x4] sm:$0xf]
        %v1107 = vld [vmem:[%s8 + $0x8] sm:$0xf]
        %v1108 = vld [vmem:[%s8 + $0xc] sm:$0xf]
        %v1109 = vld [vmem:[%s9] sm:$0x1]
        %v1111 = vperm.slane %v1109, 0
        %v1117 = vunpack.c.l.b16 %v1105
        %v1118 = vunpack.c.l.b16 %v1106
        %v1119 = vunpack.c.l.b16 %v1107
        %v1120 = vunpack.c.l.b16 %v1108
        %v1121 = vpack.c.b16 %v1118, %v1117
        %v1122 = vpack.c.b16 %v1120, %v1119
        %v1126 = vsel %vm734, %v1104, 0
        %1128 = vmatpush.bf16.msra.mxu0 0
        %1129 = vmatpush.bf16.msra.mxu0 0
        %1130 = vmatpush.bf16.msra.mxu0 0
        %1131 = vmatpush.bf16.msra.mxu0 0
        %1132 = vmatpush.bf16.msra.mxu0 0
        %1133 = vmatpush.bf16.msra.mxu0 0
        %1134 = vmatpush.bf16.msra.mxu0 %v1122
        %1135 = vmatpush.bf16.msra.mxu0 %v1121
        %1136 = vmatmul.bf16.gmra.mxu0 %v1126
        %v1137 = vpop.f32.mrf.mxu0
        %v1138 = vadd.f32 %v1111, %v1137
        %v1139 = vpop.f32.mrf.mxu0
        %1140 = vdwg.mxu0
        %v1141 = vadd.f32 %v712, %v1138
        %v1142 = vmul.f32 %v1141, %v1141
        %v1143 = vsel %vm734, %v1142, 0.0
        %1144 = vadd.xlane.f32.xlu0 %v1143
        %v1145 = vpop.xlane.xlu0 %1144
        %v1146 = vrcp.pop 32.0
        %v1147 = vmul.f32 32.0, %v1146
        %v1148 = vsub.f32 1.0, %v1147
        %v1149 = vmul.f32 %v1146, %v1148
        %v1150 = vadd.f32 %v1146, %v1149
        %vm1151 = vweird.f32 %v1146
        %v1152 = vsel %vm1151, %v1146, %v1150
        %v1153 = vmul.f32 %v1145, %v1152
        %v1154 = vadd.f32 %v1153, 1e-05
        %v1155 = vrsqrt.pop %v1154
        %v1156 = vmul.f32 %v1155, %v1154
        %v1157 = vmul.f32 %v1156, %v1155
        %v1158 = vmul.f32 0.5, %v1157
        %v1159 = vsub.f32 1.5, %v1158
        %v1160 = vmul.f32 %v1155, %v1159
        %vm1161 = vweird.f32 %v1154
        %vm1162 = vweird.f32 %v1155
        %vm1163 = vmor %vm1161, %vm1162
        %v1164 = vsel %vm1163, %v1155, %v1160
        %v1165 = vmul.f32 %v1141, %v1164
        %v1166 = vld [vmem:[%s10] sm:$0x1]
        %v1168 = vperm.slane %v1166, 0
        %v1170 = vmul.f32 %v1165, %v1168
        %v1171 = vld [vmem:[%s11] sm:$0x1]
        %v1173 = vperm.slane %v1171, 0
        %v1175 = vadd.f32 %v1170, %v1173
        %v1176 = vpack.c.bf16 %v1175, %v1175
        %v1177 = vld [vmem:[%s12] sm:$0xf]
        %v1178 = vld [vmem:[%s12 + $0x4] sm:$0xf]
        %v1179 = vld [vmem:[%s12 + $0x8] sm:$0xf]
        %v1180 = vld [vmem:[%s12 + $0xc] sm:$0xf]
        %v1181 = vld [vmem:[%s13] sm:$0x1]
        %v1183 = vperm.slane %v1181, 0
        %v1189 = vunpack.c.l.b16 %v1177
        %v1190 = vunpack.c.l.b16 %v1178
        %v1191 = vunpack.c.l.b16 %v1179
        %v1192 = vunpack.c.l.b16 %v1180
        %v1193 = vpack.c.b16 %v1190, %v1189
        %v1194 = vpack.c.b16 %v1192, %v1191
        %v1198 = vsel %vm734, %v1176, 0
        %1200 = vmatpush.bf16.msra.mxu0 0
        %1201 = vmatpush.bf16.msra.mxu0 0
        %1202 = vmatpush.bf16.msra.mxu0 0
        %1203 = vmatpush.bf16.msra.mxu0 0
        %1204 = vmatpush.bf16.msra.mxu0 0
        %1205 = vmatpush.bf16.msra.mxu0 0
        %1206 = vmatpush.bf16.msra.mxu0 %v1194
        %1207 = vmatpush.bf16.msra.mxu0 %v1193
        %1208 = vmatmul.bf16.gmra.mxu0 %v1198
        %v1209 = vpop.f32.mrf.mxu0
        %v1210 = vadd.f32 %v1183, %v1209
        %v1211 = vpop.f32.mrf.mxu0
        %1212 = vdwg.mxu0
        %v1213 = vmax.f32 %v1210, 0.0
        %v1214 = vpack.c.bf16 %v1213, %v1213
        %v1215 = vld [vmem:[%s14] sm:$0xf]
        %v1216 = vld [vmem:[%s14 + $0x4] sm:$0xf]
        %v1217 = vld [vmem:[%s14 + $0x8] sm:$0xf]
        %v1218 = vld [vmem:[%s14 + $0xc] sm:$0xf]
        %v1219 = vld [vmem:[%s14 + $0x10] sm:$0xf]
        %v1220 = vld [vmem:[%s14 + $0x14] sm:$0xf]
        %v1221 = vld [vmem:[%s14 + $0x18] sm:$0xf]
        %v1222 = vld [vmem:[%s14 + $0x1c] sm:$0xf]
        %v1223 = vld [vmem:[%s15] sm:$0x1]
        %v1225 = vperm.slane %v1223, 0
        %v1235 = vunpack.c.l.b16 %v1215
        %v1236 = vunpack.c.l.b16 %v1216
        %v1237 = vunpack.c.l.b16 %v1217
        %v1238 = vunpack.c.l.b16 %v1218
        %v1239 = vunpack.c.l.b16 %v1219
        %v1240 = vunpack.c.l.b16 %v1220
        %v1241 = vunpack.c.l.b16 %v1221
        %v1242 = vunpack.c.l.b16 %v1222
        %v1243 = vpack.c.b16 %v1236, %v1235
        %v1244 = vpack.c.b16 %v1238, %v1237
        %v1245 = vpack.c.b16 %v1240, %v1239
        %v1246 = vpack.c.b16 %v1242, %v1241
        %vm1251 = vcmask 523264
        %v1253 = vsel %vm1251, %v1214, 0
        %1255 = vmatpush.bf16.msra.mxu0 0
        %1256 = vmatpush.bf16.msra.mxu0 0
        %1257 = vmatpush.bf16.msra.mxu0 0
        %1258 = vmatpush.bf16.msra.mxu0 0
        %1259 = vmatpush.bf16.msra.mxu0 %v1246
        %1260 = vmatpush.bf16.msra.mxu0 %v1245
        %1261 = vmatpush.bf16.msra.mxu0 %v1244
        %1262 = vmatpush.bf16.msra.mxu0 %v1243
        %1263 = vmatmul.bf16.gmra.mxu0 %v1253
        %v1264 = vpop.f32.mrf.mxu0
        %v1265 = vadd.f32 %v1225, %v1264
        %v1266 = vpop.f32.mrf.mxu0
        %1267 = vdwg.mxu0
        %v1268 = vadd.f32 %v1175, %v1265
        %v1269 = vmul.f32 %v1268, %v1268
        %v1270 = vsel %vm734, %v1269, 0.0
        %1271 = vadd.xlane.f32.xlu0 %v1270
        %v1272 = vpop.xlane.xlu0 %1271
        %v1273 = vmul.f32 %v1272, %v1152
        %v1274 = vadd.f32 %v1273, 1e-05
        %v1275 = vrsqrt.pop %v1274
        %v1276 = vmul.f32 %v1275, %v1274
        %v1277 = vmul.f32 %v1276, %v1275
        %v1278 = vmul.f32 0.5, %v1277
        %v1279 = vsub.f32 1.5, %v1278
        %v1280 = vmul.f32 %v1275, %v1279
        %vm1281 = vweird.f32 %v1274
        %vm1282 = vweird.f32 %v1275
        %vm1283 = vmor %vm1281, %vm1282
        %v1284 = vsel %vm1283, %v1275, %v1280
        %v1285 = vmul.f32 %v1268, %v1284
        %v1286 = vld [vmem:[%s16] sm:$0x1]
        %v1288 = vperm.slane %v1286, 0
        %v1290 = vmul.f32 %v1285, %v1288
        %v1291 = vld [vmem:[%s17] sm:$0x1]
        %v1293 = vperm.slane %v1291, 0
        %v1295 = vadd.f32 %v1290, %v1293
        %1296 = vst.msk [vmem:[%s601] sm:$0xff] %vm734, %v1295
        %s1297 = sand.u32 %s444, 1
        %s1298 = scalar_lea.sflag [#allocation6], %s1297
        %s1299 = sand.u32 %s444, 1
        %s1300 = smul.addr %s1299, 8
        %s1301 = scalar_lea.vmem [#allocation5], %s1300
        // Predicated region
        $region104: #{tpu_custom_call.1} parent=91 // pred_check
          %p1302 = pneg %p454
        $region105: #{tpu_custom_call.1} parent=91 // pred_check_branch
          %1304 = sbr.rel (%p1302) target = $region107
        $region106: #{tpu_custom_call.1} parent=91 // pred_region
          %1306 = vsyncadd %s1298, 0
          %s1307 = sadd.s32 %s37, %s36
          %s1308 = smul.addr %s1307, 8
          %s1309 = scalar_lea.hbm %s18, %s1308
          %s1311 = sshll.u32 %s1301, 4
          %s1312 = int_to_ptr.vmem [resolvable:$true] %s1311
          %s1313 = sshll.u32 %s1309, 4
          %s1314 = int_to_ptr.hbm [resolvable:$true] %s1313
          %1316 = dma.vmem_to_hbm [thread:$0]  %s1312, 128, %s1314, %s1298
        $region107: #{tpu_custom_call.1} parent=91 // pred_fallthru
          _
      $region92: #{tpu_custom_call.1} parent=5 // pred_fallthru
        _
      %p1317 = scmp.le.s32.totalorder 2, %s27
      // Predicated region
      $region108: #{tpu_custom_call.1} parent=5 // pred_check
        %p1318 = pneg %p1317
      $region109: #{tpu_custom_call.1} parent=5 // pred_check_branch
        %1320 = sbr.rel (%p1318) target = $region111
      $region110: #{tpu_custom_call.1} parent=5 // pred_region
        %s1321 = ssub.s32 %s27, 2
        // Predicated region
        $region112: #{tpu_custom_call.1} parent=110 // pred_check
          %p1322 = pneg %p460
        $region113: #{tpu_custom_call.1} parent=110 // pred_check_branch
          %1324 = sbr.rel (%p1322) target = $region115
        $region114: #{tpu_custom_call.1} parent=110 // pred_region
          %s1325 = sand.u32 %s445, 1
          %s1326 = scalar_lea.sflag [#allocation6], %s1325
          %s1327 = sand.u32 %s445, 1
          %s1328 = smul.addr %s1327, 8
          %s1329 = scalar_lea.vmem [#allocation5], %s1328
          %1331 = dma.done %s1326, 128
        $region115: #{tpu_custom_call.1} parent=110 // pred_fallthru
          _
      $region111: #{tpu_custom_call.1} parent=5 // pred_fallthru
        _
    $region6: #{tpu_custom_call.1} parent=1 // loop_footer
      %s31 = sadd.s32 1, %s27
    $region7: #{tpu_custom_call.1} parent=1 // loop_footer_branch
      %26 = sbr.rel target = $region3
    $region8: #{tpu_custom_call.1} parent=1 // loop_exit
      _
    %1332 = vsyncpa [#allocation6], 1
    %s1333 = scalar_lea.sflag [#allocation6], 1
    %1334 = vsyncpa %s1333, 1

</llo_original>
